<compile_context>
chip_gen: v7x
topology: tpu7x:2x2x1
jax: 0.10.0
libtpu: 0.0.40
codegen_flags: <defaults>
</compile_context>

<pallas_src>
import functools
import math

import jax
import jax.numpy as jnp
import numpy as np
from jax.experimental import pallas as pl
from jax.experimental.pallas import tpu as pltpu


def _round_up(x, m):
    return (x + m - 1) // m * m


def _conv_tile(w_ref, x_ref, *, k, wpp, tm):
    """On-chip im2col: K*K statically-shifted lane slices of the slab, each a tiny
    (Cout,Cin)@(Cin,TM) MXU GEMM accumulated in f32.

    w_ref: (K*K, Cout, Cin) bf16.  x_ref: (1, Cin, Ls) bf16 slab with rows flattened
    as (row, Wpp); shift kh*Wpp + kw selects input row r+kh / column w+kw for the
    flat output position r*Wpp + w (junk columns w >= Wo are computed but discarded).
    Returns y: (Cout, TM) f32 dense (stride-1) conv of this tile.
    """
    y = None
    for kh in range(k):
        for kw in range(k):
            sh = kh * wpp + kw
            xs = x_ref[0, :, sh:sh + tm]                      # (Cin, TM) bf16
            d = jnp.dot(w_ref[kh * k + kw], xs,
                        preferred_element_type=jnp.float32)   # (Cout, TM) f32 on MXU
            y = d if y is None else y + d
    return y


def _stats_kernel(rl_ref, w_ref, vec_ref, x_ref, sum_ref, ssq_ref, *,
                  k, wpp, tm, tiles_per_core):
    """Pass 1: conv tile (on-chip im2col GEMM) + masked per-channel sum / sum-of-squares.

    rl_ref (SMEM, scalar-prefetched): per-tile count of valid dense rows.
    vec_ref: (1, TM) int32; vec[i] = dense row of flat position i if its column /
    stride phase is statically valid, else a huge sentinel.  Position valid iff
    vec[i] < rows_left(tile).
    """
    @pl.when(pl.program_id(1) == 0)
    def _():
        sum_ref[...] = jnp.zeros_like(sum_ref)
        ssq_ref[...] = jnp.zeros_like(ssq_ref)

    y = _conv_tile(w_ref, x_ref, k=k, wpp=wpp, tm=tm)          # (Cout, TM) f32

    t = pl.program_id(0) * tiles_per_core + pl.program_id(1)   # flattened tile index
    rows_left = rl_ref[t]
    valid = vec_ref[...] < rows_left                           # (1, TM) bool
    ym = jnp.where(valid, y, 0.0)
    sum_ref[...] += jnp.sum(ym, axis=1, keepdims=True)[None]   # (1, Cout, 1)
    ssq_ref[...] += jnp.sum(ym * ym, axis=1, keepdims=True)[None]


def _bn_elu_kernel(w_ref, scale_ref, shift_ref, x_ref, o_ref, *, k, wpp, tm):
    """Pass 2: recompute the conv tile, fused BN scale/shift + ELU, lane-dense store."""
    y = _conv_tile(w_ref, x_ref, k=k, wpp=wpp, tm=tm)          # (Cout, TM) f32
    z = y * scale_ref[...] + shift_ref[...]                    # folded BN (f32 VPU)
    # ELU(alpha=1): x if x > 0 else exp(x) - 1   (exp goes to the EUP slot)
    o_ref[...] = jnp.where(z > 0, z, jnp.exp(jnp.minimum(z, 0.0)) - 1.0).astype(o_ref.dtype)


def conv_block_forward(x_nchw, weight_oihw, bias, gamma, beta, *,
                       kernel_size, stride=1, tile_rows=None,
                       out_dtype=jnp.float32):
    """Equivalent of conv(...).forward(x) with norm='batch' (training-mode stats).

    tile_rows: dense output rows per grid step (TM = tile_rows * Wpp lanes per tile).
      VMEM is NOT the binding constraint at this Cin/Cout -- even a 16K-lane tile is a
      few MiB double-buffered -- so keep tiles big for DMA efficiency; the auto pick
      only shrinks them enough that n_tiles >= 4 so the 'parallel' grid axes can feed
      both v7x TensorCores.
    """
    # Training-mode BatchNorm exactly cancels the conv bias (the mean absorbs it and a
    # per-channel constant does not change the variance), so skip the add and its DMA.
    del bias
    # TODO(synk): norm='instance' (InstanceNorm2d) branch of the module is not implemented.
    # TODO(synk): running_mean/running_var (track_running_stats=True) are updated but
    # unused by the training-mode forward, so they are not modeled here.

    N, Cin, H, W = x_nchw.shape
    Cout = weight_oihw.shape[0]
    K = kernel_size
    s = stride
    pad = (K - 1) // 2

    # ---- wrapper glue: reflect pad + slab packing (one ~1.1x input copy, no im2col) ---
    x_pad = jnp.pad(x_nchw, ((0, 0), (0, 0), (pad, pad), (pad, pad)), mode="reflect")
    Hp, Wp = H + 2 * pad, W + 2 * pad
    Ho_d, Wo_d = Hp - K + 1, Wp - K + 1            # dense (stride-1) conv extents
    Ho = (Hp - K) // s + 1                         # strided output extents
    Wo = (Wp - K) // s + 1

    if tile_rows is None:
        wpp16 = _round_up(Wp, 16)
        tr = max(8, min(256, (8192 // wpp16) // 8 * 8))
        while N * pl.cdiv(Ho_d, tr) < 4 and tr > 8:   # keep both v7x cores fed
            tr = max(8, (tr // 2) // 8 * 8)
        tile_rows = tr
    TR = max(1, min(int(tile_rows), Ho_d))
    if s > 1:                                      # in-tile row % stride must be static
        TR = max(s, TR - TR % s)
    L = 128 // math.gcd(TR, 128)
    Wpp = _round_up(Wp, L)                         # => TR*Wpp is a multiple of 128
    TM = TR * Wpp                                  # lanes per tile (lane-dense output)
    TRH = TR + K - 1                               # slab rows incl. halo
    n_rb = pl.cdiv(Ho_d, TR)
    Ho_pad = n_rb * TR
    n_tiles = N * n_rb
    Ls = _round_up(TRH * Wpp + K - 1, 128)         # flat slab length (+ slack for the
                                                   # largest static (kh, kw) shift)

    xb = x_pad.astype(jnp.bfloat16)
    xb = jnp.pad(xb, ((0, 0), (0, 0), (0, Ho_pad + K - 1 - Hp), (0, Wpp - Wp)))
    row_idx = np.arange(n_rb)[:, None] * TR + np.arange(TRH)[None, :]   # (n_rb, TRH)
    slabs = xb[:, :, row_idx, :]                   # (N, Cin, n_rb, TRH, Wpp) halo-dup'd
    slabs = jnp.transpose(slabs, (0, 2, 1, 3, 4)).reshape(n_tiles, Cin, TRH * Wpp)
    slabs = jnp.pad(slabs, ((0, 0), (0, 0), (0, Ls - TRH * Wpp)))        # (n_tiles,Cin,Ls)

    # (Cout, Cin, K, K) -> (K*K, Cout, Cin), matching the in-kernel (kh, kw) loop order
    w_t = jnp.transpose(weight_oihw, (2, 3, 0, 1)).reshape(K * K, Cout, Cin)
    w_t = w_t.astype(jnp.bfloat16)

    # Static validity vector (see _stats_kernel docstring); junk rows/cols contribute 0.
    r_idx = np.repeat(np.arange(TR), Wpp)
    w_idx = np.tile(np.arange(Wpp), TR)
    ok = w_idx < Wo_d
    if s > 1:
        ok &= (w_idx % s == 0) & (r_idx % s == 0)
    vec = jnp.asarray(np.where(ok, r_idx, 2 ** 30).reshape(1, TM), dtype=jnp.int32)

    # per-tile count of valid dense rows (SMEM scalar-prefetch table)
    rb_of_t = np.tile(np.arange(n_rb), N)
    rows_left = jnp.asarray(Ho_d - rb_of_t * TR, dtype=jnp.int32)        # (n_tiles,)

    NC = 2 if (n_tiles % 2 == 0 and n_tiles >= 2) else 1                 # v7x: 1 col/core
    TPC = n_tiles // NC

    cparams1 = pltpu.CompilerParams(
        dimension_semantics=("parallel", "arbitrary"),
        vmem_limit_bytes=32 * 1024 * 1024)
    cparams2 = pltpu.CompilerParams(
        dimension_semantics=("parallel",),
        vmem_limit_bytes=32 * 1024 * 1024)

    flops = 2 * Cout * Cin * K * K * n_tiles * TM
    slab_bytes = int(slabs.size) * 2
    w_bytes = int(w_t.size) * 2
    out_bytes = Cout * n_tiles * TM * jnp.dtype(out_dtype).itemsize

    # ---- pass 1: per-channel sum / sum-of-squares over the valid output -------------
    sums, ssqs = pl.pallas_call(
        functools.partial(_stats_kernel, k=K, wpp=Wpp, tm=TM, tiles_per_core=TPC),
        out_shape=(jax.ShapeDtypeStruct((NC, Cout, 1), jnp.float32),
                   jax.ShapeDtypeStruct((NC, Cout, 1), jnp.float32)),
        grid_spec=pltpu.PrefetchScalarGridSpec(
            num_scalar_prefetch=1,
            grid=(NC, TPC),
            in_specs=[
                pl.BlockSpec((K * K, Cout, Cin), lambda c, j, rl: (0, 0, 0)),
                pl.BlockSpec((1, TM), lambda c, j, rl: (0, 0)),
                pl.BlockSpec((1, Cin, Ls), lambda c, j, rl: (c * TPC + j, 0, 0)),
            ],
            out_specs=(pl.BlockSpec((1, Cout, 1), lambda c, j, rl: (c, 0, 0)),
                       pl.BlockSpec((1, Cout, 1), lambda c, j, rl: (c, 0, 0))),
        ),
        compiler_params=cparams1,
        cost_estimate=pl.CostEstimate(flops=flops, transcendentals=0,
                                      bytes_accessed=slab_bytes + w_bytes),
    )(rows_left, w_t, vec, slabs)

    # Fold BN (training mode, biased variance, eps=1e-5) into per-channel scale/shift.
    m_valid = N * Ho * Wo
    sum_tot = jnp.sum(sums, axis=0)                 # (Cout, 1)
    ssq_tot = jnp.sum(ssqs, axis=0)
    mean = sum_tot / m_valid
    var = jnp.maximum(ssq_tot / m_valid - mean * mean, 0.0)
    scale = gamma.reshape(Cout, 1).astype(jnp.float32) * jax.lax.rsqrt(var + 1e-5)
    shift = beta.reshape(Cout, 1).astype(jnp.float32) - mean * scale

    # ---- pass 2: recompute conv tile from the cheap raw slabs, fused BN + ELU -------
    out_wide = pl.pallas_call(
        functools.partial(_bn_elu_kernel, k=K, wpp=Wpp, tm=TM),
        out_shape=jax.ShapeDtypeStruct((Cout, n_tiles * TM), out_dtype),
        grid=(n_tiles,),
        in_specs=[
            pl.BlockSpec((K * K, Cout, Cin), lambda i: (0, 0, 0)),
            pl.BlockSpec((Cout, 1), lambda i: (0, 0)),
            pl.BlockSpec((Cout, 1), lambda i: (0, 0)),
            pl.BlockSpec((1, Cin, Ls), lambda i: (i, 0, 0)),
        ],
        out_specs=pl.BlockSpec((Cout, TM), lambda i: (0, i)),
        compiler_params=cparams2,
        cost_estimate=pl.CostEstimate(flops=flops, transcendentals=Cout * n_tiles * TM,
                                      bytes_accessed=slab_bytes + w_bytes + out_bytes),
    )(w_t, scale, shift, slabs)

    # drop junk columns / rows, subsample for stride, back to NCHW
    out = out_wide.reshape(Cout, N, Ho_pad, Wpp)[:, :, :Ho_d:s, :Wo_d:s]
    return jnp.transpose(out, (1, 0, 2, 3))


def reference_forward(x, w, b, gamma, beta, *, kernel_size, stride):
    """Pure-JAX reference (conv + batchnorm(train) + ELU) for correctness check."""
    pad = (kernel_size - 1) // 2
    x_pad = jnp.pad(x, ((0, 0), (0, 0), (pad, pad), (pad, pad)), mode="reflect")
    y = jax.lax.conv_general_dilated(
        x_pad, w, window_strides=(stride, stride), padding="VALID",
        dimension_numbers=("NCHW", "OIHW", "NCHW"))
    y = y + b[None, :, None, None]
    mean = jnp.mean(y, axis=(0, 2, 3), keepdims=True)
    var = jnp.mean(jnp.square(y - mean), axis=(0, 2, 3), keepdims=True)
    y = (y - mean) * jax.lax.rsqrt(var + 1e-5)
    y = y * gamma[None, :, None, None] + beta[None, :, None, None]
    return jnp.where(y > 0, y, jnp.exp(jnp.minimum(y, 0.0)) - 1.0)


if __name__ == "__main__":
    # Module config: conv(num_in_layers=4, num_out_layers=8, kernel_size=3, stride=1, norm='batch')
    N, Cin, H, W = 2, 4, 16, 16
    Cout, K, stride = 8, 3, 1

    key = jax.random.PRNGKey(0)
    kx, kw, kb = jax.random.split(key, 3)
    x = jax.random.normal(kx, (N, Cin, H, W), dtype=jnp.float32)

    # deterministic parameter init (kaiming-uniform-like bounds, fresh BN affine)
    fan_in = Cin * K * K
    bound = 1.0 / np.sqrt(fan_in)
    weight = jax.random.uniform(kw, (Cout, Cin, K, K), minval=-bound, maxval=bound,
                                dtype=jnp.float32)
    bias = jax.random.uniform(kb, (Cout,), minval=-bound, maxval=bound, dtype=jnp.float32)
    gamma = jnp.ones((Cout,), dtype=jnp.float32)   # BatchNorm2d weight init
    beta = jnp.zeros((Cout,), dtype=jnp.float32)   # BatchNorm2d bias init

    # tile_rows=6 forces 3 row-blocks per image (6 tiles, 2 accumulator columns), so the
    # cross-tile stats accumulation, halo duplication and row masking are all exercised.
    fwd = jax.jit(functools.partial(conv_block_forward, kernel_size=K, stride=stride,
                                    tile_rows=6))
    out = jax.block_until_ready(fwd(x, weight, bias, gamma, beta))

    ref = reference_forward(x, weight, bias, gamma, beta, kernel_size=K, stride=stride)
    # bf16 GEMM operands (f32 accumulate) -> slightly looser tolerance than pure f32.
    np.testing.assert_allclose(np.asarray(out), np.asarray(ref), rtol=3e-2, atol=3e-2)

    print("KERNEL_OK")
</pallas_src>

<mosaic_0001>
module attributes {stable_mosaic.version = 11 : i64} {
  func.func @_stats_kernel(%arg0: i32, %arg1: i32, %arg2: memref<6xi32, #tpu.memory_space<smem>>, %arg3: memref<9x8x4xbf16, #tpu.memory_space<vmem>>, %arg4: memref<1x384xi32, #tpu.memory_space<vmem>>, %arg5: memref<1x4x640xbf16, #tpu.memory_space<vmem>>, %arg6: memref<1x8x1xf32, #tpu.memory_space<vmem>>, %arg7: memref<1x8x1xf32, #tpu.memory_space<vmem>>) attributes {dimension_semantics = [#tpu.dimension_semantics<parallel>, #tpu.dimension_semantics<arbitrary>], iteration_bounds = array<i64: 2, 3>, scalar_prefetch = 1 : i64, scratch_operands = 0 : i64, tpu.core_type = #tpu.core_type<tc>, window_params = [{pipeline_mode = #tpu.pipeline_mode<synchronous>, transform_indices = @transform_0, window_bounds = array<i64: 9, 8, 4>}, {pipeline_mode = #tpu.pipeline_mode<synchronous>, transform_indices = @transform_1, window_bounds = array<i64: 1, 384>}, {transform_indices = @transform_2, window_bounds = array<i64: 1, 4, 640>}, {transform_indices = @transform_3, window_bounds = array<i64: 1, 8, 1>}, {transform_indices = @transform_4, window_bounds = array<i64: 1, 8, 1>}]} {
    %c0_i32 = arith.constant 0 : i32
    %0 = arith.cmpi eq, %arg1, %c0_i32 : i32
    %1 = arith.extui %0 : i1 to i32
    %c0_i32_0 = arith.constant 0 : i32
    %2 = arith.cmpi ne, %1, %c0_i32_0 : i32
    scf.if %2 {
      %cst_65 = arith.constant 0.000000e+00 : f32
      %80 = vector.broadcast %cst_65 : f32 to vector<1x8x1xf32>
      %c0_66 = arith.constant 0 : index
      %c0_67 = arith.constant 0 : index
      %c0_68 = arith.constant 0 : index
      %81 = vector.load %arg6[%c0_66, %c0_67, %c0_68] : memref<1x8x1xf32, #tpu.memory_space<vmem>>, vector<1x8x1xf32>
      tpu.vector_store %arg6[%c0_66, %c0_67, %c0_68], %80 {strides = array<i32>} : memref<1x8x1xf32, #tpu.memory_space<vmem>>, vector<1x8x1xf32>,
      %cst_69 = arith.constant 0.000000e+00 : f32
      %82 = vector.broadcast %cst_69 : f32 to vector<1x8x1xf32>
      %c0_70 = arith.constant 0 : index
      %c0_71 = arith.constant 0 : index
      %c0_72 = arith.constant 0 : index
      %83 = vector.load %arg7[%c0_70, %c0_71, %c0_72] : memref<1x8x1xf32, #tpu.memory_space<vmem>>, vector<1x8x1xf32>
      tpu.vector_store %arg7[%c0_70, %c0_71, %c0_72], %82 {strides = array<i32>} : memref<1x8x1xf32, #tpu.memory_space<vmem>>, vector<1x8x1xf32>,
    } else {
    }
    %c0 = arith.constant 0 : index
    %c0_1 = arith.constant 0 : index
    %c0_2 = arith.constant 0 : index
    %3 = vector.load %arg5[%c0, %c0_1, %c0_2] : memref<1x4x640xbf16, #tpu.memory_space<vmem>>, vector<1x4x384xbf16>
    %4 = vector.shape_cast %3 : vector<1x4x384xbf16> to vector<4x384xbf16>
    %c0_3 = arith.constant 0 : index
    %c0_4 = arith.constant 0 : index
    %c0_5 = arith.constant 0 : index
    %5 = vector.load %arg3[%c0_3, %c0_4, %c0_5] : memref<9x8x4xbf16, #tpu.memory_space<vmem>>, vector<1x8x4xbf16>
    %6 = vector.shape_cast %5 : vector<1x8x4xbf16> to vector<8x4xbf16>
    %cst = arith.constant dense<0.000000e+00> : vector<8x384xf32>
    %7 = tpu.matmul %6, %4, %cst {dimension_numbers = #tpu.dot_dimension_numbers<[1], [0], [0], [1], [0, 0, 1, 1], [], []>} : vector<8x4xbf16>, vector<4x384xbf16>, vector<8x384xf32> -> vector<8x384xf32>
    %c0_6 = arith.constant 0 : index
    %c0_7 = arith.constant 0 : index
    %c1 = arith.constant 1 : index
    %8 = vector.load %arg5[%c0_6, %c0_7, %c1] : memref<1x4x640xbf16, #tpu.memory_space<vmem>>, vector<1x4x384xbf16>
    %9 = vector.shape_cast %8 : vector<1x4x384xbf16> to vector<4x384xbf16>
    %c1_8 = arith.constant 1 : index
    %c0_9 = arith.constant 0 : index
    %c0_10 = arith.constant 0 : index
    %10 = vector.load %arg3[%c1_8, %c0_9, %c0_10] : memref<9x8x4xbf16, #tpu.memory_space<vmem>>, vector<1x8x4xbf16>
    %11 = vector.shape_cast %10 : vector<1x8x4xbf16> to vector<8x4xbf16>
    %cst_11 = arith.constant dense<0.000000e+00> : vector<8x384xf32>
    %12 = tpu.matmul %11, %9, %cst_11 {dimension_numbers = #tpu.dot_dimension_numbers<[1], [0], [0], [1], [0, 0, 1, 1], [], []>} : vector<8x4xbf16>, vector<4x384xbf16>, vector<8x384xf32> -> vector<8x384xf32>
    %13 = arith.addf %7, %12 : vector<8x384xf32>
    %c0_12 = arith.constant 0 : index
    %c0_13 = arith.constant 0 : index
    %c2 = arith.constant 2 : index
    %14 = vector.load %arg5[%c0_12, %c0_13, %c2] : memref<1x4x640xbf16, #tpu.memory_space<vmem>>, vector<1x4x384xbf16>
    %15 = vector.shape_cast %14 : vector<1x4x384xbf16> to vector<4x384xbf16>
    %c2_14 = arith.constant 2 : index
    %c0_15 = arith.constant 0 : index
    %c0_16 = arith.constant 0 : index
    %16 = vector.load %arg3[%c2_14, %c0_15, %c0_16] : memref<9x8x4xbf16, #tpu.memory_space<vmem>>, vector<1x8x4xbf16>
    %17 = vector.shape_cast %16 : vector<1x8x4xbf16> to vector<8x4xbf16>
    %cst_17 = arith.constant dense<0.000000e+00> : vector<8x384xf32>
    %18 = tpu.matmul %17, %15, %cst_17 {dimension_numbers = #tpu.dot_dimension_numbers<[1], [0], [0], [1], [0, 0, 1, 1], [], []>} : vector<8x4xbf16>, vector<4x384xbf16>, vector<8x384xf32> -> vector<8x384xf32>
    %19 = arith.addf %13, %18 : vector<8x384xf32>
    %c0_18 = arith.constant 0 : index
    %c0_19 = arith.constant 0 : index
    %c64 = arith.constant 64 : index
    %20 = vector.load %arg5[%c0_18, %c0_19, %c64] : memref<1x4x640xbf16, #tpu.memory_space<vmem>>, vector<1x4x384xbf16>
    %21 = vector.shape_cast %20 : vector<1x4x384xbf16> to vector<4x384xbf16>
    %c3 = arith.constant 3 : index
    %c0_20 = arith.constant 0 : index
    %c0_21 = arith.constant 0 : index
    %22 = vector.load %arg3[%c3, %c0_20, %c0_21] : memref<9x8x4xbf16, #tpu.memory_space<vmem>>, vector<1x8x4xbf16>
    %23 = vector.shape_cast %22 : vector<1x8x4xbf16> to vector<8x4xbf16>
    %cst_22 = arith.constant dense<0.000000e+00> : vector<8x384xf32>
    %24 = tpu.matmul %23, %21, %cst_22 {dimension_numbers = #tpu.dot_dimension_numbers<[1], [0], [0], [1], [0, 0, 1, 1], [], []>} : vector<8x4xbf16>, vector<4x384xbf16>, vector<8x384xf32> -> vector<8x384xf32>
    %25 = arith.addf %19, %24 : vector<8x384xf32>
    %c0_23 = arith.constant 0 : index
    %c0_24 = arith.constant 0 : index
    %c65 = arith.constant 65 : index
    %26 = vector.load %arg5[%c0_23, %c0_24, %c65] : memref<1x4x640xbf16, #tpu.memory_space<vmem>>, vector<1x4x384xbf16>
    %27 = vector.shape_cast %26 : vector<1x4x384xbf16> to vector<4x384xbf16>
    %c4 = arith.constant 4 : index
    %c0_25 = arith.constant 0 : index
    %c0_26 = arith.constant 0 : index
    %28 = vector.load %arg3[%c4, %c0_25, %c0_26] : memref<9x8x4xbf16, #tpu.memory_space<vmem>>, vector<1x8x4xbf16>
    %29 = vector.shape_cast %28 : vector<1x8x4xbf16> to vector<8x4xbf16>
    %cst_27 = arith.constant dense<0.000000e+00> : vector<8x384xf32>
    %30 = tpu.matmul %29, %27, %cst_27 {dimension_numbers = #tpu.dot_dimension_numbers<[1], [0], [0], [1], [0, 0, 1, 1], [], []>} : vector<8x4xbf16>, vector<4x384xbf16>, vector<8x384xf32> -> vector<8x384xf32>
    %31 = arith.addf %25, %30 : vector<8x384xf32>
    %c0_28 = arith.constant 0 : index
    %c0_29 = arith.constant 0 : index
    %c66 = arith.constant 66 : index
    %32 = vector.load %arg5[%c0_28, %c0_29, %c66] : memref<1x4x640xbf16, #tpu.memory_space<vmem>>, vector<1x4x384xbf16>
    %33 = vector.shape_cast %32 : vector<1x4x384xbf16> to vector<4x384xbf16>
    %c5 = arith.constant 5 : index
    %c0_30 = arith.constant 0 : index
    %c0_31 = arith.constant 0 : index
    %34 = vector.load %arg3[%c5, %c0_30, %c0_31] : memref<9x8x4xbf16, #tpu.memory_space<vmem>>, vector<1x8x4xbf16>
    %35 = vector.shape_cast %34 : vector<1x8x4xbf16> to vector<8x4xbf16>
    %cst_32 = arith.constant dense<0.000000e+00> : vector<8x384xf32>
    %36 = tpu.matmul %35, %33, %cst_32 {dimension_numbers = #tpu.dot_dimension_numbers<[1], [0], [0], [1], [0, 0, 1, 1], [], []>} : vector<8x4xbf16>, vector<4x384xbf16>, vector<8x384xf32> -> vector<8x384xf32>
    %37 = arith.addf %31, %36 : vector<8x384xf32>
    %c0_33 = arith.constant 0 : index
    %c0_34 = arith.constant 0 : index
    %c128 = arith.constant 128 : index
    %38 = vector.load %arg5[%c0_33, %c0_34, %c128] : memref<1x4x640xbf16, #tpu.memory_space<vmem>>, vector<1x4x384xbf16>
    %39 = vector.shape_cast %38 : vector<1x4x384xbf16> to vector<4x384xbf16>
    %c6 = arith.constant 6 : index
    %c0_35 = arith.constant 0 : index
    %c0_36 = arith.constant 0 : index
    %40 = vector.load %arg3[%c6, %c0_35, %c0_36] : memref<9x8x4xbf16, #tpu.memory_space<vmem>>, vector<1x8x4xbf16>
    %41 = vector.shape_cast %40 : vector<1x8x4xbf16> to vector<8x4xbf16>
    %cst_37 = arith.constant dense<0.000000e+00> : vector<8x384xf32>
    %42 = tpu.matmul %41, %39, %cst_37 {dimension_numbers = #tpu.dot_dimension_numbers<[1], [0], [0], [1], [0, 0, 1, 1], [], []>} : vector<8x4xbf16>, vector<4x384xbf16>, vector<8x384xf32> -> vector<8x384xf32>
    %43 = arith.addf %37, %42 : vector<8x384xf32>
    %c0_38 = arith.constant 0 : index
    %c0_39 = arith.constant 0 : index
    %c129 = arith.constant 129 : index
    %44 = vector.load %arg5[%c0_38, %c0_39, %c129] : memref<1x4x640xbf16, #tpu.memory_space<vmem>>, vector<1x4x384xbf16>
    %45 = vector.shape_cast %44 : vector<1x4x384xbf16> to vector<4x384xbf16>
    %c7 = arith.constant 7 : index
    %c0_40 = arith.constant 0 : index
    %c0_41 = arith.constant 0 : index
    %46 = vector.load %arg3[%c7, %c0_40, %c0_41] : memref<9x8x4xbf16, #tpu.memory_space<vmem>>, vector<1x8x4xbf16>
    %47 = vector.shape_cast %46 : vector<1x8x4xbf16> to vector<8x4xbf16>
    %cst_42 = arith.constant dense<0.000000e+00> : vector<8x384xf32>
    %48 = tpu.matmul %47, %45, %cst_42 {dimension_numbers = #tpu.dot_dimension_numbers<[1], [0], [0], [1], [0, 0, 1, 1], [], []>} : vector<8x4xbf16>, vector<4x384xbf16>, vector<8x384xf32> -> vector<8x384xf32>
    %49 = arith.addf %43, %48 : vector<8x384xf32>
    %c0_43 = arith.constant 0 : index
    %c0_44 = arith.constant 0 : index
    %c130 = arith.constant 130 : index
    %50 = vector.load %arg5[%c0_43, %c0_44, %c130] : memref<1x4x640xbf16, #tpu.memory_space<vmem>>, vector<1x4x384xbf16>
    %51 = vector.shape_cast %50 : vector<1x4x384xbf16> to vector<4x384xbf16>
    %c8 = arith.constant 8 : index
    %c0_45 = arith.constant 0 : index
    %c0_46 = arith.constant 0 : index
    %52 = vector.load %arg3[%c8, %c0_45, %c0_46] : memref<9x8x4xbf16, #tpu.memory_space<vmem>>, vector<1x8x4xbf16>
    %53 = vector.shape_cast %52 : vector<1x8x4xbf16> to vector<8x4xbf16>
    %cst_47 = arith.constant dense<0.000000e+00> : vector<8x384xf32>
    %54 = tpu.matmul %53, %51, %cst_47 {dimension_numbers = #tpu.dot_dimension_numbers<[1], [0], [0], [1], [0, 0, 1, 1], [], []>} : vector<8x4xbf16>, vector<4x384xbf16>, vector<8x384xf32> -> vector<8x384xf32>
    %55 = arith.addf %49, %54 : vector<8x384xf32>
    %c3_i32 = arith.constant 3 : i32
    %56 = arith.muli %arg0, %c3_i32 : i32
    %57 = arith.addi %56, %arg1 : i32
    %58 = arith.index_cast %57 : i32 to index
    %59 = memref.load %arg2[%58] : memref<6xi32, #tpu.memory_space<smem>>
    %c0_48 = arith.constant 0 : index
    %c0_49 = arith.constant 0 : index
    %60 = vector.load %arg4[%c0_48, %c0_49] : memref<1x384xi32, #tpu.memory_space<vmem>>, vector<1x384xi32>
    %61 = vector.broadcast %59 : i32 to vector<1x384xi32>
    %62 = arith.cmpi slt, %60, %61 : vector<1x384xi32>
    %cst_50 = arith.constant 0.000000e+00 : f32
    %63 = vector.shape_cast %62 : vector<1x384xi1> to vector<1x384xi1>
    %64 = vector.broadcast %63 : vector<1x384xi1> to vector<8x384xi1>
    %65 = vector.broadcast %cst_50 : f32 to vector<8x384xf32>
    %66 = arith.select %64, %55, %65 : vector<8x384xi1>, vector<8x384xf32>
    %c0_51 = arith.constant 0 : index
    %c0_52 = arith.constant 0 : index
    %c0_53 = arith.constant 0 : index
    %67 = vector.load %arg6[%c0_51, %c0_52, %c0_53] : memref<1x8x1xf32, #tpu.memory_space<vmem>>, vector<1x8x1xf32>
    %cst_54 = arith.constant dense<0.000000e+00> : vector<8xf32>
    %68 = vector.multi_reduction <add>, %66, %cst_54 [1] : vector<8x384xf32> to vector<8xf32>
    %69 = vector.shape_cast %68 : vector<8xf32> to vector<8x1xf32>
    %70 = vector.shape_cast %69 : vector<8x1xf32> to vector<1x8x1xf32>
    %71 = arith.addf %67, %70 : vector<1x8x1xf32>
    %c0_55 = arith.constant 0 : index
    %c0_56 = arith.constant 0 : index
    %c0_57 = arith.constant 0 : index
    %72 = vector.load %arg6[%c0_55, %c0_56, %c0_57] : memref<1x8x1xf32, #tpu.memory_space<vmem>>, vector<1x8x1xf32>
    tpu.vector_store %arg6[%c0_55, %c0_56, %c0_57], %71 {strides = array<i32>} : memref<1x8x1xf32, #tpu.memory_space<vmem>>, vector<1x8x1xf32>,
    %c0_58 = arith.constant 0 : index
    %c0_59 = arith.constant 0 : index
    %c0_60 = arith.constant 0 : index
    %73 = vector.load %arg7[%c0_58, %c0_59, %c0_60] : memref<1x8x1xf32, #tpu.memory_space<vmem>>, vector<1x8x1xf32>
    %74 = arith.mulf %66, %66 : vector<8x384xf32>
    %cst_61 = arith.constant dense<0.000000e+00> : vector<8xf32>
    %75 = vector.multi_reduction <add>, %74, %cst_61 [1] : vector<8x384xf32> to vector<8xf32>
    %76 = vector.shape_cast %75 : vector<8xf32> to vector<8x1xf32>
    %77 = vector.shape_cast %76 : vector<8x1xf32> to vector<1x8x1xf32>
    %78 = arith.addf %73, %77 : vector<1x8x1xf32>
    %c0_62 = arith.constant 0 : index
    %c0_63 = arith.constant 0 : index
    %c0_64 = arith.constant 0 : index
    %79 = vector.load %arg7[%c0_62, %c0_63, %c0_64] : memref<1x8x1xf32, #tpu.memory_space<vmem>>, vector<1x8x1xf32>
    tpu.vector_store %arg7[%c0_62, %c0_63, %c0_64], %78 {strides = array<i32>} : memref<1x8x1xf32, #tpu.memory_space<vmem>>, vector<1x8x1xf32>,
    return
  }
  func.func @transform_0(%arg0: i32, %arg1: i32, %arg2: memref<6xi32, #tpu.memory_space<smem>>) -> (i32, i32, i32) {
    %c0_i32 = arith.constant 0 : i32
    %c0_i32_0 = arith.constant 0 : i32
    %c0_i32_1 = arith.constant 0 : i32
    %c0_i32_2 = arith.constant 0 : i32
    return %c0_i32, %c0_i32_0, %c0_i32_1 : i32, i32, i32
  }
  func.func @transform_1(%arg0: i32, %arg1: i32, %arg2: memref<6xi32, #tpu.memory_space<smem>>) -> (i32, i32) {
    %c0_i32 = arith.constant 0 : i32
    %c0_i32_0 = arith.constant 0 : i32
    %c0_i32_1 = arith.constant 0 : i32
    return %c0_i32, %c0_i32_0 : i32, i32
  }
  func.func @transform_2(%arg0: i32, %arg1: i32, %arg2: memref<6xi32, #tpu.memory_space<smem>>) -> (i32, i32, i32) {
    %c3_i32 = arith.constant 3 : i32
    %0 = arith.muli %arg0, %c3_i32 : i32
    %1 = arith.addi %0, %arg1 : i32
    %c0_i32 = arith.constant 0 : i32
    %c0_i32_0 = arith.constant 0 : i32
    %c0_i32_1 = arith.constant 0 : i32
    return %1, %c0_i32, %c0_i32_0 : i32, i32, i32
  }
  func.func @transform_3(%arg0: i32, %arg1: i32, %arg2: memref<6xi32, #tpu.memory_space<smem>>) -> (i32, i32, i32) {
    %c0_i32 = arith.constant 0 : i32
    %c0_i32_0 = arith.constant 0 : i32
    %c0_i32_1 = arith.constant 0 : i32
    return %arg0, %c0_i32, %c0_i32_0 : i32, i32, i32
  }
  func.func @transform_4(%arg0: i32, %arg1: i32, %arg2: memref<6xi32, #tpu.memory_space<smem>>) -> (i32, i32, i32) {
    %c0_i32 = arith.constant 0 : i32
    %c0_i32_0 = arith.constant 0 : i32
    %c0_i32_1 = arith.constant 0 : i32
    return %arg0, %c0_i32, %c0_i32_0 : i32, i32, i32
  }
}

module attributes {stable_mosaic.version = 11 : i64} {
  func.func @_bn_elu_kernel(%arg0: i32, %arg1: memref<9x8x4xbf16, #tpu.memory_space<vmem>>, %arg2: memref<8x1xf32, #tpu.memory_space<vmem>>, %arg3: memref<8x1xf32, #tpu.memory_space<vmem>>, %arg4: memref<1x4x640xbf16, #tpu.memory_space<vmem>>, %arg5: memref<8x384xf32, #tpu.memory_space<vmem>>) attributes {dimension_semantics = [#tpu.dimension_semantics<parallel>], iteration_bounds = array<i64: 6>, scalar_prefetch = 0 : i64, scratch_operands = 0 : i64, tpu.core_type = #tpu.core_type<tc>, window_params = [{pipeline_mode = #tpu.pipeline_mode<synchronous>, transform_indices = @transform_0, window_bounds = array<i64: 9, 8, 4>}, {pipeline_mode = #tpu.pipeline_mode<synchronous>, transform_indices = @transform_1, window_bounds = array<i64: 8, 1>}, {pipeline_mode = #tpu.pipeline_mode<synchronous>, transform_indices = @transform_2, window_bounds = array<i64: 8, 1>}, {transform_indices = @transform_3, window_bounds = array<i64: 1, 4, 640>}, {transform_indices = @transform_4, window_bounds = array<i64: 8, 384>}]} {
    %c0 = arith.constant 0 : index
    %c0_0 = arith.constant 0 : index
    %c0_1 = arith.constant 0 : index
    %0 = vector.load %arg4[%c0, %c0_0, %c0_1] : memref<1x4x640xbf16, #tpu.memory_space<vmem>>, vector<1x4x384xbf16>
    %1 = vector.shape_cast %0 : vector<1x4x384xbf16> to vector<4x384xbf16>
    %c0_2 = arith.constant 0 : index
    %c0_3 = arith.constant 0 : index
    %c0_4 = arith.constant 0 : index
    %2 = vector.load %arg1[%c0_2, %c0_3, %c0_4] : memref<9x8x4xbf16, #tpu.memory_space<vmem>>, vector<1x8x4xbf16>
    %3 = vector.shape_cast %2 : vector<1x8x4xbf16> to vector<8x4xbf16>
    %cst = arith.constant dense<0.000000e+00> : vector<8x384xf32>
    %4 = tpu.matmul %3, %1, %cst {dimension_numbers = #tpu.dot_dimension_numbers<[1], [0], [0], [1], [0, 0, 1, 1], [], []>} : vector<8x4xbf16>, vector<4x384xbf16>, vector<8x384xf32> -> vector<8x384xf32>
    %c0_5 = arith.constant 0 : index
    %c0_6 = arith.constant 0 : index
    %c1 = arith.constant 1 : index
    %5 = vector.load %arg4[%c0_5, %c0_6, %c1] : memref<1x4x640xbf16, #tpu.memory_space<vmem>>, vector<1x4x384xbf16>
    %6 = vector.shape_cast %5 : vector<1x4x384xbf16> to vector<4x384xbf16>
    %c1_7 = arith.constant 1 : index
    %c0_8 = arith.constant 0 : index
    %c0_9 = arith.constant 0 : index
    %7 = vector.load %arg1[%c1_7, %c0_8, %c0_9] : memref<9x8x4xbf16, #tpu.memory_space<vmem>>, vector<1x8x4xbf16>
    %8 = vector.shape_cast %7 : vector<1x8x4xbf16> to vector<8x4xbf16>
    %cst_10 = arith.constant dense<0.000000e+00> : vector<8x384xf32>
    %9 = tpu.matmul %8, %6, %cst_10 {dimension_numbers = #tpu.dot_dimension_numbers<[1], [0], [0], [1], [0, 0, 1, 1], [], []>} : vector<8x4xbf16>, vector<4x384xbf16>, vector<8x384xf32> -> vector<8x384xf32>
    %10 = arith.addf %4, %9 : vector<8x384xf32>
    %c0_11 = arith.constant 0 : index
    %c0_12 = arith.constant 0 : index
    %c2 = arith.constant 2 : index
    %11 = vector.load %arg4[%c0_11, %c0_12, %c2] : memref<1x4x640xbf16, #tpu.memory_space<vmem>>, vector<1x4x384xbf16>
    %12 = vector.shape_cast %11 : vector<1x4x384xbf16> to vector<4x384xbf16>
    %c2_13 = arith.constant 2 : index
    %c0_14 = arith.constant 0 : index
    %c0_15 = arith.constant 0 : index
    %13 = vector.load %arg1[%c2_13, %c0_14, %c0_15] : memref<9x8x4xbf16, #tpu.memory_space<vmem>>, vector<1x8x4xbf16>
    %14 = vector.shape_cast %13 : vector<1x8x4xbf16> to vector<8x4xbf16>
    %cst_16 = arith.constant dense<0.000000e+00> : vector<8x384xf32>
    %15 = tpu.matmul %14, %12, %cst_16 {dimension_numbers = #tpu.dot_dimension_numbers<[1], [0], [0], [1], [0, 0, 1, 1], [], []>} : vector<8x4xbf16>, vector<4x384xbf16>, vector<8x384xf32> -> vector<8x384xf32>
    %16 = arith.addf %10, %15 : vector<8x384xf32>
    %c0_17 = arith.constant 0 : index
    %c0_18 = arith.constant 0 : index
    %c64 = arith.constant 64 : index
    %17 = vector.load %arg4[%c0_17, %c0_18, %c64] : memref<1x4x640xbf16, #tpu.memory_space<vmem>>, vector<1x4x384xbf16>
    %18 = vector.shape_cast %17 : vector<1x4x384xbf16> to vector<4x384xbf16>
    %c3 = arith.constant 3 : index
    %c0_19 = arith.constant 0 : index
    %c0_20 = arith.constant 0 : index
    %19 = vector.load %arg1[%c3, %c0_19, %c0_20] : memref<9x8x4xbf16, #tpu.memory_space<vmem>>, vector<1x8x4xbf16>
    %20 = vector.shape_cast %19 : vector<1x8x4xbf16> to vector<8x4xbf16>
    %cst_21 = arith.constant dense<0.000000e+00> : vector<8x384xf32>
    %21 = tpu.matmul %20, %18, %cst_21 {dimension_numbers = #tpu.dot_dimension_numbers<[1], [0], [0], [1], [0, 0, 1, 1], [], []>} : vector<8x4xbf16>, vector<4x384xbf16>, vector<8x384xf32> -> vector<8x384xf32>
    %22 = arith.addf %16, %21 : vector<8x384xf32>
    %c0_22 = arith.constant 0 : index
    %c0_23 = arith.constant 0 : index
    %c65 = arith.constant 65 : index
    %23 = vector.load %arg4[%c0_22, %c0_23, %c65] : memref<1x4x640xbf16, #tpu.memory_space<vmem>>, vector<1x4x384xbf16>
    %24 = vector.shape_cast %23 : vector<1x4x384xbf16> to vector<4x384xbf16>
    %c4 = arith.constant 4 : index
    %c0_24 = arith.constant 0 : index
    %c0_25 = arith.constant 0 : index
    %25 = vector.load %arg1[%c4, %c0_24, %c0_25] : memref<9x8x4xbf16, #tpu.memory_space<vmem>>, vector<1x8x4xbf16>
    %26 = vector.shape_cast %25 : vector<1x8x4xbf16> to vector<8x4xbf16>
    %cst_26 = arith.constant dense<0.000000e+00> : vector<8x384xf32>
    %27 = tpu.matmul %26, %24, %cst_26 {dimension_numbers = #tpu.dot_dimension_numbers<[1], [0], [0], [1], [0, 0, 1, 1], [], []>} : vector<8x4xbf16>, vector<4x384xbf16>, vector<8x384xf32> -> vector<8x384xf32>
    %28 = arith.addf %22, %27 : vector<8x384xf32>
    %c0_27 = arith.constant 0 : index
    %c0_28 = arith.constant 0 : index
    %c66 = arith.constant 66 : index
    %29 = vector.load %arg4[%c0_27, %c0_28, %c66] : memref<1x4x640xbf16, #tpu.memory_space<vmem>>, vector<1x4x384xbf16>
    %30 = vector.shape_cast %29 : vector<1x4x384xbf16> to vector<4x384xbf16>
    %c5 = arith.constant 5 : index
    %c0_29 = arith.constant 0 : index
    %c0_30 = arith.constant 0 : index
    %31 = vector.load %arg1[%c5, %c0_29, %c0_30] : memref<9x8x4xbf16, #tpu.memory_space<vmem>>, vector<1x8x4xbf16>
    %32 = vector.shape_cast %31 : vector<1x8x4xbf16> to vector<8x4xbf16>
    %cst_31 = arith.constant dense<0.000000e+00> : vector<8x384xf32>
    %33 = tpu.matmul %32, %30, %cst_31 {dimension_numbers = #tpu.dot_dimension_numbers<[1], [0], [0], [1], [0, 0, 1, 1], [], []>} : vector<8x4xbf16>, vector<4x384xbf16>, vector<8x384xf32> -> vector<8x384xf32>
    %34 = arith.addf %28, %33 : vector<8x384xf32>
    %c0_32 = arith.constant 0 : index
    %c0_33 = arith.constant 0 : index
    %c128 = arith.constant 128 : index
    %35 = vector.load %arg4[%c0_32, %c0_33, %c128] : memref<1x4x640xbf16, #tpu.memory_space<vmem>>, vector<1x4x384xbf16>
    %36 = vector.shape_cast %35 : vector<1x4x384xbf16> to vector<4x384xbf16>
    %c6 = arith.constant 6 : index
    %c0_34 = arith.constant 0 : index
    %c0_35 = arith.constant 0 : index
    %37 = vector.load %arg1[%c6, %c0_34, %c0_35] : memref<9x8x4xbf16, #tpu.memory_space<vmem>>, vector<1x8x4xbf16>
    %38 = vector.shape_cast %37 : vector<1x8x4xbf16> to vector<8x4xbf16>
    %cst_36 = arith.constant dense<0.000000e+00> : vector<8x384xf32>
    %39 = tpu.matmul %38, %36, %cst_36 {dimension_numbers = #tpu.dot_dimension_numbers<[1], [0], [0], [1], [0, 0, 1, 1], [], []>} : vector<8x4xbf16>, vector<4x384xbf16>, vector<8x384xf32> -> vector<8x384xf32>
    %40 = arith.addf %34, %39 : vector<8x384xf32>
    %c0_37 = arith.constant 0 : index
    %c0_38 = arith.constant 0 : index
    %c129 = arith.constant 129 : index
    %41 = vector.load %arg4[%c0_37, %c0_38, %c129] : memref<1x4x640xbf16, #tpu.memory_space<vmem>>, vector<1x4x384xbf16>
    %42 = vector.shape_cast %41 : vector<1x4x384xbf16> to vector<4x384xbf16>
    %c7 = arith.constant 7 : index
    %c0_39 = arith.constant 0 : index
    %c0_40 = arith.constant 0 : index
    %43 = vector.load %arg1[%c7, %c0_39, %c0_40] : memref<9x8x4xbf16, #tpu.memory_space<vmem>>, vector<1x8x4xbf16>
    %44 = vector.shape_cast %43 : vector<1x8x4xbf16> to vector<8x4xbf16>
    %cst_41 = arith.constant dense<0.000000e+00> : vector<8x384xf32>
    %45 = tpu.matmul %44, %42, %cst_41 {dimension_numbers = #tpu.dot_dimension_numbers<[1], [0], [0], [1], [0, 0, 1, 1], [], []>} : vector<8x4xbf16>, vector<4x384xbf16>, vector<8x384xf32> -> vector<8x384xf32>
    %46 = arith.addf %40, %45 : vector<8x384xf32>
    %c0_42 = arith.constant 0 : index
    %c0_43 = arith.constant 0 : index
    %c130 = arith.constant 130 : index
    %47 = vector.load %arg4[%c0_42, %c0_43, %c130] : memref<1x4x640xbf16, #tpu.memory_space<vmem>>, vector<1x4x384xbf16>
    %48 = vector.shape_cast %47 : vector<1x4x384xbf16> to vector<4x384xbf16>
    %c8 = arith.constant 8 : index
    %c0_44 = arith.constant 0 : index
    %c0_45 = arith.constant 0 : index
    %49 = vector.load %arg1[%c8, %c0_44, %c0_45] : memref<9x8x4xbf16, #tpu.memory_space<vmem>>, vector<1x8x4xbf16>
    %50 = vector.shape_cast %49 : vector<1x8x4xbf16> to vector<8x4xbf16>
    %cst_46 = arith.constant dense<0.000000e+00> : vector<8x384xf32>
    %51 = tpu.matmul %50, %48, %cst_46 {dimension_numbers = #tpu.dot_dimension_numbers<[1], [0], [0], [1], [0, 0, 1, 1], [], []>} : vector<8x4xbf16>, vector<4x384xbf16>, vector<8x384xf32> -> vector<8x384xf32>
    %52 = arith.addf %46, %51 : vector<8x384xf32>
    %c0_47 = arith.constant 0 : index
    %c0_48 = arith.constant 0 : index
    %53 = vector.load %arg2[%c0_47, %c0_48] : memref<8x1xf32, #tpu.memory_space<vmem>>, vector<8x1xf32>
    %54 = vector.broadcast %53 : vector<8x1xf32> to vector<8x384xf32>
    %55 = arith.mulf %52, %54 : vector<8x384xf32>
    %c0_49 = arith.constant 0 : index
    %c0_50 = arith.constant 0 : index
    %56 = vector.load %arg3[%c0_49, %c0_50] : memref<8x1xf32, #tpu.memory_space<vmem>>, vector<8x1xf32>
    %57 = vector.broadcast %56 : vector<8x1xf32> to vector<8x384xf32>
    %58 = arith.addf %55, %57 : vector<8x384xf32>
    %cst_51 = arith.constant 0.000000e+00 : f32
    %59 = vector.broadcast %cst_51 : f32 to vector<8x384xf32>
    %60 = arith.cmpf ogt, %58, %59 : vector<8x384xf32>
    %cst_52 = arith.constant 0.000000e+00 : f32
    %61 = vector.broadcast %cst_52 : f32 to vector<8x384xf32>
    %62 = arith.minimumf %58, %61 : vector<8x384xf32>
    %63 = math.exp %62 : vector<8x384xf32>
    %cst_53 = arith.constant 1.000000e+00 : f32
    %64 = vector.broadcast %cst_53 : f32 to vector<8x384xf32>
    %65 = arith.subf %63, %64 : vector<8x384xf32>
    %66 = arith.select %60, %58, %65 : vector<8x384xi1>, vector<8x384xf32>
    %c0_54 = arith.constant 0 : index
    %c0_55 = arith.constant 0 : index
    %67 = vector.load %arg5[%c0_54, %c0_55] : memref<8x384xf32, #tpu.memory_space<vmem>>, vector<8x384xf32>
    tpu.vector_store %arg5[%c0_54, %c0_55], %66 {strides = array<i32>} : memref<8x384xf32, #tpu.memory_space<vmem>>, vector<8x384xf32>,
    return
  }
  func.func @transform_0(%arg0: i32) -> (i32, i32, i32) {
    %c0_i32 = arith.constant 0 : i32
    %c0_i32_0 = arith.constant 0 : i32
    %c0_i32_1 = arith.constant 0 : i32
    %c0_i32_2 = arith.constant 0 : i32
    return %c0_i32, %c0_i32_0, %c0_i32_1 : i32, i32, i32
  }
  func.func @transform_1(%arg0: i32) -> (i32, i32) {
    %c0_i32 = arith.constant 0 : i32
    %c0_i32_0 = arith.constant 0 : i32
    %c0_i32_1 = arith.constant 0 : i32
    return %c0_i32, %c0_i32_0 : i32, i32
  }
  func.func @transform_2(%arg0: i32) -> (i32, i32) {
    %c0_i32 = arith.constant 0 : i32
    %c0_i32_0 = arith.constant 0 : i32
    %c0_i32_1 = arith.constant 0 : i32
    return %c0_i32, %c0_i32_0 : i32, i32
  }
  func.func @transform_3(%arg0: i32) -> (i32, i32, i32) {
    %c0_i32 = arith.constant 0 : i32
    %c0_i32_0 = arith.constant 0 : i32
    %c0_i32_1 = arith.constant 0 : i32
    return %arg0, %c0_i32, %c0_i32_0 : i32, i32, i32
  }
  func.func @transform_4(%arg0: i32) -> (i32, i32) {
    %c0_i32 = arith.constant 0 : i32
    %c0_i32_0 = arith.constant 0 : i32
    return %c0_i32, %arg0 : i32, i32
  }
}

</mosaic_0001>

<llo_original>
// kernel: conv_block_forward.3
$region0: #{conv_block_forward.3}
  #allocation0 [shape = 'u32[]', space=smem, size = 0x4, offset = 0x4, fixed_abs, tag = 'smem constant byte address 0x4 - core index']
  #allocation1 [shape = 'u32[144,128]{1,0:T(1,128)}', space=vmem, size = 0x12000, scoped, tag = 'internal scratch']
  %s0 = inlined_call_operand.vmem [shape: bf16[9,8,4], index: 0, kind: input, shape index: {}]
  %s1 = inlined_call_operand.vmem [shape: f32[8,1], index: 1, kind: input, shape index: {}]
  %s2 = inlined_call_operand.vmem [shape: f32[8,1], index: 2, kind: input, shape index: {}]
  %s3 = inlined_call_operand.vmem [shape: bf16[6,4,640], index: 3, kind: input, shape index: {}]
  %s4 = inlined_call_operand.vmem [shape: f32[8,2304], index: 4, kind: output, shape index: {}]
  %s5 = sld [smem:[#allocation0]]
  $region49: #{conv_block_forward.3} parent=0
    _
  %s7 = ssub.s32 1, %s5
  %s8 = scalar_select 0, %s7, %s5
  loop: start=0, step=1, limit=8
  $region2: #{conv_block_forward.3} parent=0 // loop_pre_header
    _
  $region3: #{conv_block_forward.3} parent=0 // loop_header
    %s10 = sphi 0, %s14
    %p11 = scmp.ge.s32.totalorder %s10, 8
    %s18 = sphi 0, %s18
    %s20 = sphi 0, %s18
    %s21 = sphi 0, %s20
    %s35 = sphi 0, %s21
    %s39 = sphi 0, %s39
    %s41 = sphi 0, %s39
    %s42 = sphi 0, %s41
    %s56 = sphi 0, %s42
    %s60 = sphi 0, %s60
    %s62 = sphi 0, %s60
    %s63 = sphi 0, %s62
    %s77 = sphi 0, %s63
    %s83 = sphi 0, %s85
    %s86 = sphi 0, %s83
    %s87 = sphi 0, %s86
    %s103 = sphi 0, %s87
    %s109 = sphi 0, %s111
    %s112 = sphi 0, %s109
    %s113 = sphi 0, %s112
    %s129 = sphi 0, %s113
  $region4: #{conv_block_forward.3} parent=0 // loop_header_branch
    %13 = sbr.rel (%p11) target = $region8
  $region5: #{conv_block_forward.3} parent=0 // loop_body
    %s15 = ssub.s32 %s10, 1
    %s16 = ssub.s32 %s10, 2
    %s17 = sadd.s32 %s10, 1
    %s19 = sadd.s32 %s18, 1
    %p22 = scmp.eq.s32.totalorder %s10, 5
    %p23 = scmp.ne.s32.totalorder %s18, %s20
    %p24 = scmp.eq.s32.totalorder %s10, 0
    %p25 = por %p23, %p24
    %p26 = scmp.ne.s32.totalorder %s18, %s20
    %p27 = scmp.eq.s32.totalorder %s15, 5
    %p28 = por %p26, %p27
    %p29 = scmp.ne.s32.totalorder %s20, %s21
    %p30 = scmp.eq.s32.totalorder %s15, 0
    %p31 = por %p29, %p30
    %p32 = scmp.ne.s32.totalorder %s20, %s21
    %p33 = scmp.eq.s32.totalorder %s16, 5
    %p34 = por %p32, %p33
    %p36 = scmp.ne.s32.totalorder %s21, %s35
    %p37 = scmp.eq.s32.totalorder %s16, 0
    %p38 = por %p36, %p37
    %s40 = sadd.s32 %s39, 1
    %p43 = scmp.eq.s32.totalorder %s10, 5
    %p44 = scmp.ne.s32.totalorder %s39, %s41
    %p45 = scmp.eq.s32.totalorder %s10, 0
    %p46 = por %p44, %p45
    %p47 = scmp.ne.s32.totalorder %s39, %s41
    %p48 = scmp.eq.s32.totalorder %s15, 5
    %p49 = por %p47, %p48
    %p50 = scmp.ne.s32.totalorder %s41, %s42
    %p51 = scmp.eq.s32.totalorder %s15, 0
    %p52 = por %p50, %p51
    %p53 = scmp.ne.s32.totalorder %s41, %s42
    %p54 = scmp.eq.s32.totalorder %s16, 5
    %p55 = por %p53, %p54
    %p57 = scmp.ne.s32.totalorder %s42, %s56
    %p58 = scmp.eq.s32.totalorder %s16, 0
    %p59 = por %p57, %p58
    %s61 = sadd.s32 %s60, 1
    %p64 = scmp.eq.s32.totalorder %s10, 5
    %p65 = scmp.ne.s32.totalorder %s60, %s62
    %p66 = scmp.eq.s32.totalorder %s10, 0
    %p67 = por %p65, %p66
    %p68 = scmp.ne.s32.totalorder %s60, %s62
    %p69 = scmp.eq.s32.totalorder %s15, 5
    %p70 = por %p68, %p69
    %p71 = scmp.ne.s32.totalorder %s62, %s63
    %p72 = scmp.eq.s32.totalorder %s15, 0
    %p73 = por %p71, %p72
    %p74 = scmp.ne.s32.totalorder %s62, %s63
    %p75 = scmp.eq.s32.totalorder %s16, 5
    %p76 = por %p74, %p75
    %p78 = scmp.ne.s32.totalorder %s63, %s77
    %p79 = scmp.eq.s32.totalorder %s16, 0
    %p80 = por %p78, %p79
    %s81 = ssub.s32 %s10, %s17
    %p82 = scmp.eq.s32.totalorder %s81, 0
    %s84 = sadd.s32 %s83, 1
    %s85 = scalar_select %p82, %s83, %s84
    %p88 = pneg %p82
    %p89 = scmp.eq.s32.totalorder %s10, 5
    %p90 = por %p88, %p89
    %p91 = scmp.ne.s32.totalorder %s83, %s86
    %p92 = scmp.eq.s32.totalorder %s10, 0
    %p93 = por %p91, %p92
    %p94 = scmp.ne.s32.totalorder %s83, %s86
    %p95 = scmp.eq.s32.totalorder %s15, 5
    %p96 = por %p94, %p95
    %p97 = scmp.ne.s32.totalorder %s86, %s87
    %p98 = scmp.eq.s32.totalorder %s15, 0
    %p99 = por %p97, %p98
    %p100 = scmp.ne.s32.totalorder %s86, %s87
    %p101 = scmp.eq.s32.totalorder %s16, 5
    %p102 = por %p100, %p101
    %p104 = scmp.ne.s32.totalorder %s87, %s103
    %p105 = scmp.eq.s32.totalorder %s16, 0
    %p106 = por %p104, %p105
    %s107 = ssub.s32 %s10, %s17
    %p108 = scmp.eq.s32.totalorder %s107, 0
    %s110 = sadd.s32 %s109, 1
    %s111 = scalar_select %p108, %s109, %s110
    %p114 = pneg %p108
    %p115 = scmp.eq.s32.totalorder %s10, 5
    %p116 = por %p114, %p115
    %p117 = scmp.ne.s32.totalorder %s109, %s112
    %p118 = scmp.eq.s32.totalorder %s10, 0
    %p119 = por %p117, %p118
    %p120 = scmp.ne.s32.totalorder %s109, %s112
    %p121 = scmp.eq.s32.totalorder %s15, 5
    %p122 = por %p120, %p121
    %p123 = scmp.ne.s32.totalorder %s112, %s113
    %p124 = scmp.eq.s32.totalorder %s15, 0
    %p125 = por %p123, %p124
    %p126 = scmp.ne.s32.totalorder %s112, %s113
    %p127 = scmp.eq.s32.totalorder %s16, 5
    %p128 = por %p126, %p127
    %p130 = scmp.ne.s32.totalorder %s113, %s129
    %p131 = scmp.eq.s32.totalorder %s16, 0
    %p132 = por %p130, %p131
    %p133 = scmp.le.s32.totalorder 1, %s10
    %p134 = scmp.lt.s32.totalorder %s10, 7
    %p135 = pnand %p133, %p134
    %p136 = pneg %p135
    // Predicated region
    $region9: #{conv_block_forward.3} parent=5 // pred_check
      _
    $region10: #{conv_block_forward.3} parent=5 // pred_check_branch
      %138 = sbr.rel (%p135) target = $region12
    $region11: #{conv_block_forward.3} parent=5 // pred_region
      %s139 = ssub.s32 %s10, 1
      // Predicated region
      $region13: #{conv_block_forward.3} parent=11 // pred_check
        %p140 = pneg %p31
      $region14: #{conv_block_forward.3} parent=11 // pred_check_branch
        %142 = sbr.rel (%p140) target = $region16
      $region15: #{conv_block_forward.3} parent=11 // pred_region
        _
      $region16: #{conv_block_forward.3} parent=11 // pred_fallthru
        _
      // Predicated region
      $region17: #{conv_block_forward.3} parent=11 // pred_check
        %p143 = pneg %p52
      $region18: #{conv_block_forward.3} parent=11 // pred_check_branch
        %145 = sbr.rel (%p143) target = $region20
      $region19: #{conv_block_forward.3} parent=11 // pred_region
        _
      $region20: #{conv_block_forward.3} parent=11 // pred_fallthru
        _
      // Predicated region
      $region21: #{conv_block_forward.3} parent=11 // pred_check
        %p146 = pneg %p73
      $region22: #{conv_block_forward.3} parent=11 // pred_check_branch
        %148 = sbr.rel (%p146) target = $region24
      $region23: #{conv_block_forward.3} parent=11 // pred_region
        _
      $region24: #{conv_block_forward.3} parent=11 // pred_fallthru
        _
    $region12: #{conv_block_forward.3} parent=5 // pred_fallthru
      _
    %p149 = scmp.lt.s32.totalorder %s10, 6
    // Predicated region
    $region25: #{conv_block_forward.3} parent=5 // pred_check
      %p150 = pneg %p149
    $region26: #{conv_block_forward.3} parent=5 // pred_check_branch
      %152 = sbr.rel (%p150) target = $region28
    $region27: #{conv_block_forward.3} parent=5 // pred_region
      // Predicated region
      $region29: #{conv_block_forward.3} parent=27 // pred_check
        %p153 = pneg %p93
      $region30: #{conv_block_forward.3} parent=27 // pred_check_branch
        %155 = sbr.rel (%p153) target = $region32
      $region31: #{conv_block_forward.3} parent=27 // pred_region
        %p156 = scmp.lt.s32.totalorder %s10, 5
        %s157 = scalar_select %p156, %s10, 5
        %s158 = smul.addr %s157, 5
        %s159 = smul.addr %s158, 2
        %s160 = scalar_lea.vmem %s3, %s159
      $region32: #{conv_block_forward.3} parent=27 // pred_fallthru
        _
    $region28: #{conv_block_forward.3} parent=5 // pred_fallthru
      _
    %p161 = scmp.le.s32.totalorder 1, %s10
    %p162 = scmp.lt.s32.totalorder %s10, 7
    %p163 = pnand %p161, %p162
    %p164 = pneg %p163
    // Predicated region
    $region33: #{conv_block_forward.3} parent=5 // pred_check
      _
    $region34: #{conv_block_forward.3} parent=5 // pred_check_branch
      %166 = sbr.rel (%p163) target = $region36
    $region35: #{conv_block_forward.3} parent=5 // pred_region
      %s167 = ssub.s32 %s10, 1
      %p168 = pneg %p31
      %p169 = pneg %p28
      %p170 = pneg %p52
      %p171 = pneg %p49
      %p172 = pneg %p73
      %p173 = pneg %p70
      %p174 = scmp.lt.s32.totalorder %s15, 5
      %s175 = scalar_select %p174, %s15, 5
      %s176 = smul.addr %s175, 5
      %s177 = smul.addr %s176, 2
      %s178 = scalar_lea.vmem %s3, %s177
      %p179 = pneg %p99
      %p180 = pneg %p96
      %p181 = pneg %p125
      %p182 = pneg %p122
      %s183 = smul.u32 3, %s15
      %p184 = scmp.lt.s32.totalorder %s183, 17
      %s185 = scalar_select %p184, %s183, 17
      %s186 = smul.addr %s185, 8
      %s187 = scalar_lea.vmem %s4, %s186
      %p188 = scmp.lt.s32.totalorder %s15, 5
      %s189 = scalar_select %p188, %s15, 5
      %s190 = smul.addr %s189, 5
      %s191 = smul.addr %s190, 2
      %s192 = scalar_lea.vmem %s3, %s191
      %s193 = smul.u32 3, %s15
      %p194 = scmp.lt.s32.totalorder %s193, 17
      %s195 = scalar_select %p194, %s193, 17
      %s196 = smul.addr %s195, 8
      %s197 = scalar_lea.vmem %s4, %s196
      %s198 = smul.u32 3, %s15
      %v200 = vld [vmem:[%s192] sm:$0x3f]
      %v201 = vld [vmem:[%s0] sm:$0xf]
      %v202 = vld [vmem:[%s192] sm:$0xff]
      %s203 = scalar_lea.vmem %s0, 4
      %v204 = vld [vmem:[%s203] sm:$0xf]
      %v206 = vcombine.high %v202, %v202
      %v208 = vunpack.c.l.s4 1983009808
      %v209 = vunpack.c.0.s8 %v208
      %v210 = vlaneseq
      %v211 = vshrl.u32 %v210, 7
      %v212 = vsub.s32 %v209, %v211
      %v213 = vrot.slane %v202, %v212
      %v215 = vunpack.c.l.s4 1983009808
      %v216 = vunpack.c.0.s8 %v215
      %v217 = vlaneseq
      %v218 = vshrl.u32 %v217, 7
      %v219 = vsub.s32 %v216, %v218
      %v220 = vrot.slane %v206, %v219
      %v221 = vcombine.high %v213, %v213
      %v222 = vcombine.high %v220, %v220
      %223 = vrot.lane.b32.xlu0 %v213, 127
      %v224 = vpop.permute.xlu0 %223
      %225 = vrot.lane.b32.xlu0 %v221, 127
      %v226 = vpop.permute.xlu0 %225
      %227 = vrot.lane.b32.xlu0 %v220, 127
      %v228 = vpop.permute.xlu0 %227
      %229 = vrot.lane.b32.xlu0 %v222, 127
      %v230 = vpop.permute.xlu0 %229
      %vm231 = vcmask 1039360
      %v232 = vsel %vm231, %v224, %v226
      %v233 = vsel %vm231, %v226, %v228
      %v234 = vsel %vm231, %v228, %v230
      %vm235 = vcmask 31744
      %v237 = vsel %vm235, %v204, 0
      %vm239 = vcmask 1041408
      %v241 = vsel %vm239, %v232, 0
      %v244 = vsel %vm239, %v233, 0
      %v247 = vsel %vm239, %v234, 0
      %249 = vmatprep.subr.bf16.mxu0 %v244
      %250 = vmatpush1.bf16.msra.mxu0 %v241
      %251 = vmatprep.subr.bf16.mxu0 0
      %252 = vmatpush1.bf16.msra.mxu0 0
      %253 = vmatprep.subr.bf16.mxu0 0
      %254 = vmatpush1.bf16.msra.mxu0 0
      %255 = vmatprep.subr.bf16.mxu0 0
      %256 = vmatpush1.bf16.msra.mxu0 0
      %257 = vmatprep.subr.bf16.mxu0 0
      %258 = vmatpush1.bf16.msra.mxu0 0
      %259 = vmatprep.subr.bf16.mxu0 0
      %260 = vmatpush1.bf16.msra.mxu0 0
      %261 = vmatprep.subr.bf16.mxu0 0
      %262 = vmatpush1.bf16.msra.mxu0 0
      %263 = vmatprep.subr.bf16.mxu0 0
      %264 = vmatpush1.bf16.msra.mxu0 0
      %265 = vmatprep.subr.bf16.mxu0 0
      %266 = vmatpush1.bf16.msra.mxu0 0
      %267 = vmatprep.subr.bf16.mxu0 0
      %268 = vmatpush1.bf16.msra.mxu0 0
      %269 = vmatprep.subr.bf16.mxu0 0
      %270 = vmatpush1.bf16.msra.mxu0 0
      %271 = vmatprep.subr.bf16.mxu0 0
      %272 = vmatpush1.bf16.msra.mxu0 0
      %273 = vmatprep.subr.bf16.mxu0 0
      %274 = vmatpush1.bf16.msra.mxu0 0
      %275 = vmatprep.subr.bf16.mxu0 0
      %276 = vmatpush1.bf16.msra.mxu0 0
      %277 = vmatprep.subr.bf16.mxu0 0
      %278 = vmatpush1.bf16.msra.mxu0 0
      %279 = vmatprep.subr.bf16.mxu0 0
      %280 = vmatpush1.bf16.msra.mxu0 0
      %281 = vmatprep.mubr.bf16.mxu0 0
      %282 = vmatmul.mubr.bf16.gmra.mrb[0].mxu0 %v237
      %v283 = vpop.f32.mrb[0].mxu0
      %v284 = vadd.f32 0.0, %v283
      %v285 = vpop.f32.mrb[0].mxu0
      %v286 = vadd.f32 0.0, %v285
      %v287 = vpop.f32.mrb[0].mxu0
      %v288 = vpop.f32.mrb[0].mxu0
      %289 = vdwg.mxu0
      %290 = vmatprep.subr.bf16.mxu0 0
      %291 = vmatpush1.bf16.msra.mxu0 %v247
      %292 = vmatprep.subr.bf16.mxu0 0
      %293 = vmatpush1.bf16.msra.mxu0 0
      %294 = vmatprep.subr.bf16.mxu0 0
      %295 = vmatpush1.bf16.msra.mxu0 0
      %296 = vmatprep.subr.bf16.mxu0 0
      %297 = vmatpush1.bf16.msra.mxu0 0
      %298 = vmatprep.subr.bf16.mxu0 0
      %299 = vmatpush1.bf16.msra.mxu0 0
      %300 = vmatprep.subr.bf16.mxu0 0
      %301 = vmatpush1.bf16.msra.mxu0 0
      %302 = vmatprep.subr.bf16.mxu0 0
      %303 = vmatpush1.bf16.msra.mxu0 0
      %304 = vmatprep.subr.bf16.mxu0 0
      %305 = vmatpush1.bf16.msra.mxu0 0
      %306 = vmatprep.subr.bf16.mxu0 0
      %307 = vmatpush1.bf16.msra.mxu0 0
      %308 = vmatprep.subr.bf16.mxu0 0
      %309 = vmatpush1.bf16.msra.mxu0 0
      %310 = vmatprep.subr.bf16.mxu0 0
      %311 = vmatpush1.bf16.msra.mxu0 0
      %312 = vmatprep.subr.bf16.mxu0 0
      %313 = vmatpush1.bf16.msra.mxu0 0
      %314 = vmatprep.subr.bf16.mxu0 0
      %315 = vmatpush1.bf16.msra.mxu0 0
      %316 = vmatprep.subr.bf16.mxu0 0
      %317 = vmatpush1.bf16.msra.mxu0 0
      %318 = vmatprep.subr.bf16.mxu0 0
      %319 = vmatpush1.bf16.msra.mxu0 0
      %320 = vmatprep.subr.bf16.mxu0 0
      %321 = vmatpush1.bf16.msra.mxu0 0
      %322 = vmatprep.mubr.bf16.mxu0 0
      %323 = vmatmul.mubr.bf16.gmra.mrb[0].mxu0 %v237
      %v324 = vpop.f32.mrb[0].mxu0
      %v325 = vadd.f32 0.0, %v324
      %v326 = vpop.f32.mrb[0].mxu0
      %v327 = vpop.f32.mrb[0].mxu0
      %v328 = vpop.f32.mrb[0].mxu0
      %329 = vdwg.mxu0
      %v331 = vcombine.high %v200, %v200
      %v333 = vunpack.c.l.s4 1983009808
      %v334 = vunpack.c.0.s8 %v333
      %v335 = vlaneseq
      %v336 = vshrl.u32 %v335, 7
      %v337 = vsub.s32 %v334, %v336
      %v338 = vrot.slane %v200, %v337
      %v340 = vunpack.c.l.s4 1983009808
      %v341 = vunpack.c.0.s8 %v340
      %v342 = vlaneseq
      %v343 = vshrl.u32 %v342, 7
      %v344 = vsub.s32 %v341, %v343
      %v345 = vrot.slane %v331, %v344
      %v346 = vcombine.high %v338, %v338
      %v348 = vsel %vm235, %v201, 0
      %v351 = vsel %vm239, %v338, 0
      %v354 = vsel %vm239, %v346, 0
      %v357 = vsel %vm239, %v345, 0
      %359 = vmatprep.subr.bf16.mxu0 %v354
      %360 = vmatpush1.bf16.msra.mxu0 %v351
      %361 = vmatprep.subr.bf16.mxu0 0
      %362 = vmatpush1.bf16.msra.mxu0 0
      %363 = vmatprep.subr.bf16.mxu0 0
      %364 = vmatpush1.bf16.msra.mxu0 0
      %365 = vmatprep.subr.bf16.mxu0 0
      %366 = vmatpush1.bf16.msra.mxu0 0
      %367 = vmatprep.subr.bf16.mxu0 0
      %368 = vmatpush1.bf16.msra.mxu0 0
      %369 = vmatprep.subr.bf16.mxu0 0
      %370 = vmatpush1.bf16.msra.mxu0 0
      %371 = vmatprep.subr.bf16.mxu0 0
      %372 = vmatpush1.bf16.msra.mxu0 0
      %373 = vmatprep.subr.bf16.mxu0 0
      %374 = vmatpush1.bf16.msra.mxu0 0
      %375 = vmatprep.subr.bf16.mxu0 0
      %376 = vmatpush1.bf16.msra.mxu0 0
      %377 = vmatprep.subr.bf16.mxu0 0
      %378 = vmatpush1.bf16.msra.mxu0 0
      %379 = vmatprep.subr.bf16.mxu0 0
      %380 = vmatpush1.bf16.msra.mxu0 0
      %381 = vmatprep.subr.bf16.mxu0 0
      %382 = vmatpush1.bf16.msra.mxu0 0
      %383 = vmatprep.subr.bf16.mxu0 0
      %384 = vmatpush1.bf16.msra.mxu0 0
      %385 = vmatprep.subr.bf16.mxu0 0
      %386 = vmatpush1.bf16.msra.mxu0 0
      %387 = vmatprep.subr.bf16.mxu0 0
      %388 = vmatpush1.bf16.msra.mxu0 0
      %389 = vmatprep.subr.bf16.mxu0 0
      %390 = vmatpush1.bf16.msra.mxu0 0
      %391 = vmatprep.mubr.bf16.mxu0 0
      %392 = vmatmul.mubr.bf16.gmra.mrb[0].mxu0 %v348
      %v393 = vpop.f32.mrb[0].mxu0
      %v394 = vadd.f32 %v284, %v393
      %v395 = vpop.f32.mrb[0].mxu0
      %v396 = vadd.f32 %v286, %v395
      %v397 = vpop.f32.mrb[0].mxu0
      %v398 = vpop.f32.mrb[0].mxu0
      %399 = vdwg.mxu0
      %400 = vmatprep.subr.bf16.mxu0 0
      %401 = vmatpush1.bf16.msra.mxu0 %v357
      %402 = vmatprep.subr.bf16.mxu0 0
      %403 = vmatpush1.bf16.msra.mxu0 0
      %404 = vmatprep.subr.bf16.mxu0 0
      %405 = vmatpush1.bf16.msra.mxu0 0
      %406 = vmatprep.subr.bf16.mxu0 0
      %407 = vmatpush1.bf16.msra.mxu0 0
      %408 = vmatprep.subr.bf16.mxu0 0
      %409 = vmatpush1.bf16.msra.mxu0 0
      %410 = vmatprep.subr.bf16.mxu0 0
      %411 = vmatpush1.bf16.msra.mxu0 0
      %412 = vmatprep.subr.bf16.mxu0 0
      %413 = vmatpush1.bf16.msra.mxu0 0
      %414 = vmatprep.subr.bf16.mxu0 0
      %415 = vmatpush1.bf16.msra.mxu0 0
      %416 = vmatprep.subr.bf16.mxu0 0
      %417 = vmatpush1.bf16.msra.mxu0 0
      %418 = vmatprep.subr.bf16.mxu0 0
      %419 = vmatpush1.bf16.msra.mxu0 0
      %420 = vmatprep.subr.bf16.mxu0 0
      %421 = vmatpush1.bf16.msra.mxu0 0
      %422 = vmatprep.subr.bf16.mxu0 0
      %423 = vmatpush1.bf16.msra.mxu0 0
      %424 = vmatprep.subr.bf16.mxu0 0
      %425 = vmatpush1.bf16.msra.mxu0 0
      %426 = vmatprep.subr.bf16.mxu0 0
      %427 = vmatpush1.bf16.msra.mxu0 0
      %428 = vmatprep.subr.bf16.mxu0 0
      %429 = vmatpush1.bf16.msra.mxu0 0
      %430 = vmatprep.subr.bf16.mxu0 0
      %431 = vmatpush1.bf16.msra.mxu0 0
      %432 = vmatprep.mubr.bf16.mxu0 0
      %433 = vmatmul.mubr.bf16.gmra.mrb[0].mxu0 %v348
      %v434 = vpop.f32.mrb[0].mxu0
      %v435 = vadd.f32 %v325, %v434
      %v436 = vpop.f32.mrb[0].mxu0
      %v437 = vpop.f32.mrb[0].mxu0
      %v438 = vpop.f32.mrb[0].mxu0
      %439 = vdwg.mxu0
      %v440 = vld [vmem:[%s192] sm:$0xff]
      %s441 = scalar_lea.vmem %s0, 8
      %v442 = vld [vmem:[%s441] sm:$0xf]
      %v444 = vcombine.high %v440, %v440
      %v446 = vunpack.c.l.s4 1983009808
      %v447 = vunpack.c.0.s8 %v446
      %v448 = vlaneseq
      %v449 = vshrl.u32 %v448, 7
      %v450 = vsub.s32 %v447, %v449
      %v451 = vrot.slane %v440, %v450
      %v453 = vunpack.c.l.s4 1983009808
      %v454 = vunpack.c.0.s8 %v453
      %v455 = vlaneseq
      %v456 = vshrl.u32 %v455, 7
      %v457 = vsub.s32 %v454, %v456
      %v458 = vrot.slane %v444, %v457
      %v459 = vcombine.high %v451, %v451
      %v460 = vcombine.high %v458, %v458
      %461 = vrot.lane.b32.xlu0 %v451, 126
      %v462 = vpop.permute.xlu0 %461
      %463 = vrot.lane.b32.xlu0 %v459, 126
      %v464 = vpop.permute.xlu0 %463
      %465 = vrot.lane.b32.xlu0 %v458, 126
      %v466 = vpop.permute.xlu0 %465
      %467 = vrot.lane.b32.xlu0 %v460, 126
      %v468 = vpop.permute.xlu0 %467
      %vm469 = vcmask 1031168
      %v470 = vsel %vm469, %v462, %v464
      %v471 = vsel %vm469, %v464, %v466
      %v472 = vsel %vm469, %v466, %v468
      %v474 = vsel %vm235, %v442, 0
      %v477 = vsel %vm239, %v470, 0
      %v480 = vsel %vm239, %v471, 0
      %v483 = vsel %vm239, %v472, 0
      %485 = vmatprep.subr.bf16.mxu0 %v480
      %486 = vmatpush1.bf16.msra.mxu0 %v477
      %487 = vmatprep.subr.bf16.mxu0 0
      %488 = vmatpush1.bf16.msra.mxu0 0
      %489 = vmatprep.subr.bf16.mxu0 0
      %490 = vmatpush1.bf16.msra.mxu0 0
      %491 = vmatprep.subr.bf16.mxu0 0
      %492 = vmatpush1.bf16.msra.mxu0 0
      %493 = vmatprep.subr.bf16.mxu0 0
      %494 = vmatpush1.bf16.msra.mxu0 0
      %495 = vmatprep.subr.bf16.mxu0 0
      %496 = vmatpush1.bf16.msra.mxu0 0
      %497 = vmatprep.subr.bf16.mxu0 0
      %498 = vmatpush1.bf16.msra.mxu0 0
      %499 = vmatprep.subr.bf16.mxu0 0
      %500 = vmatpush1.bf16.msra.mxu0 0
      %501 = vmatprep.subr.bf16.mxu0 0
      %502 = vmatpush1.bf16.msra.mxu0 0
      %503 = vmatprep.subr.bf16.mxu0 0
      %504 = vmatpush1.bf16.msra.mxu0 0
      %505 = vmatprep.subr.bf16.mxu0 0
      %506 = vmatpush1.bf16.msra.mxu0 0
      %507 = vmatprep.subr.bf16.mxu0 0
      %508 = vmatpush1.bf16.msra.mxu0 0
      %509 = vmatprep.subr.bf16.mxu0 0
      %510 = vmatpush1.bf16.msra.mxu0 0
      %511 = vmatprep.subr.bf16.mxu0 0
      %512 = vmatpush1.bf16.msra.mxu0 0
      %513 = vmatprep.subr.bf16.mxu0 0
      %514 = vmatpush1.bf16.msra.mxu0 0
      %515 = vmatprep.subr.bf16.mxu0 0
      %516 = vmatpush1.bf16.msra.mxu0 0
      %517 = vmatprep.mubr.bf16.mxu0 0
      %518 = vmatmul.mubr.bf16.gmra.mrb[0].mxu0 %v474
      %v519 = vpop.f32.mrb[0].mxu0
      %v520 = vadd.f32 0.0, %v519
      %v521 = vpop.f32.mrb[0].mxu0
      %v522 = vadd.f32 0.0, %v521
      %v523 = vpop.f32.mrb[0].mxu0
      %v524 = vpop.f32.mrb[0].mxu0
      %525 = vdwg.mxu0
      %526 = vmatprep.subr.bf16.mxu0 0
      %527 = vmatpush1.bf16.msra.mxu0 %v483
      %528 = vmatprep.subr.bf16.mxu0 0
      %529 = vmatpush1.bf16.msra.mxu0 0
      %530 = vmatprep.subr.bf16.mxu0 0
      %531 = vmatpush1.bf16.msra.mxu0 0
      %532 = vmatprep.subr.bf16.mxu0 0
      %533 = vmatpush1.bf16.msra.mxu0 0
      %534 = vmatprep.subr.bf16.mxu0 0
      %535 = vmatpush1.bf16.msra.mxu0 0
      %536 = vmatprep.subr.bf16.mxu0 0
      %537 = vmatpush1.bf16.msra.mxu0 0
      %538 = vmatprep.subr.bf16.mxu0 0
      %539 = vmatpush1.bf16.msra.mxu0 0
      %540 = vmatprep.subr.bf16.mxu0 0
      %541 = vmatpush1.bf16.msra.mxu0 0
      %542 = vmatprep.subr.bf16.mxu0 0
      %543 = vmatpush1.bf16.msra.mxu0 0
      %544 = vmatprep.subr.bf16.mxu0 0
      %545 = vmatpush1.bf16.msra.mxu0 0
      %546 = vmatprep.subr.bf16.mxu0 0
      %547 = vmatpush1.bf16.msra.mxu0 0
      %548 = vmatprep.subr.bf16.mxu0 0
      %549 = vmatpush1.bf16.msra.mxu0 0
      %550 = vmatprep.subr.bf16.mxu0 0
      %551 = vmatpush1.bf16.msra.mxu0 0
      %552 = vmatprep.subr.bf16.mxu0 0
      %553 = vmatpush1.bf16.msra.mxu0 0
      %554 = vmatprep.subr.bf16.mxu0 0
      %555 = vmatpush1.bf16.msra.mxu0 0
      %556 = vmatprep.subr.bf16.mxu0 0
      %557 = vmatpush1.bf16.msra.mxu0 0
      %558 = vmatprep.mubr.bf16.mxu0 0
      %559 = vmatmul.mubr.bf16.gmra.mrb[0].mxu0 %v474
      %v560 = vpop.f32.mrb[0].mxu0
      %v561 = vadd.f32 0.0, %v560
      %v562 = vpop.f32.mrb[0].mxu0
      %v563 = vpop.f32.mrb[0].mxu0
      %v564 = vpop.f32.mrb[0].mxu0
      %565 = vdwg.mxu0
      %v566 = vadd.f32 %v394, %v520
      %v567 = vadd.f32 %v396, %v522
      %v568 = vadd.f32 %v435, %v561
      %v569 = vld [vmem:[%s192] sm:$0xff]
      %s570 = scalar_lea.vmem %s0, 12
      %v571 = vld [vmem:[%s570] sm:$0xf]
      %v573 = vcombine.high %v569, %v569
      %v575 = vunpack.c.l.s4 1983009808
      %v576 = vunpack.c.0.s8 %v575
      %v577 = vlaneseq
      %v578 = vshrl.u32 %v577, 7
      %v579 = vsub.s32 %v576, %v578
      %v580 = vrot.slane %v569, %v579
      %v582 = vunpack.c.l.s4 1983009808
      %v583 = vunpack.c.0.s8 %v582
      %v584 = vlaneseq
      %v585 = vshrl.u32 %v584, 7
      %v586 = vsub.s32 %v583, %v585
      %v587 = vrot.slane %v573, %v586
      %v588 = vcombine.high %v580, %v580
      %v589 = vcombine.high %v587, %v587
      %590 = vrot.lane.b32.xlu0 %v580, 64
      %v591 = vpop.permute.xlu0 %590
      %592 = vrot.lane.b32.xlu0 %v588, 64
      %v593 = vpop.permute.xlu0 %592
      %594 = vrot.lane.b32.xlu0 %v587, 64
      %v595 = vpop.permute.xlu0 %594
      %596 = vrot.lane.b32.xlu0 %v589, 64
      %v597 = vpop.permute.xlu0 %596
      %vm598 = vcmask 523264
      %v599 = vsel %vm598, %v591, %v593
      %v600 = vsel %vm598, %v593, %v595
      %v601 = vsel %vm598, %v595, %v597
      %v603 = vsel %vm235, %v571, 0
      %v606 = vsel %vm239, %v599, 0
      %v609 = vsel %vm239, %v600, 0
      %v612 = vsel %vm239, %v601, 0
      %614 = vmatprep.subr.bf16.mxu0 %v609
      %615 = vmatpush1.bf16.msra.mxu0 %v606
      %616 = vmatprep.subr.bf16.mxu0 0
      %617 = vmatpush1.bf16.msra.mxu0 0
      %618 = vmatprep.subr.bf16.mxu0 0
      %619 = vmatpush1.bf16.msra.mxu0 0
      %620 = vmatprep.subr.bf16.mxu0 0
      %621 = vmatpush1.bf16.msra.mxu0 0
      %622 = vmatprep.subr.bf16.mxu0 0
      %623 = vmatpush1.bf16.msra.mxu0 0
      %624 = vmatprep.subr.bf16.mxu0 0
      %625 = vmatpush1.bf16.msra.mxu0 0
      %626 = vmatprep.subr.bf16.mxu0 0
      %627 = vmatpush1.bf16.msra.mxu0 0
      %628 = vmatprep.subr.bf16.mxu0 0
      %629 = vmatpush1.bf16.msra.mxu0 0
      %630 = vmatprep.subr.bf16.mxu0 0
      %631 = vmatpush1.bf16.msra.mxu0 0
      %632 = vmatprep.subr.bf16.mxu0 0
      %633 = vmatpush1.bf16.msra.mxu0 0
      %634 = vmatprep.subr.bf16.mxu0 0
      %635 = vmatpush1.bf16.msra.mxu0 0
      %636 = vmatprep.subr.bf16.mxu0 0
      %637 = vmatpush1.bf16.msra.mxu0 0
      %638 = vmatprep.subr.bf16.mxu0 0
      %639 = vmatpush1.bf16.msra.mxu0 0
      %640 = vmatprep.subr.bf16.mxu0 0
      %641 = vmatpush1.bf16.msra.mxu0 0
      %642 = vmatprep.subr.bf16.mxu0 0
      %643 = vmatpush1.bf16.msra.mxu0 0
      %644 = vmatprep.subr.bf16.mxu0 0
      %645 = vmatpush1.bf16.msra.mxu0 0
      %646 = vmatprep.mubr.bf16.mxu0 0
      %647 = vmatmul.mubr.bf16.gmra.mrb[0].mxu0 %v603
      %v648 = vpop.f32.mrb[0].mxu0
      %v649 = vadd.f32 0.0, %v648
      %v650 = vpop.f32.mrb[0].mxu0
      %v651 = vadd.f32 0.0, %v650
      %v652 = vpop.f32.mrb[0].mxu0
      %v653 = vpop.f32.mrb[0].mxu0
      %654 = vdwg.mxu0
      %655 = vmatprep.subr.bf16.mxu0 0
      %656 = vmatpush1.bf16.msra.mxu0 %v612
      %657 = vmatprep.subr.bf16.mxu0 0
      %658 = vmatpush1.bf16.msra.mxu0 0
      %659 = vmatprep.subr.bf16.mxu0 0
      %660 = vmatpush1.bf16.msra.mxu0 0
      %661 = vmatprep.subr.bf16.mxu0 0
      %662 = vmatpush1.bf16.msra.mxu0 0
      %663 = vmatprep.subr.bf16.mxu0 0
      %664 = vmatpush1.bf16.msra.mxu0 0
      %665 = vmatprep.subr.bf16.mxu0 0
      %666 = vmatpush1.bf16.msra.mxu0 0
      %667 = vmatprep.subr.bf16.mxu0 0
      %668 = vmatpush1.bf16.msra.mxu0 0
      %669 = vmatprep.subr.bf16.mxu0 0
      %670 = vmatpush1.bf16.msra.mxu0 0
      %671 = vmatprep.subr.bf16.mxu0 0
      %672 = vmatpush1.bf16.msra.mxu0 0
      %673 = vmatprep.subr.bf16.mxu0 0
      %674 = vmatpush1.bf16.msra.mxu0 0
      %675 = vmatprep.subr.bf16.mxu0 0
      %676 = vmatpush1.bf16.msra.mxu0 0
      %677 = vmatprep.subr.bf16.mxu0 0
      %678 = vmatpush1.bf16.msra.mxu0 0
      %679 = vmatprep.subr.bf16.mxu0 0
      %680 = vmatpush1.bf16.msra.mxu0 0
      %681 = vmatprep.subr.bf16.mxu0 0
      %682 = vmatpush1.bf16.msra.mxu0 0
      %683 = vmatprep.subr.bf16.mxu0 0
      %684 = vmatpush1.bf16.msra.mxu0 0
      %685 = vmatprep.subr.bf16.mxu0 0
      %686 = vmatpush1.bf16.msra.mxu0 0
      %687 = vmatprep.mubr.bf16.mxu0 0
      %688 = vmatmul.mubr.bf16.gmra.mrb[0].mxu0 %v603
      %v689 = vpop.f32.mrb[0].mxu0
      %v690 = vadd.f32 0.0, %v689
      %v691 = vpop.f32.mrb[0].mxu0
      %v692 = vpop.f32.mrb[0].mxu0
      %v693 = vpop.f32.mrb[0].mxu0
      %694 = vdwg.mxu0
      %v695 = vadd.f32 %v566, %v649
      %v696 = vadd.f32 %v567, %v651
      %v697 = vadd.f32 %v568, %v690
      %v698 = vld [vmem:[%s192] sm:$0xff]
      %s699 = scalar_lea.vmem %s0, 16
      %v700 = vld [vmem:[%s699] sm:$0xf]
      %v702 = vcombine.high %v698, %v698
      %v704 = vunpack.c.l.s4 1983009808
      %v705 = vunpack.c.0.s8 %v704
      %v706 = vlaneseq
      %v707 = vshrl.u32 %v706, 7
      %v708 = vsub.s32 %v705, %v707
      %v709 = vrot.slane %v698, %v708
      %v711 = vunpack.c.l.s4 1983009808
      %v712 = vunpack.c.0.s8 %v711
      %v713 = vlaneseq
      %v714 = vshrl.u32 %v713, 7
      %v715 = vsub.s32 %v712, %v714
      %v716 = vrot.slane %v702, %v715
      %v717 = vcombine.high %v709, %v709
      %v718 = vcombine.high %v716, %v716
      %719 = vrot.lane.b32.xlu0 %v709, 63
      %v720 = vpop.permute.xlu0 %719
      %721 = vrot.lane.b32.xlu0 %v717, 63
      %v722 = vpop.permute.xlu0 %721
      %723 = vrot.lane.b32.xlu0 %v716, 63
      %v724 = vpop.permute.xlu0 %723
      %725 = vrot.lane.b32.xlu0 %v718, 63
      %v726 = vpop.permute.xlu0 %725
      %vm727 = vcmask 515072
      %v728 = vsel %vm727, %v720, %v722
      %v729 = vsel %vm727, %v722, %v724
      %v730 = vsel %vm727, %v724, %v726
      %v732 = vsel %vm235, %v700, 0
      %v735 = vsel %vm239, %v728, 0
      %v738 = vsel %vm239, %v729, 0
      %v741 = vsel %vm239, %v730, 0
      %743 = vmatprep.subr.bf16.mxu0 %v738
      %744 = vmatpush1.bf16.msra.mxu0 %v735
      %745 = vmatprep.subr.bf16.mxu0 0
      %746 = vmatpush1.bf16.msra.mxu0 0
      %747 = vmatprep.subr.bf16.mxu0 0
      %748 = vmatpush1.bf16.msra.mxu0 0
      %749 = vmatprep.subr.bf16.mxu0 0
      %750 = vmatpush1.bf16.msra.mxu0 0
      %751 = vmatprep.subr.bf16.mxu0 0
      %752 = vmatpush1.bf16.msra.mxu0 0
      %753 = vmatprep.subr.bf16.mxu0 0
      %754 = vmatpush1.bf16.msra.mxu0 0
      %755 = vmatprep.subr.bf16.mxu0 0
      %756 = vmatpush1.bf16.msra.mxu0 0
      %757 = vmatprep.subr.bf16.mxu0 0
      %758 = vmatpush1.bf16.msra.mxu0 0
      %759 = vmatprep.subr.bf16.mxu0 0
      %760 = vmatpush1.bf16.msra.mxu0 0
      %761 = vmatprep.subr.bf16.mxu0 0
      %762 = vmatpush1.bf16.msra.mxu0 0
      %763 = vmatprep.subr.bf16.mxu0 0
      %764 = vmatpush1.bf16.msra.mxu0 0
      %765 = vmatprep.subr.bf16.mxu0 0
      %766 = vmatpush1.bf16.msra.mxu0 0
      %767 = vmatprep.subr.bf16.mxu0 0
      %768 = vmatpush1.bf16.msra.mxu0 0
      %769 = vmatprep.subr.bf16.mxu0 0
      %770 = vmatpush1.bf16.msra.mxu0 0
      %771 = vmatprep.subr.bf16.mxu0 0
      %772 = vmatpush1.bf16.msra.mxu0 0
      %773 = vmatprep.subr.bf16.mxu0 0
      %774 = vmatpush1.bf16.msra.mxu0 0
      %775 = vmatprep.mubr.bf16.mxu0 0
      %776 = vmatmul.mubr.bf16.gmra.mrb[0].mxu0 %v732
      %v777 = vpop.f32.mrb[0].mxu0
      %v778 = vadd.f32 0.0, %v777
      %v779 = vpop.f32.mrb[0].mxu0
      %v780 = vadd.f32 0.0, %v779
      %v781 = vpop.f32.mrb[0].mxu0
      %v782 = vpop.f32.mrb[0].mxu0
      %783 = vdwg.mxu0
      %784 = vmatprep.subr.bf16.mxu0 0
      %785 = vmatpush1.bf16.msra.mxu0 %v741
      %786 = vmatprep.subr.bf16.mxu0 0
      %787 = vmatpush1.bf16.msra.mxu0 0
      %788 = vmatprep.subr.bf16.mxu0 0
      %789 = vmatpush1.bf16.msra.mxu0 0
      %790 = vmatprep.subr.bf16.mxu0 0
      %791 = vmatpush1.bf16.msra.mxu0 0
      %792 = vmatprep.subr.bf16.mxu0 0
      %793 = vmatpush1.bf16.msra.mxu0 0
      %794 = vmatprep.subr.bf16.mxu0 0
      %795 = vmatpush1.bf16.msra.mxu0 0
      %796 = vmatprep.subr.bf16.mxu0 0
      %797 = vmatpush1.bf16.msra.mxu0 0
      %798 = vmatprep.subr.bf16.mxu0 0
      %799 = vmatpush1.bf16.msra.mxu0 0
      %800 = vmatprep.subr.bf16.mxu0 0
      %801 = vmatpush1.bf16.msra.mxu0 0
      %802 = vmatprep.subr.bf16.mxu0 0
      %803 = vmatpush1.bf16.msra.mxu0 0
      %804 = vmatprep.subr.bf16.mxu0 0
      %805 = vmatpush1.bf16.msra.mxu0 0
      %806 = vmatprep.subr.bf16.mxu0 0
      %807 = vmatpush1.bf16.msra.mxu0 0
      %808 = vmatprep.subr.bf16.mxu0 0
      %809 = vmatpush1.bf16.msra.mxu0 0
      %810 = vmatprep.subr.bf16.mxu0 0
      %811 = vmatpush1.bf16.msra.mxu0 0
      %812 = vmatprep.subr.bf16.mxu0 0
      %813 = vmatpush1.bf16.msra.mxu0 0
      %814 = vmatprep.subr.bf16.mxu0 0
      %815 = vmatpush1.bf16.msra.mxu0 0
      %816 = vmatprep.mubr.bf16.mxu0 0
      %817 = vmatmul.mubr.bf16.gmra.mrb[0].mxu0 %v732
      %v818 = vpop.f32.mrb[0].mxu0
      %v819 = vadd.f32 0.0, %v818
      %v820 = vpop.f32.mrb[0].mxu0
      %v821 = vpop.f32.mrb[0].mxu0
      %v822 = vpop.f32.mrb[0].mxu0
      %823 = vdwg.mxu0
      %v824 = vadd.f32 %v695, %v778
      %v825 = vadd.f32 %v696, %v780
      %v826 = vadd.f32 %v697, %v819
      %v827 = vld [vmem:[%s192] sm:$0xff]
      %s828 = scalar_lea.vmem %s0, 20
      %v829 = vld [vmem:[%s828] sm:$0xf]
      %v831 = vcombine.high %v827, %v827
      %v833 = vunpack.c.l.s4 1983009808
      %v834 = vunpack.c.0.s8 %v833
      %v835 = vlaneseq
      %v836 = vshrl.u32 %v835, 7
      %v837 = vsub.s32 %v834, %v836
      %v838 = vrot.slane %v827, %v837
      %v840 = vunpack.c.l.s4 1983009808
      %v841 = vunpack.c.0.s8 %v840
      %v842 = vlaneseq
      %v843 = vshrl.u32 %v842, 7
      %v844 = vsub.s32 %v841, %v843
      %v845 = vrot.slane %v831, %v844
      %v846 = vcombine.high %v838, %v838
      %v847 = vcombine.high %v845, %v845
      %848 = vrot.lane.b32.xlu0 %v838, 62
      %v849 = vpop.permute.xlu0 %848
      %850 = vrot.lane.b32.xlu0 %v846, 62
      %v851 = vpop.permute.xlu0 %850
      %852 = vrot.lane.b32.xlu0 %v845, 62
      %v853 = vpop.permute.xlu0 %852
      %854 = vrot.lane.b32.xlu0 %v847, 62
      %v855 = vpop.permute.xlu0 %854
      %vm856 = vcmask 506880
      %v857 = vsel %vm856, %v849, %v851
      %v858 = vsel %vm856, %v851, %v853
      %v859 = vsel %vm856, %v853, %v855
      %v861 = vsel %vm235, %v829, 0
      %v864 = vsel %vm239, %v857, 0
      %v867 = vsel %vm239, %v858, 0
      %v870 = vsel %vm239, %v859, 0
      %872 = vmatprep.subr.bf16.mxu0 %v867
      %873 = vmatpush1.bf16.msra.mxu0 %v864
      %874 = vmatprep.subr.bf16.mxu0 0
      %875 = vmatpush1.bf16.msra.mxu0 0
      %876 = vmatprep.subr.bf16.mxu0 0
      %877 = vmatpush1.bf16.msra.mxu0 0
      %878 = vmatprep.subr.bf16.mxu0 0
      %879 = vmatpush1.bf16.msra.mxu0 0
      %880 = vmatprep.subr.bf16.mxu0 0
      %881 = vmatpush1.bf16.msra.mxu0 0
      %882 = vmatprep.subr.bf16.mxu0 0
      %883 = vmatpush1.bf16.msra.mxu0 0
      %884 = vmatprep.subr.bf16.mxu0 0
      %885 = vmatpush1.bf16.msra.mxu0 0
      %886 = vmatprep.subr.bf16.mxu0 0
      %887 = vmatpush1.bf16.msra.mxu0 0
      %888 = vmatprep.subr.bf16.mxu0 0
      %889 = vmatpush1.bf16.msra.mxu0 0
      %890 = vmatprep.subr.bf16.mxu0 0
      %891 = vmatpush1.bf16.msra.mxu0 0
      %892 = vmatprep.subr.bf16.mxu0 0
      %893 = vmatpush1.bf16.msra.mxu0 0
      %894 = vmatprep.subr.bf16.mxu0 0
      %895 = vmatpush1.bf16.msra.mxu0 0
      %896 = vmatprep.subr.bf16.mxu0 0
      %897 = vmatpush1.bf16.msra.mxu0 0
      %898 = vmatprep.subr.bf16.mxu0 0
      %899 = vmatpush1.bf16.msra.mxu0 0
      %900 = vmatprep.subr.bf16.mxu0 0
      %901 = vmatpush1.bf16.msra.mxu0 0
      %902 = vmatprep.subr.bf16.mxu0 0
      %903 = vmatpush1.bf16.msra.mxu0 0
      %904 = vmatprep.mubr.bf16.mxu0 0
      %905 = vmatmul.mubr.bf16.gmra.mrb[0].mxu0 %v861
      %v906 = vpop.f32.mrb[0].mxu0
      %v907 = vadd.f32 0.0, %v906
      %v908 = vpop.f32.mrb[0].mxu0
      %v909 = vadd.f32 0.0, %v908
      %v910 = vpop.f32.mrb[0].mxu0
      %v911 = vpop.f32.mrb[0].mxu0
      %912 = vdwg.mxu0
      %913 = vmatprep.subr.bf16.mxu0 0
      %914 = vmatpush1.bf16.msra.mxu0 %v870
      %915 = vmatprep.subr.bf16.mxu0 0
      %916 = vmatpush1.bf16.msra.mxu0 0
      %917 = vmatprep.subr.bf16.mxu0 0
      %918 = vmatpush1.bf16.msra.mxu0 0
      %919 = vmatprep.subr.bf16.mxu0 0
      %920 = vmatpush1.bf16.msra.mxu0 0
      %921 = vmatprep.subr.bf16.mxu0 0
      %922 = vmatpush1.bf16.msra.mxu0 0
      %923 = vmatprep.subr.bf16.mxu0 0
      %924 = vmatpush1.bf16.msra.mxu0 0
      %925 = vmatprep.subr.bf16.mxu0 0
      %926 = vmatpush1.bf16.msra.mxu0 0
      %927 = vmatprep.subr.bf16.mxu0 0
      %928 = vmatpush1.bf16.msra.mxu0 0
      %929 = vmatprep.subr.bf16.mxu0 0
      %930 = vmatpush1.bf16.msra.mxu0 0
      %931 = vmatprep.subr.bf16.mxu0 0
      %932 = vmatpush1.bf16.msra.mxu0 0
      %933 = vmatprep.subr.bf16.mxu0 0
      %934 = vmatpush1.bf16.msra.mxu0 0
      %935 = vmatprep.subr.bf16.mxu0 0
      %936 = vmatpush1.bf16.msra.mxu0 0
      %937 = vmatprep.subr.bf16.mxu0 0
      %938 = vmatpush1.bf16.msra.mxu0 0
      %939 = vmatprep.subr.bf16.mxu0 0
      %940 = vmatpush1.bf16.msra.mxu0 0
      %941 = vmatprep.subr.bf16.mxu0 0
      %942 = vmatpush1.bf16.msra.mxu0 0
      %943 = vmatprep.subr.bf16.mxu0 0
      %944 = vmatpush1.bf16.msra.mxu0 0
      %945 = vmatprep.mubr.bf16.mxu0 0
      %946 = vmatmul.mubr.bf16.gmra.mrb[0].mxu0 %v861
      %v947 = vpop.f32.mrb[0].mxu0
      %v948 = vadd.f32 0.0, %v947
      %v949 = vpop.f32.mrb[0].mxu0
      %v950 = vpop.f32.mrb[0].mxu0
      %v951 = vpop.f32.mrb[0].mxu0
      %952 = vdwg.mxu0
      %v953 = vadd.f32 %v824, %v907
      %v954 = vadd.f32 %v825, %v909
      %v955 = vadd.f32 %v826, %v948
      %v956 = vld [vmem:[%s192 + $0x2] sm:$0x3f]
      %s957 = scalar_lea.vmem %s0, 24
      %v958 = vld [vmem:[%s957] sm:$0xf]
      %v960 = vcombine.high %v956, %v956
      %v962 = vunpack.c.l.s4 1983009808
      %v963 = vunpack.c.0.s8 %v962
      %v964 = vlaneseq
      %v965 = vshrl.u32 %v964, 7
      %v966 = vsub.s32 %v963, %v965
      %v967 = vrot.slane %v956, %v966
      %v969 = vunpack.c.l.s4 1983009808
      %v970 = vunpack.c.0.s8 %v969
      %v971 = vlaneseq
      %v972 = vshrl.u32 %v971, 7
      %v973 = vsub.s32 %v970, %v972
      %v974 = vrot.slane %v960, %v973
      %v975 = vcombine.high %v967, %v967
      %v977 = vsel %vm235, %v958, 0
      %v980 = vsel %vm239, %v967, 0
      %v983 = vsel %vm239, %v975, 0
      %v986 = vsel %vm239, %v974, 0
      %988 = vmatprep.subr.bf16.mxu0 %v983
      %989 = vmatpush1.bf16.msra.mxu0 %v980
      %990 = vmatprep.subr.bf16.mxu0 0
      %991 = vmatpush1.bf16.msra.mxu0 0
      %992 = vmatprep.subr.bf16.mxu0 0
      %993 = vmatpush1.bf16.msra.mxu0 0
      %994 = vmatprep.subr.bf16.mxu0 0
      %995 = vmatpush1.bf16.msra.mxu0 0
      %996 = vmatprep.subr.bf16.mxu0 0
      %997 = vmatpush1.bf16.msra.mxu0 0
      %998 = vmatprep.subr.bf16.mxu0 0
      %999 = vmatpush1.bf16.msra.mxu0 0
      %1000 = vmatprep.subr.bf16.mxu0 0
      %1001 = vmatpush1.bf16.msra.mxu0 0
      %1002 = vmatprep.subr.bf16.mxu0 0
      %1003 = vmatpush1.bf16.msra.mxu0 0
      %1004 = vmatprep.subr.bf16.mxu0 0
      %1005 = vmatpush1.bf16.msra.mxu0 0
      %1006 = vmatprep.subr.bf16.mxu0 0
      %1007 = vmatpush1.bf16.msra.mxu0 0
      %1008 = vmatprep.subr.bf16.mxu0 0
      %1009 = vmatpush1.bf16.msra.mxu0 0
      %1010 = vmatprep.subr.bf16.mxu0 0
      %1011 = vmatpush1.bf16.msra.mxu0 0
      %1012 = vmatprep.subr.bf16.mxu0 0
      %1013 = vmatpush1.bf16.msra.mxu0 0
      %1014 = vmatprep.subr.bf16.mxu0 0
      %1015 = vmatpush1.bf16.msra.mxu0 0
      %1016 = vmatprep.subr.bf16.mxu0 0
      %1017 = vmatpush1.bf16.msra.mxu0 0
      %1018 = vmatprep.subr.bf16.mxu0 0
      %1019 = vmatpush1.bf16.msra.mxu0 0
      %1020 = vmatprep.mubr.bf16.mxu0 0
      %1021 = vmatmul.mubr.bf16.gmra.mrb[0].mxu0 %v977
      %v1022 = vpop.f32.mrb[0].mxu0
      %v1023 = vadd.f32 0.0, %v1022
      %v1024 = vpop.f32.mrb[0].mxu0
      %v1025 = vadd.f32 0.0, %v1024
      %v1026 = vpop.f32.mrb[0].mxu0
      %v1027 = vpop.f32.mrb[0].mxu0
      %1028 = vdwg.mxu0
      %1029 = vmatprep.subr.bf16.mxu0 0
      %1030 = vmatpush1.bf16.msra.mxu0 %v986
      %1031 = vmatprep.subr.bf16.mxu0 0
      %1032 = vmatpush1.bf16.msra.mxu0 0
      %1033 = vmatprep.subr.bf16.mxu0 0
      %1034 = vmatpush1.bf16.msra.mxu0 0
      %1035 = vmatprep.subr.bf16.mxu0 0
      %1036 = vmatpush1.bf16.msra.mxu0 0
      %1037 = vmatprep.subr.bf16.mxu0 0
      %1038 = vmatpush1.bf16.msra.mxu0 0
      %1039 = vmatprep.subr.bf16.mxu0 0
      %1040 = vmatpush1.bf16.msra.mxu0 0
      %1041 = vmatprep.subr.bf16.mxu0 0
      %1042 = vmatpush1.bf16.msra.mxu0 0
      %1043 = vmatprep.subr.bf16.mxu0 0
      %1044 = vmatpush1.bf16.msra.mxu0 0
      %1045 = vmatprep.subr.bf16.mxu0 0
      %1046 = vmatpush1.bf16.msra.mxu0 0
      %1047 = vmatprep.subr.bf16.mxu0 0
      %1048 = vmatpush1.bf16.msra.mxu0 0
      %1049 = vmatprep.subr.bf16.mxu0 0
      %1050 = vmatpush1.bf16.msra.mxu0 0
      %1051 = vmatprep.subr.bf16.mxu0 0
      %1052 = vmatpush1.bf16.msra.mxu0 0
      %1053 = vmatprep.subr.bf16.mxu0 0
      %1054 = vmatpush1.bf16.msra.mxu0 0
      %1055 = vmatprep.subr.bf16.mxu0 0
      %1056 = vmatpush1.bf16.msra.mxu0 0
      %1057 = vmatprep.subr.bf16.mxu0 0
      %1058 = vmatpush1.bf16.msra.mxu0 0
      %1059 = vmatprep.subr.bf16.mxu0 0
      %1060 = vmatpush1.bf16.msra.mxu0 0
      %1061 = vmatprep.mubr.bf16.mxu0 0
      %1062 = vmatmul.mubr.bf16.gmra.mrb[0].mxu0 %v977
      %v1063 = vpop.f32.mrb[0].mxu0
      %v1064 = vadd.f32 0.0, %v1063
      %v1065 = vpop.f32.mrb[0].mxu0
      %v1066 = vpop.f32.mrb[0].mxu0
      %v1067 = vpop.f32.mrb[0].mxu0
      %1068 = vdwg.mxu0
      %v1069 = vadd.f32 %v953, %v1023
      %v1070 = vadd.f32 %v954, %v1025
      %v1071 = vadd.f32 %v955, %v1064
      %v1072 = vld [vmem:[%s192 + $0x2] sm:$0xff]
      %s1073 = scalar_lea.vmem %s0, 28
      %v1074 = vld [vmem:[%s1073] sm:$0xf]
      %v1076 = vcombine.high %v1072, %v1072
      %v1078 = vunpack.c.l.s4 1983009808
      %v1079 = vunpack.c.0.s8 %v1078
      %v1080 = vlaneseq
      %v1081 = vshrl.u32 %v1080, 7
      %v1082 = vsub.s32 %v1079, %v1081
      %v1083 = vrot.slane %v1072, %v1082
      %v1085 = vunpack.c.l.s4 1983009808
      %v1086 = vunpack.c.0.s8 %v1085
      %v1087 = vlaneseq
      %v1088 = vshrl.u32 %v1087, 7
      %v1089 = vsub.s32 %v1086, %v1088
      %v1090 = vrot.slane %v1076, %v1089
      %v1091 = vcombine.high %v1083, %v1083
      %v1092 = vcombine.high %v1090, %v1090
      %1093 = vrot.lane.b32.xlu0 %v1083, 127
      %v1094 = vpop.permute.xlu0 %1093
      %1095 = vrot.lane.b32.xlu0 %v1091, 127
      %v1096 = vpop.permute.xlu0 %1095
      %1097 = vrot.lane.b32.xlu0 %v1090, 127
      %v1098 = vpop.permute.xlu0 %1097
      %1099 = vrot.lane.b32.xlu0 %v1092, 127
      %v1100 = vpop.permute.xlu0 %1099
      %v1101 = vsel %vm231, %v1094, %v1096
      %v1102 = vsel %vm231, %v1096, %v1098
      %v1103 = vsel %vm231, %v1098, %v1100
      %v1105 = vsel %vm235, %v1074, 0
      %v1108 = vsel %vm239, %v1101, 0
      %v1111 = vsel %vm239, %v1102, 0
      %v1114 = vsel %vm239, %v1103, 0
      %1116 = vmatprep.subr.bf16.mxu0 %v1111
      %1117 = vmatpush1.bf16.msra.mxu0 %v1108
      %1118 = vmatprep.subr.bf16.mxu0 0
      %1119 = vmatpush1.bf16.msra.mxu0 0
      %1120 = vmatprep.subr.bf16.mxu0 0
      %1121 = vmatpush1.bf16.msra.mxu0 0
      %1122 = vmatprep.subr.bf16.mxu0 0
      %1123 = vmatpush1.bf16.msra.mxu0 0
      %1124 = vmatprep.subr.bf16.mxu0 0
      %1125 = vmatpush1.bf16.msra.mxu0 0
      %1126 = vmatprep.subr.bf16.mxu0 0
      %1127 = vmatpush1.bf16.msra.mxu0 0
      %1128 = vmatprep.subr.bf16.mxu0 0
      %1129 = vmatpush1.bf16.msra.mxu0 0
      %1130 = vmatprep.subr.bf16.mxu0 0
      %1131 = vmatpush1.bf16.msra.mxu0 0
      %1132 = vmatprep.subr.bf16.mxu0 0
      %1133 = vmatpush1.bf16.msra.mxu0 0
      %1134 = vmatprep.subr.bf16.mxu0 0
      %1135 = vmatpush1.bf16.msra.mxu0 0
      %1136 = vmatprep.subr.bf16.mxu0 0
      %1137 = vmatpush1.bf16.msra.mxu0 0
      %1138 = vmatprep.subr.bf16.mxu0 0
      %1139 = vmatpush1.bf16.msra.mxu0 0
      %1140 = vmatprep.subr.bf16.mxu0 0
      %1141 = vmatpush1.bf16.msra.mxu0 0
      %1142 = vmatprep.subr.bf16.mxu0 0
      %1143 = vmatpush1.bf16.msra.mxu0 0
      %1144 = vmatprep.subr.bf16.mxu0 0
      %1145 = vmatpush1.bf16.msra.mxu0 0
      %1146 = vmatprep.subr.bf16.mxu0 0
      %1147 = vmatpush1.bf16.msra.mxu0 0
      %1148 = vmatprep.mubr.bf16.mxu0 0
      %1149 = vmatmul.mubr.bf16.gmra.mrb[0].mxu0 %v1105
      %v1150 = vpop.f32.mrb[0].mxu0
      %v1151 = vadd.f32 0.0, %v1150
      %v1152 = vpop.f32.mrb[0].mxu0
      %v1153 = vadd.f32 0.0, %v1152
      %v1154 = vpop.f32.mrb[0].mxu0
      %v1155 = vpop.f32.mrb[0].mxu0
      %1156 = vdwg.mxu0
      %1157 = vmatprep.subr.bf16.mxu0 0
      %1158 = vmatpush1.bf16.msra.mxu0 %v1114
      %1159 = vmatprep.subr.bf16.mxu0 0
      %1160 = vmatpush1.bf16.msra.mxu0 0
      %1161 = vmatprep.subr.bf16.mxu0 0
      %1162 = vmatpush1.bf16.msra.mxu0 0
      %1163 = vmatprep.subr.bf16.mxu0 0
      %1164 = vmatpush1.bf16.msra.mxu0 0
      %1165 = vmatprep.subr.bf16.mxu0 0
      %1166 = vmatpush1.bf16.msra.mxu0 0
      %1167 = vmatprep.subr.bf16.mxu0 0
      %1168 = vmatpush1.bf16.msra.mxu0 0
      %1169 = vmatprep.subr.bf16.mxu0 0
      %1170 = vmatpush1.bf16.msra.mxu0 0
      %1171 = vmatprep.subr.bf16.mxu0 0
      %1172 = vmatpush1.bf16.msra.mxu0 0
      %1173 = vmatprep.subr.bf16.mxu0 0
      %1174 = vmatpush1.bf16.msra.mxu0 0
      %1175 = vmatprep.subr.bf16.mxu0 0
      %1176 = vmatpush1.bf16.msra.mxu0 0
      %1177 = vmatprep.subr.bf16.mxu0 0
      %1178 = vmatpush1.bf16.msra.mxu0 0
      %1179 = vmatprep.subr.bf16.mxu0 0
      %1180 = vmatpush1.bf16.msra.mxu0 0
      %1181 = vmatprep.subr.bf16.mxu0 0
      %1182 = vmatpush1.bf16.msra.mxu0 0
      %1183 = vmatprep.subr.bf16.mxu0 0
      %1184 = vmatpush1.bf16.msra.mxu0 0
      %1185 = vmatprep.subr.bf16.mxu0 0
      %1186 = vmatpush1.bf16.msra.mxu0 0
      %1187 = vmatprep.subr.bf16.mxu0 0
      %1188 = vmatpush1.bf16.msra.mxu0 0
      %1189 = vmatprep.mubr.bf16.mxu0 0
      %1190 = vmatmul.mubr.bf16.gmra.mrb[0].mxu0 %v1105
      %v1191 = vpop.f32.mrb[0].mxu0
      %v1192 = vadd.f32 0.0, %v1191
      %v1193 = vpop.f32.mrb[0].mxu0
      %v1194 = vpop.f32.mrb[0].mxu0
      %v1195 = vpop.f32.mrb[0].mxu0
      %1196 = vdwg.mxu0
      %v1197 = vadd.f32 %v1069, %v1151
      %v1198 = vadd.f32 %v1070, %v1153
      %v1199 = vadd.f32 %v1071, %v1192
      %v1200 = vld [vmem:[%s192 + $0x2] sm:$0xff]
      %s1201 = scalar_lea.vmem %s0, 32
      %v1202 = vld [vmem:[%s1201] sm:$0xf]
      %v1204 = vcombine.high %v1200, %v1200
      %v1206 = vunpack.c.l.s4 1983009808
      %v1207 = vunpack.c.0.s8 %v1206
      %v1208 = vlaneseq
      %v1209 = vshrl.u32 %v1208, 7
      %v1210 = vsub.s32 %v1207, %v1209
      %v1211 = vrot.slane %v1200, %v1210
      %v1213 = vunpack.c.l.s4 1983009808
      %v1214 = vunpack.c.0.s8 %v1213
      %v1215 = vlaneseq
      %v1216 = vshrl.u32 %v1215, 7
      %v1217 = vsub.s32 %v1214, %v1216
      %v1218 = vrot.slane %v1204, %v1217
      %v1219 = vcombine.high %v1211, %v1211
      %v1220 = vcombine.high %v1218, %v1218
      %1221 = vrot.lane.b32.xlu0 %v1211, 126
      %v1222 = vpop.permute.xlu0 %1221
      %1223 = vrot.lane.b32.xlu0 %v1219, 126
      %v1224 = vpop.permute.xlu0 %1223
      %1225 = vrot.lane.b32.xlu0 %v1218, 126
      %v1226 = vpop.permute.xlu0 %1225
      %1227 = vrot.lane.b32.xlu0 %v1220, 126
      %v1228 = vpop.permute.xlu0 %1227
      %v1229 = vsel %vm469, %v1222, %v1224
      %v1230 = vsel %vm469, %v1224, %v1226
      %v1231 = vsel %vm469, %v1226, %v1228
      %v1233 = vsel %vm235, %v1202, 0
      %v1236 = vsel %vm239, %v1229, 0
      %v1239 = vsel %vm239, %v1230, 0
      %v1242 = vsel %vm239, %v1231, 0
      %1244 = vmatprep.subr.bf16.mxu0 %v1239
      %1245 = vmatpush1.bf16.msra.mxu0 %v1236
      %1246 = vmatprep.subr.bf16.mxu0 0
      %1247 = vmatpush1.bf16.msra.mxu0 0
      %1248 = vmatprep.subr.bf16.mxu0 0
      %1249 = vmatpush1.bf16.msra.mxu0 0
      %1250 = vmatprep.subr.bf16.mxu0 0
      %1251 = vmatpush1.bf16.msra.mxu0 0
      %1252 = vmatprep.subr.bf16.mxu0 0
      %1253 = vmatpush1.bf16.msra.mxu0 0
      %1254 = vmatprep.subr.bf16.mxu0 0
      %1255 = vmatpush1.bf16.msra.mxu0 0
      %1256 = vmatprep.subr.bf16.mxu0 0
      %1257 = vmatpush1.bf16.msra.mxu0 0
      %1258 = vmatprep.subr.bf16.mxu0 0
      %1259 = vmatpush1.bf16.msra.mxu0 0
      %1260 = vmatprep.subr.bf16.mxu0 0
      %1261 = vmatpush1.bf16.msra.mxu0 0
      %1262 = vmatprep.subr.bf16.mxu0 0
      %1263 = vmatpush1.bf16.msra.mxu0 0
      %1264 = vmatprep.subr.bf16.mxu0 0
      %1265 = vmatpush1.bf16.msra.mxu0 0
      %1266 = vmatprep.subr.bf16.mxu0 0
      %1267 = vmatpush1.bf16.msra.mxu0 0
      %1268 = vmatprep.subr.bf16.mxu0 0
      %1269 = vmatpush1.bf16.msra.mxu0 0
      %1270 = vmatprep.subr.bf16.mxu0 0
      %1271 = vmatpush1.bf16.msra.mxu0 0
      %1272 = vmatprep.subr.bf16.mxu0 0
      %1273 = vmatpush1.bf16.msra.mxu0 0
      %1274 = vmatprep.subr.bf16.mxu0 0
      %1275 = vmatpush1.bf16.msra.mxu0 0
      %1276 = vmatprep.mubr.bf16.mxu0 0
      %1277 = vmatmul.mubr.bf16.gmra.mrb[0].mxu0 %v1233
      %v1278 = vpop.f32.mrb[0].mxu0
      %v1279 = vadd.f32 0.0, %v1278
      %v1280 = vpop.f32.mrb[0].mxu0
      %v1281 = vadd.f32 0.0, %v1280
      %v1282 = vpop.f32.mrb[0].mxu0
      %v1283 = vpop.f32.mrb[0].mxu0
      %1284 = vdwg.mxu0
      %1285 = vmatprep.subr.bf16.mxu0 0
      %1286 = vmatpush1.bf16.msra.mxu0 %v1242
      %1287 = vmatprep.subr.bf16.mxu0 0
      %1288 = vmatpush1.bf16.msra.mxu0 0
      %1289 = vmatprep.subr.bf16.mxu0 0
      %1290 = vmatpush1.bf16.msra.mxu0 0
      %1291 = vmatprep.subr.bf16.mxu0 0
      %1292 = vmatpush1.bf16.msra.mxu0 0
      %1293 = vmatprep.subr.bf16.mxu0 0
      %1294 = vmatpush1.bf16.msra.mxu0 0
      %1295 = vmatprep.subr.bf16.mxu0 0
      %1296 = vmatpush1.bf16.msra.mxu0 0
      %1297 = vmatprep.subr.bf16.mxu0 0
      %1298 = vmatpush1.bf16.msra.mxu0 0
      %1299 = vmatprep.subr.bf16.mxu0 0
      %1300 = vmatpush1.bf16.msra.mxu0 0
      %1301 = vmatprep.subr.bf16.mxu0 0
      %1302 = vmatpush1.bf16.msra.mxu0 0
      %1303 = vmatprep.subr.bf16.mxu0 0
      %1304 = vmatpush1.bf16.msra.mxu0 0
      %1305 = vmatprep.subr.bf16.mxu0 0
      %1306 = vmatpush1.bf16.msra.mxu0 0
      %1307 = vmatprep.subr.bf16.mxu0 0
      %1308 = vmatpush1.bf16.msra.mxu0 0
      %1309 = vmatprep.subr.bf16.mxu0 0
      %1310 = vmatpush1.bf16.msra.mxu0 0
      %1311 = vmatprep.subr.bf16.mxu0 0
      %1312 = vmatpush1.bf16.msra.mxu0 0
      %1313 = vmatprep.subr.bf16.mxu0 0
      %1314 = vmatpush1.bf16.msra.mxu0 0
      %1315 = vmatprep.subr.bf16.mxu0 0
      %1316 = vmatpush1.bf16.msra.mxu0 0
      %1317 = vmatprep.mubr.bf16.mxu0 0
      %1318 = vmatmul.mubr.bf16.gmra.mrb[0].mxu0 %v1233
      %v1319 = vpop.f32.mrb[0].mxu0
      %v1320 = vadd.f32 0.0, %v1319
      %v1321 = vpop.f32.mrb[0].mxu0
      %v1322 = vpop.f32.mrb[0].mxu0
      %v1323 = vpop.f32.mrb[0].mxu0
      %1324 = vdwg.mxu0
      %v1325 = vadd.f32 %v1197, %v1279
      %v1326 = vadd.f32 %v1198, %v1281
      %v1327 = vadd.f32 %v1199, %v1320
      %v1328 = vld [vmem:[%s1] sm:$0xff]
      %1330 = vset.pattern.permute.xlu0 0
      %1331 = vperm.xlu0 %1330, %v1328
      %v1332 = vpop.permute.xlu0 %1331
      %v1334 = vmul.f32 %v1325, %v1332
      %v1335 = vmul.f32 %v1326, %v1332
      %v1336 = vmul.f32 %v1327, %v1332
      %v1337 = vld [vmem:[%s2] sm:$0xff]
      %1339 = vset.pattern.permute.xlu0 0
      %1340 = vperm.xlu0 %1339, %v1337
      %v1341 = vpop.permute.xlu0 %1340
      %v1343 = vadd.f32 %v1334, %v1341
      %v1344 = vadd.f32 %v1335, %v1341
      %v1345 = vadd.f32 %v1336, %v1341
      %vm1346 = vcmp.gt.f32.partialorder %v1343, 0.0
      %vm1347 = vcmp.gt.f32.partialorder %v1344, 0.0
      %vm1348 = vcmp.gt.f32.partialorder %v1345, 0.0
      %v1349 = vmin.f32 %v1343, 0.0
      %v1350 = vmin.f32 %v1344, 0.0
      %v1351 = vmin.f32 %v1345, 0.0
      %v1352 = vmul.f32 %v1349, 1.442695
      %v1353 = vpow.pop %v1352
      %v1354 = vmul.f32 %v1350, 1.442695
      %v1355 = vpow.pop %v1354
      %v1356 = vmul.f32 %v1351, 1.442695
      %v1357 = vpow.pop %v1356
      %v1358 = vsub.f32 %v1353, 1.0
      %v1359 = vsub.f32 %v1355, 1.0
      %v1360 = vsub.f32 %v1357, 1.0
      %v1361 = vsel %vm1346, %v1343, %v1358
      %v1362 = vsel %vm1347, %v1344, %v1359
      %v1363 = vsel %vm1348, %v1345, %v1360
      %1364 = vst [vmem:[%s197] sm:$0xff] %v1361
      %1365 = vst [vmem:[%s197 + $0x8] sm:$0xff] %v1362
      %1366 = vst [vmem:[%s197 + $0x10] sm:$0xff] %v1363
      %s1367 = smul.u32 3, %s15
      %p1368 = scmp.lt.s32.totalorder %s1367, 17
      %s1369 = scalar_select %p1368, %s1367, 17
      %s1370 = smul.addr %s1369, 8
      %s1371 = scalar_lea.vmem %s4, %s1370
      // Predicated region
      $region37: #{conv_block_forward.3} parent=35 // pred_check
        %p1372 = pneg %p122
      $region38: #{conv_block_forward.3} parent=35 // pred_check_branch
        %1374 = sbr.rel (%p1372) target = $region40
      $region39: #{conv_block_forward.3} parent=35 // pred_region
        %s1375 = smul.u32 3, %s15
      $region40: #{conv_block_forward.3} parent=35 // pred_fallthru
        _
    $region36: #{conv_block_forward.3} parent=5 // pred_fallthru
      _
    %p1376 = scmp.le.s32.totalorder 2, %s10
    // Predicated region
    $region41: #{conv_block_forward.3} parent=5 // pred_check
      %p1377 = pneg %p1376
    $region42: #{conv_block_forward.3} parent=5 // pred_check_branch
      %1379 = sbr.rel (%p1377) target = $region44
    $region43: #{conv_block_forward.3} parent=5 // pred_region
      %s1380 = ssub.s32 %s10, 2
      // Predicated region
      $region45: #{conv_block_forward.3} parent=43 // pred_check
        %p1381 = pneg %p128
      $region46: #{conv_block_forward.3} parent=43 // pred_check_branch
        %1383 = sbr.rel (%p1381) target = $region48
      $region47: #{conv_block_forward.3} parent=43 // pred_region
        %s1384 = smul.u32 3, %s16
        %p1385 = scmp.lt.s32.totalorder %s1384, 17
        %s1386 = scalar_select %p1385, %s1384, 17
        %s1387 = smul.addr %s1386, 8
        %s1388 = scalar_lea.vmem %s4, %s1387
      $region48: #{conv_block_forward.3} parent=43 // pred_fallthru
        _
    $region44: #{conv_block_forward.3} parent=5 // pred_fallthru
      _
  $region6: #{conv_block_forward.3} parent=0 // loop_footer
    %s14 = sadd.s32 1, %s10
  $region7: #{conv_block_forward.3} parent=0 // loop_footer_branch
    %9 = sbr.rel target = $region3
  $region8: #{conv_block_forward.3} parent=0 // loop_exit
    _

// kernel: conv_block_forward.2
$region0: #{conv_block_forward.2}
  #allocation0 [shape = 'u32[]', space=smem, size = 0x4, offset = 0x4, fixed_abs, tag = 'smem constant byte address 0x4 - core index']
  #allocation1 [shape = 'u32[144,128]{1,0:T(1,128)}', space=vmem, size = 0x12000, scoped, tag = 'internal scratch']
  #allocation2 [shape = 's32[1]{0}', space=sflag, size = 0x4, scoped, tag = 'scoped memory for conv_block_forward.2']
  #allocation3 [shape = 'u8[512]{0}', space=smem, size = 0x200, scoped, tag = 'prefetched SMEM operand 0']
  %s0 = inlined_call_operand.vmem [shape: s32[6], index: 0, kind: input, shape index: {}]
  %s1 = inlined_call_operand.vmem [shape: bf16[9,8,4], index: 1, kind: input, shape index: {}]
  %s2 = inlined_call_operand.vmem [shape: s32[1,384], index: 2, kind: input, shape index: {}]
  %s3 = inlined_call_operand.vmem [shape: bf16[6,4,640], index: 3, kind: input, shape index: {}]
  %s4 = inlined_call_operand.vmem [shape: f32[2,8,1], index: 4, kind: output, shape index: {0}]
  %s5 = inlined_call_operand.vmem [shape: f32[2,8,1], index: 5, kind: output, shape index: {1}]
  %6 = xla_tuple %s4, %s5
  %s7 = sld [smem:[#allocation0]]
  $region57: #{conv_block_forward.2} parent=0
    _
  %s9 = ssub.s32 1, %s7
  %s10 = scalar_select 0, %s9, %s7
  %s11 = sshll.u32 %s0, 4
  %s12 = int_to_ptr.vmem [resolvable:$true] %s11
  %14 = dma.vmem_to_smem %s12, 16, [#allocation3], [#allocation2]
  %15 = dma.done [#allocation2], 16
  %16 = sfence
  loop: start=0, step=1, limit=8
  $region2: #{conv_block_forward.2} parent=0 // loop_pre_header
    _
  $region3: #{conv_block_forward.2} parent=0 // loop_header
    %s18 = sphi 0, %s22
    %p19 = scmp.ge.s32.totalorder %s18, 8
    %s25 = sphi 0, %s37
    %s26 = sphi 0, %s33
    %s27 = sphi 0, %s25
    %s28 = sphi 0, %s26
    %s29 = sphi 0, %s27
    %s30 = sphi 0, %s28
    %s38 = sphi 0, %s38
    %s40 = sphi 0, %s38
    %s41 = sphi 0, %s40
    %s55 = sphi 0, %s41
    %s59 = sphi 0, %s59
    %s61 = sphi 0, %s59
    %s62 = sphi 0, %s61
    %s76 = sphi 0, %s62
    %s86 = sphi 0, %s88
    %s89 = sphi 0, %s86
    %s90 = sphi 0, %s89
    %s106 = sphi 0, %s90
    %s112 = sphi 0, %s114
    %s115 = sphi 0, %s112
    %s116 = sphi 0, %s115
    %s132 = sphi 0, %s116
    %s138 = sphi 0, %s140
    %s141 = sphi 0, %s138
    %s142 = sphi 0, %s141
    %s158 = sphi 0, %s142
  $region4: #{conv_block_forward.2} parent=0 // loop_header_branch
    %21 = sbr.rel (%p19) target = $region8
  $region5: #{conv_block_forward.2} parent=0 // loop_body
    %s23 = ssub.s32 %s18, 1
    %s24 = ssub.s32 %s18, 2
    %s31 = sadd.s32 1, %s26
    %p32 = scmp.ge.s32.totalorder %s31, 3
    %s33 = scalar_select %p32, 0, %s31
    %s34 = sadd.s32 1, %s25
    %s35 = scalar_select %p32, %s34, %s25
    %p36 = scmp.ge.s32.totalorder %s35, 2
    %s37 = scalar_select %p36, 0, %s35
    %s39 = sadd.s32 %s38, 1
    %p42 = scmp.eq.s32.totalorder %s18, 5
    %p43 = scmp.ne.s32.totalorder %s38, %s40
    %p44 = scmp.eq.s32.totalorder %s18, 0
    %p45 = por %p43, %p44
    %p46 = scmp.ne.s32.totalorder %s38, %s40
    %p47 = scmp.eq.s32.totalorder %s23, 5
    %p48 = por %p46, %p47
    %p49 = scmp.ne.s32.totalorder %s40, %s41
    %p50 = scmp.eq.s32.totalorder %s23, 0
    %p51 = por %p49, %p50
    %p52 = scmp.ne.s32.totalorder %s40, %s41
    %p53 = scmp.eq.s32.totalorder %s24, 5
    %p54 = por %p52, %p53
    %p56 = scmp.ne.s32.totalorder %s41, %s55
    %p57 = scmp.eq.s32.totalorder %s24, 0
    %p58 = por %p56, %p57
    %s60 = sadd.s32 %s59, 1
    %p63 = scmp.eq.s32.totalorder %s18, 5
    %p64 = scmp.ne.s32.totalorder %s59, %s61
    %p65 = scmp.eq.s32.totalorder %s18, 0
    %p66 = por %p64, %p65
    %p67 = scmp.ne.s32.totalorder %s59, %s61
    %p68 = scmp.eq.s32.totalorder %s23, 5
    %p69 = por %p67, %p68
    %p70 = scmp.ne.s32.totalorder %s61, %s62
    %p71 = scmp.eq.s32.totalorder %s23, 0
    %p72 = por %p70, %p71
    %p73 = scmp.ne.s32.totalorder %s61, %s62
    %p74 = scmp.eq.s32.totalorder %s24, 5
    %p75 = por %p73, %p74
    %p77 = scmp.ne.s32.totalorder %s62, %s76
    %p78 = scmp.eq.s32.totalorder %s24, 0
    %p79 = por %p77, %p78
    %s80 = smul.u32 %s25, 3
    %s81 = sadd.s32 %s80, %s26
    %s82 = smul.u32 %s37, 3
    %s83 = sadd.s32 %s82, %s33
    %s84 = ssub.s32 %s81, %s83
    %p85 = scmp.eq.s32.totalorder %s84, 0
    %s87 = sadd.s32 %s86, 1
    %s88 = scalar_select %p85, %s86, %s87
    %p91 = pneg %p85
    %p92 = scmp.eq.s32.totalorder %s18, 5
    %p93 = por %p91, %p92
    %p94 = scmp.ne.s32.totalorder %s86, %s89
    %p95 = scmp.eq.s32.totalorder %s18, 0
    %p96 = por %p94, %p95
    %p97 = scmp.ne.s32.totalorder %s86, %s89
    %p98 = scmp.eq.s32.totalorder %s23, 5
    %p99 = por %p97, %p98
    %p100 = scmp.ne.s32.totalorder %s89, %s90
    %p101 = scmp.eq.s32.totalorder %s23, 0
    %p102 = por %p100, %p101
    %p103 = scmp.ne.s32.totalorder %s89, %s90
    %p104 = scmp.eq.s32.totalorder %s24, 5
    %p105 = por %p103, %p104
    %p107 = scmp.ne.s32.totalorder %s90, %s106
    %p108 = scmp.eq.s32.totalorder %s24, 0
    %p109 = por %p107, %p108
    %s110 = ssub.s32 %s25, %s37
    %p111 = scmp.eq.s32.totalorder %s110, 0
    %s113 = sadd.s32 %s112, 1
    %s114 = scalar_select %p111, %s112, %s113
    %p117 = pneg %p111
    %p118 = scmp.eq.s32.totalorder %s18, 5
    %p119 = por %p117, %p118
    %p120 = scmp.ne.s32.totalorder %s112, %s115
    %p121 = scmp.eq.s32.totalorder %s18, 0
    %p122 = por %p120, %p121
    %p123 = scmp.ne.s32.totalorder %s112, %s115
    %p124 = scmp.eq.s32.totalorder %s23, 5
    %p125 = por %p123, %p124
    %p126 = scmp.ne.s32.totalorder %s115, %s116
    %p127 = scmp.eq.s32.totalorder %s23, 0
    %p128 = por %p126, %p127
    %p129 = scmp.ne.s32.totalorder %s115, %s116
    %p130 = scmp.eq.s32.totalorder %s24, 5
    %p131 = por %p129, %p130
    %p133 = scmp.ne.s32.totalorder %s116, %s132
    %p134 = scmp.eq.s32.totalorder %s24, 0
    %p135 = por %p133, %p134
    %s136 = ssub.s32 %s25, %s37
    %p137 = scmp.eq.s32.totalorder %s136, 0
    %s139 = sadd.s32 %s138, 1
    %s140 = scalar_select %p137, %s138, %s139
    %p143 = pneg %p137
    %p144 = scmp.eq.s32.totalorder %s18, 5
    %p145 = por %p143, %p144
    %p146 = scmp.ne.s32.totalorder %s138, %s141
    %p147 = scmp.eq.s32.totalorder %s18, 0
    %p148 = por %p146, %p147
    %p149 = scmp.ne.s32.totalorder %s138, %s141
    %p150 = scmp.eq.s32.totalorder %s23, 5
    %p151 = por %p149, %p150
    %p152 = scmp.ne.s32.totalorder %s141, %s142
    %p153 = scmp.eq.s32.totalorder %s23, 0
    %p154 = por %p152, %p153
    %p155 = scmp.ne.s32.totalorder %s141, %s142
    %p156 = scmp.eq.s32.totalorder %s24, 5
    %p157 = por %p155, %p156
    %p159 = scmp.ne.s32.totalorder %s142, %s158
    %p160 = scmp.eq.s32.totalorder %s24, 0
    %p161 = por %p159, %p160
    %p162 = scmp.le.s32.totalorder 1, %s18
    %p163 = scmp.lt.s32.totalorder %s18, 7
    %p164 = pnand %p162, %p163
    %p165 = pneg %p164
    // Predicated region
    $region9: #{conv_block_forward.2} parent=5 // pred_check
      _
    $region10: #{conv_block_forward.2} parent=5 // pred_check_branch
      %167 = sbr.rel (%p164) target = $region12
    $region11: #{conv_block_forward.2} parent=5 // pred_region
      %s168 = ssub.s32 %s18, 1
      // Predicated region
      $region13: #{conv_block_forward.2} parent=11 // pred_check
        %p169 = pneg %p51
      $region14: #{conv_block_forward.2} parent=11 // pred_check_branch
        %171 = sbr.rel (%p169) target = $region16
      $region15: #{conv_block_forward.2} parent=11 // pred_region
        _
      $region16: #{conv_block_forward.2} parent=11 // pred_fallthru
        _
      // Predicated region
      $region17: #{conv_block_forward.2} parent=11 // pred_check
        %p172 = pneg %p72
      $region18: #{conv_block_forward.2} parent=11 // pred_check_branch
        %174 = sbr.rel (%p172) target = $region20
      $region19: #{conv_block_forward.2} parent=11 // pred_region
        _
      $region20: #{conv_block_forward.2} parent=11 // pred_fallthru
        _
    $region12: #{conv_block_forward.2} parent=5 // pred_fallthru
      _
    %p175 = scmp.lt.s32.totalorder %s18, 6
    // Predicated region
    $region21: #{conv_block_forward.2} parent=5 // pred_check
      %p176 = pneg %p175
    $region22: #{conv_block_forward.2} parent=5 // pred_check_branch
      %178 = sbr.rel (%p176) target = $region24
    $region23: #{conv_block_forward.2} parent=5 // pred_region
      // Predicated region
      $region25: #{conv_block_forward.2} parent=23 // pred_check
        %p179 = pneg %p96
      $region26: #{conv_block_forward.2} parent=23 // pred_check_branch
        %181 = sbr.rel (%p179) target = $region28
      $region27: #{conv_block_forward.2} parent=23 // pred_region
        %s182 = smul.u32 %s25, 3
        %s183 = sadd.s32 %s182, %s26
        %p184 = scmp.lt.s32.totalorder %s183, 5
        %s185 = scalar_select %p184, %s183, 5
        %s186 = smul.addr %s185, 5
        %s187 = smul.addr %s186, 2
        %s188 = scalar_lea.vmem %s3, %s187
        %s189 = smul.u32 %s25, 3
        %s190 = sadd.s32 %s189, %s26
      $region28: #{conv_block_forward.2} parent=23 // pred_fallthru
        _
    $region24: #{conv_block_forward.2} parent=5 // pred_fallthru
      _
    %p191 = scmp.le.s32.totalorder 1, %s18
    %p192 = scmp.lt.s32.totalorder %s18, 7
    %p193 = pnand %p191, %p192
    %p194 = pneg %p193
    // Predicated region
    $region29: #{conv_block_forward.2} parent=5 // pred_check
      _
    $region30: #{conv_block_forward.2} parent=5 // pred_check_branch
      %196 = sbr.rel (%p193) target = $region32
    $region31: #{conv_block_forward.2} parent=5 // pred_region
      %s197 = ssub.s32 %s18, 1
      %p198 = pneg %p51
      %p199 = pneg %p48
      %p200 = pneg %p72
      %p201 = pneg %p69
      %s202 = smul.u32 %s27, 3
      %s203 = sadd.s32 %s202, %s28
      %p204 = scmp.lt.s32.totalorder %s203, 5
      %s205 = scalar_select %p204, %s203, 5
      %s206 = smul.addr %s205, 5
      %s207 = smul.addr %s206, 2
      %s208 = scalar_lea.vmem %s3, %s207
      %p209 = pneg %p102
      %p210 = pneg %p99
      %p211 = pneg %p128
      %p212 = pneg %p125
      %p213 = scmp.lt.s32.totalorder %s27, 1
      %s214 = scalar_select %p213, %s27, 1
      %s215 = smul.addr %s214, 8
      %s216 = scalar_lea.vmem %s4, %s215
      %p217 = pneg %p154
      %p218 = pneg %p151
      %p219 = scmp.lt.s32.totalorder %s27, 1
      %s220 = scalar_select %p219, %s27, 1
      %s221 = smul.addr %s220, 8
      %s222 = scalar_lea.vmem %s5, %s221
      %s223 = smul.u32 %s27, 3
      %s224 = sadd.s32 %s223, %s28
      %p225 = scmp.lt.s32.totalorder %s224, 5
      %s226 = scalar_select %p225, %s224, 5
      %s227 = smul.addr %s226, 5
      %s228 = smul.addr %s227, 2
      %s229 = scalar_lea.vmem %s3, %s228
      %s230 = smul.u32 %s27, 3
      %s231 = sadd.s32 %s230, %s28
      %p232 = scmp.lt.s32.totalorder %s27, 1
      %s233 = scalar_select %p232, %s27, 1
      %s234 = smul.addr %s233, 8
      %s235 = scalar_lea.vmem %s4, %s234
      %p236 = scmp.lt.s32.totalorder %s27, 1
      %s237 = scalar_select %p236, %s27, 1
      %s238 = smul.addr %s237, 8
      %s239 = scalar_lea.vmem %s5, %s238
      %p241 = scmp.eq.s32.totalorder %s28, 0
      // Predicated region
      $region33: #{conv_block_forward.2} parent=31 // pred_check
        %p242 = pneg %p241
      $region34: #{conv_block_forward.2} parent=31 // pred_check_branch
        %244 = sbr.rel (%p242) target = $region36
      $region35: #{conv_block_forward.2} parent=31 // pred_region
        %vm245 = vcmask 7168
        %246 = vst.msk [vmem:[%s235] sm:$0xff] %vm245, 0.0
        %247 = vst.msk [vmem:[%s239] sm:$0xff] %vm245, 0.0
      $region36: #{conv_block_forward.2} parent=31 // pred_fallthru
        _
      %v248 = vld [vmem:[%s229] sm:$0x3f]
      %v249 = vld [vmem:[%s1] sm:$0xf]
      %v250 = vld [vmem:[%s229] sm:$0xff]
      %s251 = scalar_lea.vmem %s1, 4
      %v252 = vld [vmem:[%s251] sm:$0xf]
      %v254 = vcombine.high %v250, %v250
      %v256 = vunpack.c.l.s4 1983009808
      %v257 = vunpack.c.0.s8 %v256
      %v258 = vlaneseq
      %v259 = vshrl.u32 %v258, 7
      %v260 = vsub.s32 %v257, %v259
      %v261 = vrot.slane %v250, %v260
      %v263 = vunpack.c.l.s4 1983009808
      %v264 = vunpack.c.0.s8 %v263
      %v265 = vlaneseq
      %v266 = vshrl.u32 %v265, 7
      %v267 = vsub.s32 %v264, %v266
      %v268 = vrot.slane %v254, %v267
      %v269 = vcombine.high %v261, %v261
      %v270 = vcombine.high %v268, %v268
      %271 = vrot.lane.b32.xlu0 %v261, 127
      %v272 = vpop.permute.xlu0 %271
      %273 = vrot.lane.b32.xlu0 %v269, 127
      %v274 = vpop.permute.xlu0 %273
      %275 = vrot.lane.b32.xlu0 %v268, 127
      %v276 = vpop.permute.xlu0 %275
      %277 = vrot.lane.b32.xlu0 %v270, 127
      %v278 = vpop.permute.xlu0 %277
      %vm279 = vcmask 1039360
      %v280 = vsel %vm279, %v272, %v274
      %v281 = vsel %vm279, %v274, %v276
      %v282 = vsel %vm279, %v276, %v278
      %vm283 = vcmask 31744
      %v285 = vsel %vm283, %v252, 0
      %vm287 = vcmask 1041408
      %v289 = vsel %vm287, %v280, 0
      %v292 = vsel %vm287, %v281, 0
      %v295 = vsel %vm287, %v282, 0
      %297 = vmatprep.subr.bf16.mxu0 %v292
      %298 = vmatpush1.bf16.msra.mxu0 %v289
      %299 = vmatprep.subr.bf16.mxu0 0
      %300 = vmatpush1.bf16.msra.mxu0 0
      %301 = vmatprep.subr.bf16.mxu0 0
      %302 = vmatpush1.bf16.msra.mxu0 0
      %303 = vmatprep.subr.bf16.mxu0 0
      %304 = vmatpush1.bf16.msra.mxu0 0
      %305 = vmatprep.subr.bf16.mxu0 0
      %306 = vmatpush1.bf16.msra.mxu0 0
      %307 = vmatprep.subr.bf16.mxu0 0
      %308 = vmatpush1.bf16.msra.mxu0 0
      %309 = vmatprep.subr.bf16.mxu0 0
      %310 = vmatpush1.bf16.msra.mxu0 0
      %311 = vmatprep.subr.bf16.mxu0 0
      %312 = vmatpush1.bf16.msra.mxu0 0
      %313 = vmatprep.subr.bf16.mxu0 0
      %314 = vmatpush1.bf16.msra.mxu0 0
      %315 = vmatprep.subr.bf16.mxu0 0
      %316 = vmatpush1.bf16.msra.mxu0 0
      %317 = vmatprep.subr.bf16.mxu0 0
      %318 = vmatpush1.bf16.msra.mxu0 0
      %319 = vmatprep.subr.bf16.mxu0 0
      %320 = vmatpush1.bf16.msra.mxu0 0
      %321 = vmatprep.subr.bf16.mxu0 0
      %322 = vmatpush1.bf16.msra.mxu0 0
      %323 = vmatprep.subr.bf16.mxu0 0
      %324 = vmatpush1.bf16.msra.mxu0 0
      %325 = vmatprep.subr.bf16.mxu0 0
      %326 = vmatpush1.bf16.msra.mxu0 0
      %327 = vmatprep.subr.bf16.mxu0 0
      %328 = vmatpush1.bf16.msra.mxu0 0
      %329 = vmatprep.mubr.bf16.mxu0 0
      %330 = vmatmul.mubr.bf16.gmra.mrb[0].mxu0 %v285
      %v331 = vpop.f32.mrb[0].mxu0
      %v332 = vadd.f32 0.0, %v331
      %v333 = vpop.f32.mrb[0].mxu0
      %v334 = vadd.f32 0.0, %v333
      %v335 = vpop.f32.mrb[0].mxu0
      %v336 = vpop.f32.mrb[0].mxu0
      %337 = vdwg.mxu0
      %338 = vmatprep.subr.bf16.mxu0 0
      %339 = vmatpush1.bf16.msra.mxu0 %v295
      %340 = vmatprep.subr.bf16.mxu0 0
      %341 = vmatpush1.bf16.msra.mxu0 0
      %342 = vmatprep.subr.bf16.mxu0 0
      %343 = vmatpush1.bf16.msra.mxu0 0
      %344 = vmatprep.subr.bf16.mxu0 0
      %345 = vmatpush1.bf16.msra.mxu0 0
      %346 = vmatprep.subr.bf16.mxu0 0
      %347 = vmatpush1.bf16.msra.mxu0 0
      %348 = vmatprep.subr.bf16.mxu0 0
      %349 = vmatpush1.bf16.msra.mxu0 0
      %350 = vmatprep.subr.bf16.mxu0 0
      %351 = vmatpush1.bf16.msra.mxu0 0
      %352 = vmatprep.subr.bf16.mxu0 0
      %353 = vmatpush1.bf16.msra.mxu0 0
      %354 = vmatprep.subr.bf16.mxu0 0
      %355 = vmatpush1.bf16.msra.mxu0 0
      %356 = vmatprep.subr.bf16.mxu0 0
      %357 = vmatpush1.bf16.msra.mxu0 0
      %358 = vmatprep.subr.bf16.mxu0 0
      %359 = vmatpush1.bf16.msra.mxu0 0
      %360 = vmatprep.subr.bf16.mxu0 0
      %361 = vmatpush1.bf16.msra.mxu0 0
      %362 = vmatprep.subr.bf16.mxu0 0
      %363 = vmatpush1.bf16.msra.mxu0 0
      %364 = vmatprep.subr.bf16.mxu0 0
      %365 = vmatpush1.bf16.msra.mxu0 0
      %366 = vmatprep.subr.bf16.mxu0 0
      %367 = vmatpush1.bf16.msra.mxu0 0
      %368 = vmatprep.subr.bf16.mxu0 0
      %369 = vmatpush1.bf16.msra.mxu0 0
      %370 = vmatprep.mubr.bf16.mxu0 0
      %371 = vmatmul.mubr.bf16.gmra.mrb[0].mxu0 %v285
      %v372 = vpop.f32.mrb[0].mxu0
      %v373 = vadd.f32 0.0, %v372
      %v374 = vpop.f32.mrb[0].mxu0
      %v375 = vpop.f32.mrb[0].mxu0
      %v376 = vpop.f32.mrb[0].mxu0
      %377 = vdwg.mxu0
      %v379 = vcombine.high %v248, %v248
      %v381 = vunpack.c.l.s4 1983009808
      %v382 = vunpack.c.0.s8 %v381
      %v383 = vlaneseq
      %v384 = vshrl.u32 %v383, 7
      %v385 = vsub.s32 %v382, %v384
      %v386 = vrot.slane %v248, %v385
      %v388 = vunpack.c.l.s4 1983009808
      %v389 = vunpack.c.0.s8 %v388
      %v390 = vlaneseq
      %v391 = vshrl.u32 %v390, 7
      %v392 = vsub.s32 %v389, %v391
      %v393 = vrot.slane %v379, %v392
      %v394 = vcombine.high %v386, %v386
      %v396 = vsel %vm283, %v249, 0
      %v399 = vsel %vm287, %v386, 0
      %v402 = vsel %vm287, %v394, 0
      %v405 = vsel %vm287, %v393, 0
      %407 = vmatprep.subr.bf16.mxu0 %v402
      %408 = vmatpush1.bf16.msra.mxu0 %v399
      %409 = vmatprep.subr.bf16.mxu0 0
      %410 = vmatpush1.bf16.msra.mxu0 0
      %411 = vmatprep.subr.bf16.mxu0 0
      %412 = vmatpush1.bf16.msra.mxu0 0
      %413 = vmatprep.subr.bf16.mxu0 0
      %414 = vmatpush1.bf16.msra.mxu0 0
      %415 = vmatprep.subr.bf16.mxu0 0
      %416 = vmatpush1.bf16.msra.mxu0 0
      %417 = vmatprep.subr.bf16.mxu0 0
      %418 = vmatpush1.bf16.msra.mxu0 0
      %419 = vmatprep.subr.bf16.mxu0 0
      %420 = vmatpush1.bf16.msra.mxu0 0
      %421 = vmatprep.subr.bf16.mxu0 0
      %422 = vmatpush1.bf16.msra.mxu0 0
      %423 = vmatprep.subr.bf16.mxu0 0
      %424 = vmatpush1.bf16.msra.mxu0 0
      %425 = vmatprep.subr.bf16.mxu0 0
      %426 = vmatpush1.bf16.msra.mxu0 0
      %427 = vmatprep.subr.bf16.mxu0 0
      %428 = vmatpush1.bf16.msra.mxu0 0
      %429 = vmatprep.subr.bf16.mxu0 0
      %430 = vmatpush1.bf16.msra.mxu0 0
      %431 = vmatprep.subr.bf16.mxu0 0
      %432 = vmatpush1.bf16.msra.mxu0 0
      %433 = vmatprep.subr.bf16.mxu0 0
      %434 = vmatpush1.bf16.msra.mxu0 0
      %435 = vmatprep.subr.bf16.mxu0 0
      %436 = vmatpush1.bf16.msra.mxu0 0
      %437 = vmatprep.subr.bf16.mxu0 0
      %438 = vmatpush1.bf16.msra.mxu0 0
      %439 = vmatprep.mubr.bf16.mxu0 0
      %440 = vmatmul.mubr.bf16.gmra.mrb[0].mxu0 %v396
      %v441 = vpop.f32.mrb[0].mxu0
      %v442 = vadd.f32 %v332, %v441
      %v443 = vpop.f32.mrb[0].mxu0
      %v444 = vadd.f32 %v334, %v443
      %v445 = vpop.f32.mrb[0].mxu0
      %v446 = vpop.f32.mrb[0].mxu0
      %447 = vdwg.mxu0
      %448 = vmatprep.subr.bf16.mxu0 0
      %449 = vmatpush1.bf16.msra.mxu0 %v405
      %450 = vmatprep.subr.bf16.mxu0 0
      %451 = vmatpush1.bf16.msra.mxu0 0
      %452 = vmatprep.subr.bf16.mxu0 0
      %453 = vmatpush1.bf16.msra.mxu0 0
      %454 = vmatprep.subr.bf16.mxu0 0
      %455 = vmatpush1.bf16.msra.mxu0 0
      %456 = vmatprep.subr.bf16.mxu0 0
      %457 = vmatpush1.bf16.msra.mxu0 0
      %458 = vmatprep.subr.bf16.mxu0 0
      %459 = vmatpush1.bf16.msra.mxu0 0
      %460 = vmatprep.subr.bf16.mxu0 0
      %461 = vmatpush1.bf16.msra.mxu0 0
      %462 = vmatprep.subr.bf16.mxu0 0
      %463 = vmatpush1.bf16.msra.mxu0 0
      %464 = vmatprep.subr.bf16.mxu0 0
      %465 = vmatpush1.bf16.msra.mxu0 0
      %466 = vmatprep.subr.bf16.mxu0 0
      %467 = vmatpush1.bf16.msra.mxu0 0
      %468 = vmatprep.subr.bf16.mxu0 0
      %469 = vmatpush1.bf16.msra.mxu0 0
      %470 = vmatprep.subr.bf16.mxu0 0
      %471 = vmatpush1.bf16.msra.mxu0 0
      %472 = vmatprep.subr.bf16.mxu0 0
      %473 = vmatpush1.bf16.msra.mxu0 0
      %474 = vmatprep.subr.bf16.mxu0 0
      %475 = vmatpush1.bf16.msra.mxu0 0
      %476 = vmatprep.subr.bf16.mxu0 0
      %477 = vmatpush1.bf16.msra.mxu0 0
      %478 = vmatprep.subr.bf16.mxu0 0
      %479 = vmatpush1.bf16.msra.mxu0 0
      %480 = vmatprep.mubr.bf16.mxu0 0
      %481 = vmatmul.mubr.bf16.gmra.mrb[0].mxu0 %v396
      %v482 = vpop.f32.mrb[0].mxu0
      %v483 = vadd.f32 %v373, %v482
      %v484 = vpop.f32.mrb[0].mxu0
      %v485 = vpop.f32.mrb[0].mxu0
      %v486 = vpop.f32.mrb[0].mxu0
      %487 = vdwg.mxu0
      %v488 = vld [vmem:[%s229] sm:$0xff]
      %s489 = scalar_lea.vmem %s1, 8
      %v490 = vld [vmem:[%s489] sm:$0xf]
      %v492 = vcombine.high %v488, %v488
      %v494 = vunpack.c.l.s4 1983009808
      %v495 = vunpack.c.0.s8 %v494
      %v496 = vlaneseq
      %v497 = vshrl.u32 %v496, 7
      %v498 = vsub.s32 %v495, %v497
      %v499 = vrot.slane %v488, %v498
      %v501 = vunpack.c.l.s4 1983009808
      %v502 = vunpack.c.0.s8 %v501
      %v503 = vlaneseq
      %v504 = vshrl.u32 %v503, 7
      %v505 = vsub.s32 %v502, %v504
      %v506 = vrot.slane %v492, %v505
      %v507 = vcombine.high %v499, %v499
      %v508 = vcombine.high %v506, %v506
      %509 = vrot.lane.b32.xlu0 %v499, 126
      %v510 = vpop.permute.xlu0 %509
      %511 = vrot.lane.b32.xlu0 %v507, 126
      %v512 = vpop.permute.xlu0 %511
      %513 = vrot.lane.b32.xlu0 %v506, 126
      %v514 = vpop.permute.xlu0 %513
      %515 = vrot.lane.b32.xlu0 %v508, 126
      %v516 = vpop.permute.xlu0 %515
      %vm517 = vcmask 1031168
      %v518 = vsel %vm517, %v510, %v512
      %v519 = vsel %vm517, %v512, %v514
      %v520 = vsel %vm517, %v514, %v516
      %v522 = vsel %vm283, %v490, 0
      %v525 = vsel %vm287, %v518, 0
      %v528 = vsel %vm287, %v519, 0
      %v531 = vsel %vm287, %v520, 0
      %533 = vmatprep.subr.bf16.mxu0 %v528
      %534 = vmatpush1.bf16.msra.mxu0 %v525
      %535 = vmatprep.subr.bf16.mxu0 0
      %536 = vmatpush1.bf16.msra.mxu0 0
      %537 = vmatprep.subr.bf16.mxu0 0
      %538 = vmatpush1.bf16.msra.mxu0 0
      %539 = vmatprep.subr.bf16.mxu0 0
      %540 = vmatpush1.bf16.msra.mxu0 0
      %541 = vmatprep.subr.bf16.mxu0 0
      %542 = vmatpush1.bf16.msra.mxu0 0
      %543 = vmatprep.subr.bf16.mxu0 0
      %544 = vmatpush1.bf16.msra.mxu0 0
      %545 = vmatprep.subr.bf16.mxu0 0
      %546 = vmatpush1.bf16.msra.mxu0 0
      %547 = vmatprep.subr.bf16.mxu0 0
      %548 = vmatpush1.bf16.msra.mxu0 0
      %549 = vmatprep.subr.bf16.mxu0 0
      %550 = vmatpush1.bf16.msra.mxu0 0
      %551 = vmatprep.subr.bf16.mxu0 0
      %552 = vmatpush1.bf16.msra.mxu0 0
      %553 = vmatprep.subr.bf16.mxu0 0
      %554 = vmatpush1.bf16.msra.mxu0 0
      %555 = vmatprep.subr.bf16.mxu0 0
      %556 = vmatpush1.bf16.msra.mxu0 0
      %557 = vmatprep.subr.bf16.mxu0 0
      %558 = vmatpush1.bf16.msra.mxu0 0
      %559 = vmatprep.subr.bf16.mxu0 0
      %560 = vmatpush1.bf16.msra.mxu0 0
      %561 = vmatprep.subr.bf16.mxu0 0
      %562 = vmatpush1.bf16.msra.mxu0 0
      %563 = vmatprep.subr.bf16.mxu0 0
      %564 = vmatpush1.bf16.msra.mxu0 0
      %565 = vmatprep.mubr.bf16.mxu0 0
      %566 = vmatmul.mubr.bf16.gmra.mrb[0].mxu0 %v522
      %v567 = vpop.f32.mrb[0].mxu0
      %v568 = vadd.f32 0.0, %v567
      %v569 = vpop.f32.mrb[0].mxu0
      %v570 = vadd.f32 0.0, %v569
      %v571 = vpop.f32.mrb[0].mxu0
      %v572 = vpop.f32.mrb[0].mxu0
      %573 = vdwg.mxu0
      %574 = vmatprep.subr.bf16.mxu0 0
      %575 = vmatpush1.bf16.msra.mxu0 %v531
      %576 = vmatprep.subr.bf16.mxu0 0
      %577 = vmatpush1.bf16.msra.mxu0 0
      %578 = vmatprep.subr.bf16.mxu0 0
      %579 = vmatpush1.bf16.msra.mxu0 0
      %580 = vmatprep.subr.bf16.mxu0 0
      %581 = vmatpush1.bf16.msra.mxu0 0
      %582 = vmatprep.subr.bf16.mxu0 0
      %583 = vmatpush1.bf16.msra.mxu0 0
      %584 = vmatprep.subr.bf16.mxu0 0
      %585 = vmatpush1.bf16.msra.mxu0 0
      %586 = vmatprep.subr.bf16.mxu0 0
      %587 = vmatpush1.bf16.msra.mxu0 0
      %588 = vmatprep.subr.bf16.mxu0 0
      %589 = vmatpush1.bf16.msra.mxu0 0
      %590 = vmatprep.subr.bf16.mxu0 0
      %591 = vmatpush1.bf16.msra.mxu0 0
      %592 = vmatprep.subr.bf16.mxu0 0
      %593 = vmatpush1.bf16.msra.mxu0 0
      %594 = vmatprep.subr.bf16.mxu0 0
      %595 = vmatpush1.bf16.msra.mxu0 0
      %596 = vmatprep.subr.bf16.mxu0 0
      %597 = vmatpush1.bf16.msra.mxu0 0
      %598 = vmatprep.subr.bf16.mxu0 0
      %599 = vmatpush1.bf16.msra.mxu0 0
      %600 = vmatprep.subr.bf16.mxu0 0
      %601 = vmatpush1.bf16.msra.mxu0 0
      %602 = vmatprep.subr.bf16.mxu0 0
      %603 = vmatpush1.bf16.msra.mxu0 0
      %604 = vmatprep.subr.bf16.mxu0 0
      %605 = vmatpush1.bf16.msra.mxu0 0
      %606 = vmatprep.mubr.bf16.mxu0 0
      %607 = vmatmul.mubr.bf16.gmra.mrb[0].mxu0 %v522
      %v608 = vpop.f32.mrb[0].mxu0
      %v609 = vadd.f32 0.0, %v608
      %v610 = vpop.f32.mrb[0].mxu0
      %v611 = vpop.f32.mrb[0].mxu0
      %v612 = vpop.f32.mrb[0].mxu0
      %613 = vdwg.mxu0
      %v614 = vadd.f32 %v442, %v568
      %v615 = vadd.f32 %v444, %v570
      %v616 = vadd.f32 %v483, %v609
      %v617 = vld [vmem:[%s229] sm:$0xff]
      %s618 = scalar_lea.vmem %s1, 12
      %v619 = vld [vmem:[%s618] sm:$0xf]
      %v621 = vcombine.high %v617, %v617
      %v623 = vunpack.c.l.s4 1983009808
      %v624 = vunpack.c.0.s8 %v623
      %v625 = vlaneseq
      %v626 = vshrl.u32 %v625, 7
      %v627 = vsub.s32 %v624, %v626
      %v628 = vrot.slane %v617, %v627
      %v630 = vunpack.c.l.s4 1983009808
      %v631 = vunpack.c.0.s8 %v630
      %v632 = vlaneseq
      %v633 = vshrl.u32 %v632, 7
      %v634 = vsub.s32 %v631, %v633
      %v635 = vrot.slane %v621, %v634
      %v636 = vcombine.high %v628, %v628
      %v637 = vcombine.high %v635, %v635
      %638 = vrot.lane.b32.xlu0 %v628, 64
      %v639 = vpop.permute.xlu0 %638
      %640 = vrot.lane.b32.xlu0 %v636, 64
      %v641 = vpop.permute.xlu0 %640
      %642 = vrot.lane.b32.xlu0 %v635, 64
      %v643 = vpop.permute.xlu0 %642
      %644 = vrot.lane.b32.xlu0 %v637, 64
      %v645 = vpop.permute.xlu0 %644
      %vm646 = vcmask 523264
      %v647 = vsel %vm646, %v639, %v641
      %v648 = vsel %vm646, %v641, %v643
      %v649 = vsel %vm646, %v643, %v645
      %v651 = vsel %vm283, %v619, 0
      %v654 = vsel %vm287, %v647, 0
      %v657 = vsel %vm287, %v648, 0
      %v660 = vsel %vm287, %v649, 0
      %662 = vmatprep.subr.bf16.mxu0 %v657
      %663 = vmatpush1.bf16.msra.mxu0 %v654
      %664 = vmatprep.subr.bf16.mxu0 0
      %665 = vmatpush1.bf16.msra.mxu0 0
      %666 = vmatprep.subr.bf16.mxu0 0
      %667 = vmatpush1.bf16.msra.mxu0 0
      %668 = vmatprep.subr.bf16.mxu0 0
      %669 = vmatpush1.bf16.msra.mxu0 0
      %670 = vmatprep.subr.bf16.mxu0 0
      %671 = vmatpush1.bf16.msra.mxu0 0
      %672 = vmatprep.subr.bf16.mxu0 0
      %673 = vmatpush1.bf16.msra.mxu0 0
      %674 = vmatprep.subr.bf16.mxu0 0
      %675 = vmatpush1.bf16.msra.mxu0 0
      %676 = vmatprep.subr.bf16.mxu0 0
      %677 = vmatpush1.bf16.msra.mxu0 0
      %678 = vmatprep.subr.bf16.mxu0 0
      %679 = vmatpush1.bf16.msra.mxu0 0
      %680 = vmatprep.subr.bf16.mxu0 0
      %681 = vmatpush1.bf16.msra.mxu0 0
      %682 = vmatprep.subr.bf16.mxu0 0
      %683 = vmatpush1.bf16.msra.mxu0 0
      %684 = vmatprep.subr.bf16.mxu0 0
      %685 = vmatpush1.bf16.msra.mxu0 0
      %686 = vmatprep.subr.bf16.mxu0 0
      %687 = vmatpush1.bf16.msra.mxu0 0
      %688 = vmatprep.subr.bf16.mxu0 0
      %689 = vmatpush1.bf16.msra.mxu0 0
      %690 = vmatprep.subr.bf16.mxu0 0
      %691 = vmatpush1.bf16.msra.mxu0 0
      %692 = vmatprep.subr.bf16.mxu0 0
      %693 = vmatpush1.bf16.msra.mxu0 0
      %694 = vmatprep.mubr.bf16.mxu0 0
      %695 = vmatmul.mubr.bf16.gmra.mrb[0].mxu0 %v651
      %v696 = vpop.f32.mrb[0].mxu0
      %v697 = vadd.f32 0.0, %v696
      %v698 = vpop.f32.mrb[0].mxu0
      %v699 = vadd.f32 0.0, %v698
      %v700 = vpop.f32.mrb[0].mxu0
      %v701 = vpop.f32.mrb[0].mxu0
      %702 = vdwg.mxu0
      %703 = vmatprep.subr.bf16.mxu0 0
      %704 = vmatpush1.bf16.msra.mxu0 %v660
      %705 = vmatprep.subr.bf16.mxu0 0
      %706 = vmatpush1.bf16.msra.mxu0 0
      %707 = vmatprep.subr.bf16.mxu0 0
      %708 = vmatpush1.bf16.msra.mxu0 0
      %709 = vmatprep.subr.bf16.mxu0 0
      %710 = vmatpush1.bf16.msra.mxu0 0
      %711 = vmatprep.subr.bf16.mxu0 0
      %712 = vmatpush1.bf16.msra.mxu0 0
      %713 = vmatprep.subr.bf16.mxu0 0
      %714 = vmatpush1.bf16.msra.mxu0 0
      %715 = vmatprep.subr.bf16.mxu0 0
      %716 = vmatpush1.bf16.msra.mxu0 0
      %717 = vmatprep.subr.bf16.mxu0 0
      %718 = vmatpush1.bf16.msra.mxu0 0
      %719 = vmatprep.subr.bf16.mxu0 0
      %720 = vmatpush1.bf16.msra.mxu0 0
      %721 = vmatprep.subr.bf16.mxu0 0
      %722 = vmatpush1.bf16.msra.mxu0 0
      %723 = vmatprep.subr.bf16.mxu0 0
      %724 = vmatpush1.bf16.msra.mxu0 0
      %725 = vmatprep.subr.bf16.mxu0 0
      %726 = vmatpush1.bf16.msra.mxu0 0
      %727 = vmatprep.subr.bf16.mxu0 0
      %728 = vmatpush1.bf16.msra.mxu0 0
      %729 = vmatprep.subr.bf16.mxu0 0
      %730 = vmatpush1.bf16.msra.mxu0 0
      %731 = vmatprep.subr.bf16.mxu0 0
      %732 = vmatpush1.bf16.msra.mxu0 0
      %733 = vmatprep.subr.bf16.mxu0 0
      %734 = vmatpush1.bf16.msra.mxu0 0
      %735 = vmatprep.mubr.bf16.mxu0 0
      %736 = vmatmul.mubr.bf16.gmra.mrb[0].mxu0 %v651
      %v737 = vpop.f32.mrb[0].mxu0
      %v738 = vadd.f32 0.0, %v737
      %v739 = vpop.f32.mrb[0].mxu0
      %v740 = vpop.f32.mrb[0].mxu0
      %v741 = vpop.f32.mrb[0].mxu0
      %742 = vdwg.mxu0
      %v743 = vadd.f32 %v614, %v697
      %v744 = vadd.f32 %v615, %v699
      %v745 = vadd.f32 %v616, %v738
      %v746 = vld [vmem:[%s229] sm:$0xff]
      %s747 = scalar_lea.vmem %s1, 16
      %v748 = vld [vmem:[%s747] sm:$0xf]
      %v750 = vcombine.high %v746, %v746
      %v752 = vunpack.c.l.s4 1983009808
      %v753 = vunpack.c.0.s8 %v752
      %v754 = vlaneseq
      %v755 = vshrl.u32 %v754, 7
      %v756 = vsub.s32 %v753, %v755
      %v757 = vrot.slane %v746, %v756
      %v759 = vunpack.c.l.s4 1983009808
      %v760 = vunpack.c.0.s8 %v759
      %v761 = vlaneseq
      %v762 = vshrl.u32 %v761, 7
      %v763 = vsub.s32 %v760, %v762
      %v764 = vrot.slane %v750, %v763
      %v765 = vcombine.high %v757, %v757
      %v766 = vcombine.high %v764, %v764
      %767 = vrot.lane.b32.xlu0 %v757, 63
      %v768 = vpop.permute.xlu0 %767
      %769 = vrot.lane.b32.xlu0 %v765, 63
      %v770 = vpop.permute.xlu0 %769
      %771 = vrot.lane.b32.xlu0 %v764, 63
      %v772 = vpop.permute.xlu0 %771
      %773 = vrot.lane.b32.xlu0 %v766, 63
      %v774 = vpop.permute.xlu0 %773
      %vm775 = vcmask 515072
      %v776 = vsel %vm775, %v768, %v770
      %v777 = vsel %vm775, %v770, %v772
      %v778 = vsel %vm775, %v772, %v774
      %v780 = vsel %vm283, %v748, 0
      %v783 = vsel %vm287, %v776, 0
      %v786 = vsel %vm287, %v777, 0
      %v789 = vsel %vm287, %v778, 0
      %791 = vmatprep.subr.bf16.mxu0 %v786
      %792 = vmatpush1.bf16.msra.mxu0 %v783
      %793 = vmatprep.subr.bf16.mxu0 0
      %794 = vmatpush1.bf16.msra.mxu0 0
      %795 = vmatprep.subr.bf16.mxu0 0
      %796 = vmatpush1.bf16.msra.mxu0 0
      %797 = vmatprep.subr.bf16.mxu0 0
      %798 = vmatpush1.bf16.msra.mxu0 0
      %799 = vmatprep.subr.bf16.mxu0 0
      %800 = vmatpush1.bf16.msra.mxu0 0
      %801 = vmatprep.subr.bf16.mxu0 0
      %802 = vmatpush1.bf16.msra.mxu0 0
      %803 = vmatprep.subr.bf16.mxu0 0
      %804 = vmatpush1.bf16.msra.mxu0 0
      %805 = vmatprep.subr.bf16.mxu0 0
      %806 = vmatpush1.bf16.msra.mxu0 0
      %807 = vmatprep.subr.bf16.mxu0 0
      %808 = vmatpush1.bf16.msra.mxu0 0
      %809 = vmatprep.subr.bf16.mxu0 0
      %810 = vmatpush1.bf16.msra.mxu0 0
      %811 = vmatprep.subr.bf16.mxu0 0
      %812 = vmatpush1.bf16.msra.mxu0 0
      %813 = vmatprep.subr.bf16.mxu0 0
      %814 = vmatpush1.bf16.msra.mxu0 0
      %815 = vmatprep.subr.bf16.mxu0 0
      %816 = vmatpush1.bf16.msra.mxu0 0
      %817 = vmatprep.subr.bf16.mxu0 0
      %818 = vmatpush1.bf16.msra.mxu0 0
      %819 = vmatprep.subr.bf16.mxu0 0
      %820 = vmatpush1.bf16.msra.mxu0 0
      %821 = vmatprep.subr.bf16.mxu0 0
      %822 = vmatpush1.bf16.msra.mxu0 0
      %823 = vmatprep.mubr.bf16.mxu0 0
      %824 = vmatmul.mubr.bf16.gmra.mrb[0].mxu0 %v780
      %v825 = vpop.f32.mrb[0].mxu0
      %v826 = vadd.f32 0.0, %v825
      %v827 = vpop.f32.mrb[0].mxu0
      %v828 = vadd.f32 0.0, %v827
      %v829 = vpop.f32.mrb[0].mxu0
      %v830 = vpop.f32.mrb[0].mxu0
      %831 = vdwg.mxu0
      %832 = vmatprep.subr.bf16.mxu0 0
      %833 = vmatpush1.bf16.msra.mxu0 %v789
      %834 = vmatprep.subr.bf16.mxu0 0
      %835 = vmatpush1.bf16.msra.mxu0 0
      %836 = vmatprep.subr.bf16.mxu0 0
      %837 = vmatpush1.bf16.msra.mxu0 0
      %838 = vmatprep.subr.bf16.mxu0 0
      %839 = vmatpush1.bf16.msra.mxu0 0
      %840 = vmatprep.subr.bf16.mxu0 0
      %841 = vmatpush1.bf16.msra.mxu0 0
      %842 = vmatprep.subr.bf16.mxu0 0
      %843 = vmatpush1.bf16.msra.mxu0 0
      %844 = vmatprep.subr.bf16.mxu0 0
      %845 = vmatpush1.bf16.msra.mxu0 0
      %846 = vmatprep.subr.bf16.mxu0 0
      %847 = vmatpush1.bf16.msra.mxu0 0
      %848 = vmatprep.subr.bf16.mxu0 0
      %849 = vmatpush1.bf16.msra.mxu0 0
      %850 = vmatprep.subr.bf16.mxu0 0
      %851 = vmatpush1.bf16.msra.mxu0 0
      %852 = vmatprep.subr.bf16.mxu0 0
      %853 = vmatpush1.bf16.msra.mxu0 0
      %854 = vmatprep.subr.bf16.mxu0 0
      %855 = vmatpush1.bf16.msra.mxu0 0
      %856 = vmatprep.subr.bf16.mxu0 0
      %857 = vmatpush1.bf16.msra.mxu0 0
      %858 = vmatprep.subr.bf16.mxu0 0
      %859 = vmatpush1.bf16.msra.mxu0 0
      %860 = vmatprep.subr.bf16.mxu0 0
      %861 = vmatpush1.bf16.msra.mxu0 0
      %862 = vmatprep.subr.bf16.mxu0 0
      %863 = vmatpush1.bf16.msra.mxu0 0
      %864 = vmatprep.mubr.bf16.mxu0 0
      %865 = vmatmul.mubr.bf16.gmra.mrb[0].mxu0 %v780
      %v866 = vpop.f32.mrb[0].mxu0
      %v867 = vadd.f32 0.0, %v866
      %v868 = vpop.f32.mrb[0].mxu0
      %v869 = vpop.f32.mrb[0].mxu0
      %v870 = vpop.f32.mrb[0].mxu0
      %871 = vdwg.mxu0
      %v872 = vadd.f32 %v743, %v826
      %v873 = vadd.f32 %v744, %v828
      %v874 = vadd.f32 %v745, %v867
      %v875 = vld [vmem:[%s229] sm:$0xff]
      %s876 = scalar_lea.vmem %s1, 20
      %v877 = vld [vmem:[%s876] sm:$0xf]
      %v879 = vcombine.high %v875, %v875
      %v881 = vunpack.c.l.s4 1983009808
      %v882 = vunpack.c.0.s8 %v881
      %v883 = vlaneseq
      %v884 = vshrl.u32 %v883, 7
      %v885 = vsub.s32 %v882, %v884
      %v886 = vrot.slane %v875, %v885
      %v888 = vunpack.c.l.s4 1983009808
      %v889 = vunpack.c.0.s8 %v888
      %v890 = vlaneseq
      %v891 = vshrl.u32 %v890, 7
      %v892 = vsub.s32 %v889, %v891
      %v893 = vrot.slane %v879, %v892
      %v894 = vcombine.high %v886, %v886
      %v895 = vcombine.high %v893, %v893
      %896 = vrot.lane.b32.xlu0 %v886, 62
      %v897 = vpop.permute.xlu0 %896
      %898 = vrot.lane.b32.xlu0 %v894, 62
      %v899 = vpop.permute.xlu0 %898
      %900 = vrot.lane.b32.xlu0 %v893, 62
      %v901 = vpop.permute.xlu0 %900
      %902 = vrot.lane.b32.xlu0 %v895, 62
      %v903 = vpop.permute.xlu0 %902
      %vm904 = vcmask 506880
      %v905 = vsel %vm904, %v897, %v899
      %v906 = vsel %vm904, %v899, %v901
      %v907 = vsel %vm904, %v901, %v903
      %v909 = vsel %vm283, %v877, 0
      %v912 = vsel %vm287, %v905, 0
      %v915 = vsel %vm287, %v906, 0
      %v918 = vsel %vm287, %v907, 0
      %920 = vmatprep.subr.bf16.mxu0 %v915
      %921 = vmatpush1.bf16.msra.mxu0 %v912
      %922 = vmatprep.subr.bf16.mxu0 0
      %923 = vmatpush1.bf16.msra.mxu0 0
      %924 = vmatprep.subr.bf16.mxu0 0
      %925 = vmatpush1.bf16.msra.mxu0 0
      %926 = vmatprep.subr.bf16.mxu0 0
      %927 = vmatpush1.bf16.msra.mxu0 0
      %928 = vmatprep.subr.bf16.mxu0 0
      %929 = vmatpush1.bf16.msra.mxu0 0
      %930 = vmatprep.subr.bf16.mxu0 0
      %931 = vmatpush1.bf16.msra.mxu0 0
      %932 = vmatprep.subr.bf16.mxu0 0
      %933 = vmatpush1.bf16.msra.mxu0 0
      %934 = vmatprep.subr.bf16.mxu0 0
      %935 = vmatpush1.bf16.msra.mxu0 0
      %936 = vmatprep.subr.bf16.mxu0 0
      %937 = vmatpush1.bf16.msra.mxu0 0
      %938 = vmatprep.subr.bf16.mxu0 0
      %939 = vmatpush1.bf16.msra.mxu0 0
      %940 = vmatprep.subr.bf16.mxu0 0
      %941 = vmatpush1.bf16.msra.mxu0 0
      %942 = vmatprep.subr.bf16.mxu0 0
      %943 = vmatpush1.bf16.msra.mxu0 0
      %944 = vmatprep.subr.bf16.mxu0 0
      %945 = vmatpush1.bf16.msra.mxu0 0
      %946 = vmatprep.subr.bf16.mxu0 0
      %947 = vmatpush1.bf16.msra.mxu0 0
      %948 = vmatprep.subr.bf16.mxu0 0
      %949 = vmatpush1.bf16.msra.mxu0 0
      %950 = vmatprep.subr.bf16.mxu0 0
      %951 = vmatpush1.bf16.msra.mxu0 0
      %952 = vmatprep.mubr.bf16.mxu0 0
      %953 = vmatmul.mubr.bf16.gmra.mrb[0].mxu0 %v909
      %v954 = vpop.f32.mrb[0].mxu0
      %v955 = vadd.f32 0.0, %v954
      %v956 = vpop.f32.mrb[0].mxu0
      %v957 = vadd.f32 0.0, %v956
      %v958 = vpop.f32.mrb[0].mxu0
      %v959 = vpop.f32.mrb[0].mxu0
      %960 = vdwg.mxu0
      %961 = vmatprep.subr.bf16.mxu0 0
      %962 = vmatpush1.bf16.msra.mxu0 %v918
      %963 = vmatprep.subr.bf16.mxu0 0
      %964 = vmatpush1.bf16.msra.mxu0 0
      %965 = vmatprep.subr.bf16.mxu0 0
      %966 = vmatpush1.bf16.msra.mxu0 0
      %967 = vmatprep.subr.bf16.mxu0 0
      %968 = vmatpush1.bf16.msra.mxu0 0
      %969 = vmatprep.subr.bf16.mxu0 0
      %970 = vmatpush1.bf16.msra.mxu0 0
      %971 = vmatprep.subr.bf16.mxu0 0
      %972 = vmatpush1.bf16.msra.mxu0 0
      %973 = vmatprep.subr.bf16.mxu0 0
      %974 = vmatpush1.bf16.msra.mxu0 0
      %975 = vmatprep.subr.bf16.mxu0 0
      %976 = vmatpush1.bf16.msra.mxu0 0
      %977 = vmatprep.subr.bf16.mxu0 0
      %978 = vmatpush1.bf16.msra.mxu0 0
      %979 = vmatprep.subr.bf16.mxu0 0
      %980 = vmatpush1.bf16.msra.mxu0 0
      %981 = vmatprep.subr.bf16.mxu0 0
      %982 = vmatpush1.bf16.msra.mxu0 0
      %983 = vmatprep.subr.bf16.mxu0 0
      %984 = vmatpush1.bf16.msra.mxu0 0
      %985 = vmatprep.subr.bf16.mxu0 0
      %986 = vmatpush1.bf16.msra.mxu0 0
      %987 = vmatprep.subr.bf16.mxu0 0
      %988 = vmatpush1.bf16.msra.mxu0 0
      %989 = vmatprep.subr.bf16.mxu0 0
      %990 = vmatpush1.bf16.msra.mxu0 0
      %991 = vmatprep.subr.bf16.mxu0 0
      %992 = vmatpush1.bf16.msra.mxu0 0
      %993 = vmatprep.mubr.bf16.mxu0 0
      %994 = vmatmul.mubr.bf16.gmra.mrb[0].mxu0 %v909
      %v995 = vpop.f32.mrb[0].mxu0
      %v996 = vadd.f32 0.0, %v995
      %v997 = vpop.f32.mrb[0].mxu0
      %v998 = vpop.f32.mrb[0].mxu0
      %v999 = vpop.f32.mrb[0].mxu0
      %1000 = vdwg.mxu0
      %v1001 = vadd.f32 %v872, %v955
      %v1002 = vadd.f32 %v873, %v957
      %v1003 = vadd.f32 %v874, %v996
      %v1004 = vld [vmem:[%s229 + $0x2] sm:$0x3f]
      %s1005 = scalar_lea.vmem %s1, 24
      %v1006 = vld [vmem:[%s1005] sm:$0xf]
      %v1008 = vcombine.high %v1004, %v1004
      %v1010 = vunpack.c.l.s4 1983009808
      %v1011 = vunpack.c.0.s8 %v1010
      %v1012 = vlaneseq
      %v1013 = vshrl.u32 %v1012, 7
      %v1014 = vsub.s32 %v1011, %v1013
      %v1015 = vrot.slane %v1004, %v1014
      %v1017 = vunpack.c.l.s4 1983009808
      %v1018 = vunpack.c.0.s8 %v1017
      %v1019 = vlaneseq
      %v1020 = vshrl.u32 %v1019, 7
      %v1021 = vsub.s32 %v1018, %v1020
      %v1022 = vrot.slane %v1008, %v1021
      %v1023 = vcombine.high %v1015, %v1015
      %v1025 = vsel %vm283, %v1006, 0
      %v1028 = vsel %vm287, %v1015, 0
      %v1031 = vsel %vm287, %v1023, 0
      %v1034 = vsel %vm287, %v1022, 0
      %1036 = vmatprep.subr.bf16.mxu0 %v1031
      %1037 = vmatpush1.bf16.msra.mxu0 %v1028
      %1038 = vmatprep.subr.bf16.mxu0 0
      %1039 = vmatpush1.bf16.msra.mxu0 0
      %1040 = vmatprep.subr.bf16.mxu0 0
      %1041 = vmatpush1.bf16.msra.mxu0 0
      %1042 = vmatprep.subr.bf16.mxu0 0
      %1043 = vmatpush1.bf16.msra.mxu0 0
      %1044 = vmatprep.subr.bf16.mxu0 0
      %1045 = vmatpush1.bf16.msra.mxu0 0
      %1046 = vmatprep.subr.bf16.mxu0 0
      %1047 = vmatpush1.bf16.msra.mxu0 0
      %1048 = vmatprep.subr.bf16.mxu0 0
      %1049 = vmatpush1.bf16.msra.mxu0 0
      %1050 = vmatprep.subr.bf16.mxu0 0
      %1051 = vmatpush1.bf16.msra.mxu0 0
      %1052 = vmatprep.subr.bf16.mxu0 0
      %1053 = vmatpush1.bf16.msra.mxu0 0
      %1054 = vmatprep.subr.bf16.mxu0 0
      %1055 = vmatpush1.bf16.msra.mxu0 0
      %1056 = vmatprep.subr.bf16.mxu0 0
      %1057 = vmatpush1.bf16.msra.mxu0 0
      %1058 = vmatprep.subr.bf16.mxu0 0
      %1059 = vmatpush1.bf16.msra.mxu0 0
      %1060 = vmatprep.subr.bf16.mxu0 0
      %1061 = vmatpush1.bf16.msra.mxu0 0
      %1062 = vmatprep.subr.bf16.mxu0 0
      %1063 = vmatpush1.bf16.msra.mxu0 0
      %1064 = vmatprep.subr.bf16.mxu0 0
      %1065 = vmatpush1.bf16.msra.mxu0 0
      %1066 = vmatprep.subr.bf16.mxu0 0
      %1067 = vmatpush1.bf16.msra.mxu0 0
      %1068 = vmatprep.mubr.bf16.mxu0 0
      %1069 = vmatmul.mubr.bf16.gmra.mrb[0].mxu0 %v1025
      %v1070 = vpop.f32.mrb[0].mxu0
      %v1071 = vadd.f32 0.0, %v1070
      %v1072 = vpop.f32.mrb[0].mxu0
      %v1073 = vadd.f32 0.0, %v1072
      %v1074 = vpop.f32.mrb[0].mxu0
      %v1075 = vpop.f32.mrb[0].mxu0
      %1076 = vdwg.mxu0
      %1077 = vmatprep.subr.bf16.mxu0 0
      %1078 = vmatpush1.bf16.msra.mxu0 %v1034
      %1079 = vmatprep.subr.bf16.mxu0 0
      %1080 = vmatpush1.bf16.msra.mxu0 0
      %1081 = vmatprep.subr.bf16.mxu0 0
      %1082 = vmatpush1.bf16.msra.mxu0 0
      %1083 = vmatprep.subr.bf16.mxu0 0
      %1084 = vmatpush1.bf16.msra.mxu0 0
      %1085 = vmatprep.subr.bf16.mxu0 0
      %1086 = vmatpush1.bf16.msra.mxu0 0
      %1087 = vmatprep.subr.bf16.mxu0 0
      %1088 = vmatpush1.bf16.msra.mxu0 0
      %1089 = vmatprep.subr.bf16.mxu0 0
      %1090 = vmatpush1.bf16.msra.mxu0 0
      %1091 = vmatprep.subr.bf16.mxu0 0
      %1092 = vmatpush1.bf16.msra.mxu0 0
      %1093 = vmatprep.subr.bf16.mxu0 0
      %1094 = vmatpush1.bf16.msra.mxu0 0
      %1095 = vmatprep.subr.bf16.mxu0 0
      %1096 = vmatpush1.bf16.msra.mxu0 0
      %1097 = vmatprep.subr.bf16.mxu0 0
      %1098 = vmatpush1.bf16.msra.mxu0 0
      %1099 = vmatprep.subr.bf16.mxu0 0
      %1100 = vmatpush1.bf16.msra.mxu0 0
      %1101 = vmatprep.subr.bf16.mxu0 0
      %1102 = vmatpush1.bf16.msra.mxu0 0
      %1103 = vmatprep.subr.bf16.mxu0 0
      %1104 = vmatpush1.bf16.msra.mxu0 0
      %1105 = vmatprep.subr.bf16.mxu0 0
      %1106 = vmatpush1.bf16.msra.mxu0 0
      %1107 = vmatprep.subr.bf16.mxu0 0
      %1108 = vmatpush1.bf16.msra.mxu0 0
      %1109 = vmatprep.mubr.bf16.mxu0 0
      %1110 = vmatmul.mubr.bf16.gmra.mrb[0].mxu0 %v1025
      %v1111 = vpop.f32.mrb[0].mxu0
      %v1112 = vadd.f32 0.0, %v1111
      %v1113 = vpop.f32.mrb[0].mxu0
      %v1114 = vpop.f32.mrb[0].mxu0
      %v1115 = vpop.f32.mrb[0].mxu0
      %1116 = vdwg.mxu0
      %v1117 = vadd.f32 %v1001, %v1071
      %v1118 = vadd.f32 %v1002, %v1073
      %v1119 = vadd.f32 %v1003, %v1112
      %v1120 = vld [vmem:[%s229 + $0x2] sm:$0xff]
      %s1121 = scalar_lea.vmem %s1, 28
      %v1122 = vld [vmem:[%s1121] sm:$0xf]
      %v1124 = vcombine.high %v1120, %v1120
      %v1126 = vunpack.c.l.s4 1983009808
      %v1127 = vunpack.c.0.s8 %v1126
      %v1128 = vlaneseq
      %v1129 = vshrl.u32 %v1128, 7
      %v1130 = vsub.s32 %v1127, %v1129
      %v1131 = vrot.slane %v1120, %v1130
      %v1133 = vunpack.c.l.s4 1983009808
      %v1134 = vunpack.c.0.s8 %v1133
      %v1135 = vlaneseq
      %v1136 = vshrl.u32 %v1135, 7
      %v1137 = vsub.s32 %v1134, %v1136
      %v1138 = vrot.slane %v1124, %v1137
      %v1139 = vcombine.high %v1131, %v1131
      %v1140 = vcombine.high %v1138, %v1138
      %1141 = vrot.lane.b32.xlu0 %v1131, 127
      %v1142 = vpop.permute.xlu0 %1141
      %1143 = vrot.lane.b32.xlu0 %v1139, 127
      %v1144 = vpop.permute.xlu0 %1143
      %1145 = vrot.lane.b32.xlu0 %v1138, 127
      %v1146 = vpop.permute.xlu0 %1145
      %1147 = vrot.lane.b32.xlu0 %v1140, 127
      %v1148 = vpop.permute.xlu0 %1147
      %v1149 = vsel %vm279, %v1142, %v1144
      %v1150 = vsel %vm279, %v1144, %v1146
      %v1151 = vsel %vm279, %v1146, %v1148
      %v1153 = vsel %vm283, %v1122, 0
      %v1156 = vsel %vm287, %v1149, 0
      %v1159 = vsel %vm287, %v1150, 0
      %v1162 = vsel %vm287, %v1151, 0
      %1164 = vmatprep.subr.bf16.mxu0 %v1159
      %1165 = vmatpush1.bf16.msra.mxu0 %v1156
      %1166 = vmatprep.subr.bf16.mxu0 0
      %1167 = vmatpush1.bf16.msra.mxu0 0
      %1168 = vmatprep.subr.bf16.mxu0 0
      %1169 = vmatpush1.bf16.msra.mxu0 0
      %1170 = vmatprep.subr.bf16.mxu0 0
      %1171 = vmatpush1.bf16.msra.mxu0 0
      %1172 = vmatprep.subr.bf16.mxu0 0
      %1173 = vmatpush1.bf16.msra.mxu0 0
      %1174 = vmatprep.subr.bf16.mxu0 0
      %1175 = vmatpush1.bf16.msra.mxu0 0
      %1176 = vmatprep.subr.bf16.mxu0 0
      %1177 = vmatpush1.bf16.msra.mxu0 0
      %1178 = vmatprep.subr.bf16.mxu0 0
      %1179 = vmatpush1.bf16.msra.mxu0 0
      %1180 = vmatprep.subr.bf16.mxu0 0
      %1181 = vmatpush1.bf16.msra.mxu0 0
      %1182 = vmatprep.subr.bf16.mxu0 0
      %1183 = vmatpush1.bf16.msra.mxu0 0
      %1184 = vmatprep.subr.bf16.mxu0 0
      %1185 = vmatpush1.bf16.msra.mxu0 0
      %1186 = vmatprep.subr.bf16.mxu0 0
      %1187 = vmatpush1.bf16.msra.mxu0 0
      %1188 = vmatprep.subr.bf16.mxu0 0
      %1189 = vmatpush1.bf16.msra.mxu0 0
      %1190 = vmatprep.subr.bf16.mxu0 0
      %1191 = vmatpush1.bf16.msra.mxu0 0
      %1192 = vmatprep.subr.bf16.mxu0 0
      %1193 = vmatpush1.bf16.msra.mxu0 0
      %1194 = vmatprep.subr.bf16.mxu0 0
      %1195 = vmatpush1.bf16.msra.mxu0 0
      %1196 = vmatprep.mubr.bf16.mxu0 0
      %1197 = vmatmul.mubr.bf16.gmra.mrb[0].mxu0 %v1153
      %v1198 = vpop.f32.mrb[0].mxu0
      %v1199 = vadd.f32 0.0, %v1198
      %v1200 = vpop.f32.mrb[0].mxu0
      %v1201 = vadd.f32 0.0, %v1200
      %v1202 = vpop.f32.mrb[0].mxu0
      %v1203 = vpop.f32.mrb[0].mxu0
      %1204 = vdwg.mxu0
      %1205 = vmatprep.subr.bf16.mxu0 0
      %1206 = vmatpush1.bf16.msra.mxu0 %v1162
      %1207 = vmatprep.subr.bf16.mxu0 0
      %1208 = vmatpush1.bf16.msra.mxu0 0
      %1209 = vmatprep.subr.bf16.mxu0 0
      %1210 = vmatpush1.bf16.msra.mxu0 0
      %1211 = vmatprep.subr.bf16.mxu0 0
      %1212 = vmatpush1.bf16.msra.mxu0 0
      %1213 = vmatprep.subr.bf16.mxu0 0
      %1214 = vmatpush1.bf16.msra.mxu0 0
      %1215 = vmatprep.subr.bf16.mxu0 0
      %1216 = vmatpush1.bf16.msra.mxu0 0
      %1217 = vmatprep.subr.bf16.mxu0 0
      %1218 = vmatpush1.bf16.msra.mxu0 0
      %1219 = vmatprep.subr.bf16.mxu0 0
      %1220 = vmatpush1.bf16.msra.mxu0 0
      %1221 = vmatprep.subr.bf16.mxu0 0
      %1222 = vmatpush1.bf16.msra.mxu0 0
      %1223 = vmatprep.subr.bf16.mxu0 0
      %1224 = vmatpush1.bf16.msra.mxu0 0
      %1225 = vmatprep.subr.bf16.mxu0 0
      %1226 = vmatpush1.bf16.msra.mxu0 0
      %1227 = vmatprep.subr.bf16.mxu0 0
      %1228 = vmatpush1.bf16.msra.mxu0 0
      %1229 = vmatprep.subr.bf16.mxu0 0
      %1230 = vmatpush1.bf16.msra.mxu0 0
      %1231 = vmatprep.subr.bf16.mxu0 0
      %1232 = vmatpush1.bf16.msra.mxu0 0
      %1233 = vmatprep.subr.bf16.mxu0 0
      %1234 = vmatpush1.bf16.msra.mxu0 0
      %1235 = vmatprep.subr.bf16.mxu0 0
      %1236 = vmatpush1.bf16.msra.mxu0 0
      %1237 = vmatprep.mubr.bf16.mxu0 0
      %1238 = vmatmul.mubr.bf16.gmra.mrb[0].mxu0 %v1153
      %v1239 = vpop.f32.mrb[0].mxu0
      %v1240 = vadd.f32 0.0, %v1239
      %v1241 = vpop.f32.mrb[0].mxu0
      %v1242 = vpop.f32.mrb[0].mxu0
      %v1243 = vpop.f32.mrb[0].mxu0
      %1244 = vdwg.mxu0
      %v1245 = vadd.f32 %v1117, %v1199
      %v1246 = vadd.f32 %v1118, %v1201
      %v1247 = vadd.f32 %v1119, %v1240
      %v1248 = vld [vmem:[%s229 + $0x2] sm:$0xff]
      %s1249 = scalar_lea.vmem %s1, 32
      %v1250 = vld [vmem:[%s1249] sm:$0xf]
      %v1252 = vcombine.high %v1248, %v1248
      %v1254 = vunpack.c.l.s4 1983009808
      %v1255 = vunpack.c.0.s8 %v1254
      %v1256 = vlaneseq
      %v1257 = vshrl.u32 %v1256, 7
      %v1258 = vsub.s32 %v1255, %v1257
      %v1259 = vrot.slane %v1248, %v1258
      %v1261 = vunpack.c.l.s4 1983009808
      %v1262 = vunpack.c.0.s8 %v1261
      %v1263 = vlaneseq
      %v1264 = vshrl.u32 %v1263, 7
      %v1265 = vsub.s32 %v1262, %v1264
      %v1266 = vrot.slane %v1252, %v1265
      %v1267 = vcombine.high %v1259, %v1259
      %v1268 = vcombine.high %v1266, %v1266
      %1269 = vrot.lane.b32.xlu0 %v1259, 126
      %v1270 = vpop.permute.xlu0 %1269
      %1271 = vrot.lane.b32.xlu0 %v1267, 126
      %v1272 = vpop.permute.xlu0 %1271
      %1273 = vrot.lane.b32.xlu0 %v1266, 126
      %v1274 = vpop.permute.xlu0 %1273
      %1275 = vrot.lane.b32.xlu0 %v1268, 126
      %v1276 = vpop.permute.xlu0 %1275
      %v1277 = vsel %vm517, %v1270, %v1272
      %v1278 = vsel %vm517, %v1272, %v1274
      %v1279 = vsel %vm517, %v1274, %v1276
      %v1281 = vsel %vm283, %v1250, 0
      %v1284 = vsel %vm287, %v1277, 0
      %v1287 = vsel %vm287, %v1278, 0
      %v1290 = vsel %vm287, %v1279, 0
      %1292 = vmatprep.subr.bf16.mxu0 %v1287
      %1293 = vmatpush1.bf16.msra.mxu0 %v1284
      %1294 = vmatprep.subr.bf16.mxu0 0
      %1295 = vmatpush1.bf16.msra.mxu0 0
      %1296 = vmatprep.subr.bf16.mxu0 0
      %1297 = vmatpush1.bf16.msra.mxu0 0
      %1298 = vmatprep.subr.bf16.mxu0 0
      %1299 = vmatpush1.bf16.msra.mxu0 0
      %1300 = vmatprep.subr.bf16.mxu0 0
      %1301 = vmatpush1.bf16.msra.mxu0 0
      %1302 = vmatprep.subr.bf16.mxu0 0
      %1303 = vmatpush1.bf16.msra.mxu0 0
      %1304 = vmatprep.subr.bf16.mxu0 0
      %1305 = vmatpush1.bf16.msra.mxu0 0
      %1306 = vmatprep.subr.bf16.mxu0 0
      %1307 = vmatpush1.bf16.msra.mxu0 0
      %1308 = vmatprep.subr.bf16.mxu0 0
      %1309 = vmatpush1.bf16.msra.mxu0 0
      %1310 = vmatprep.subr.bf16.mxu0 0
      %1311 = vmatpush1.bf16.msra.mxu0 0
      %1312 = vmatprep.subr.bf16.mxu0 0
      %1313 = vmatpush1.bf16.msra.mxu0 0
      %1314 = vmatprep.subr.bf16.mxu0 0
      %1315 = vmatpush1.bf16.msra.mxu0 0
      %1316 = vmatprep.subr.bf16.mxu0 0
      %1317 = vmatpush1.bf16.msra.mxu0 0
      %1318 = vmatprep.subr.bf16.mxu0 0
      %1319 = vmatpush1.bf16.msra.mxu0 0
      %1320 = vmatprep.subr.bf16.mxu0 0
      %1321 = vmatpush1.bf16.msra.mxu0 0
      %1322 = vmatprep.subr.bf16.mxu0 0
      %1323 = vmatpush1.bf16.msra.mxu0 0
      %1324 = vmatprep.mubr.bf16.mxu0 0
      %1325 = vmatmul.mubr.bf16.gmra.mrb[0].mxu0 %v1281
      %v1326 = vpop.f32.mrb[0].mxu0
      %v1327 = vadd.f32 0.0, %v1326
      %v1328 = vpop.f32.mrb[0].mxu0
      %v1329 = vadd.f32 0.0, %v1328
      %v1330 = vpop.f32.mrb[0].mxu0
      %v1331 = vpop.f32.mrb[0].mxu0
      %1332 = vdwg.mxu0
      %1333 = vmatprep.subr.bf16.mxu0 0
      %1334 = vmatpush1.bf16.msra.mxu0 %v1290
      %1335 = vmatprep.subr.bf16.mxu0 0
      %1336 = vmatpush1.bf16.msra.mxu0 0
      %1337 = vmatprep.subr.bf16.mxu0 0
      %1338 = vmatpush1.bf16.msra.mxu0 0
      %1339 = vmatprep.subr.bf16.mxu0 0
      %1340 = vmatpush1.bf16.msra.mxu0 0
      %1341 = vmatprep.subr.bf16.mxu0 0
      %1342 = vmatpush1.bf16.msra.mxu0 0
      %1343 = vmatprep.subr.bf16.mxu0 0
      %1344 = vmatpush1.bf16.msra.mxu0 0
      %1345 = vmatprep.subr.bf16.mxu0 0
      %1346 = vmatpush1.bf16.msra.mxu0 0
      %1347 = vmatprep.subr.bf16.mxu0 0
      %1348 = vmatpush1.bf16.msra.mxu0 0
      %1349 = vmatprep.subr.bf16.mxu0 0
      %1350 = vmatpush1.bf16.msra.mxu0 0
      %1351 = vmatprep.subr.bf16.mxu0 0
      %1352 = vmatpush1.bf16.msra.mxu0 0
      %1353 = vmatprep.subr.bf16.mxu0 0
      %1354 = vmatpush1.bf16.msra.mxu0 0
      %1355 = vmatprep.subr.bf16.mxu0 0
      %1356 = vmatpush1.bf16.msra.mxu0 0
      %1357 = vmatprep.subr.bf16.mxu0 0
      %1358 = vmatpush1.bf16.msra.mxu0 0
      %1359 = vmatprep.subr.bf16.mxu0 0
      %1360 = vmatpush1.bf16.msra.mxu0 0
      %1361 = vmatprep.subr.bf16.mxu0 0
      %1362 = vmatpush1.bf16.msra.mxu0 0
      %1363 = vmatprep.subr.bf16.mxu0 0
      %1364 = vmatpush1.bf16.msra.mxu0 0
      %1365 = vmatprep.mubr.bf16.mxu0 0
      %1366 = vmatmul.mubr.bf16.gmra.mrb[0].mxu0 %v1281
      %v1367 = vpop.f32.mrb[0].mxu0
      %v1368 = vadd.f32 0.0, %v1367
      %v1369 = vpop.f32.mrb[0].mxu0
      %v1370 = vpop.f32.mrb[0].mxu0
      %v1371 = vpop.f32.mrb[0].mxu0
      %1372 = vdwg.mxu0
      %v1373 = vadd.f32 %v1245, %v1327
      %v1374 = vadd.f32 %v1246, %v1329
      %v1375 = vadd.f32 %v1247, %v1368
      %s1376 = smul.u32 %s27, 3
      %s1377 = sadd.s32 %s1376, %s28
      %s1378 = sld [smem:[#allocation3 + %s1377]]
      %v1379 = vld [vmem:[%s2] sm:$0x7]
      %v1380 = vstv %s1378
      %vm1381 = vcmp.lt.s32.totalorder %v1379, %v1380
      %v1382 = vsel %vm1381, 1, 0
      %v1383 = vlaneseq
      %v1384 = vshrl.u32 %v1383, 7
      %v1385 = vsub.s32 0, %v1384
      %v1386 = vrot.slane %v1382, %v1385
      %v1387 = vlaneseq
      %v1388 = vshrl.u32 %v1387, 7
      %v1389 = vsub.s32 1, %v1388
      %v1390 = vrot.slane %v1382, %v1389
      %v1391 = vlaneseq
      %v1392 = vshrl.u32 %v1391, 7
      %v1393 = vsub.s32 2, %v1392
      %v1394 = vrot.slane %v1382, %v1393
      %vm1395 = vcmp.eq.s32.totalorder %v1386, 1
      %vm1396 = vcmp.eq.s32.totalorder %v1390, 1
      %vm1397 = vcmp.eq.s32.totalorder %v1394, 1
      %v1398 = vsel %vm1395, %v1373, 0.0
      %v1399 = vsel %vm1396, %v1374, 0.0
      %v1400 = vsel %vm1397, %v1375, 0.0
      %v1401 = vld [vmem:[%s235] sm:$0xff]
      %v1402 = vadd.f32 %v1398, %v1399
      %v1403 = vadd.f32 %v1402, %v1400
      %1404 = vadd.xlane.f32.xlu0 %v1403
      %v1405 = vpop.xlane.xlu0 %1404
      %v1406 = vadd.f32 %v1401, %v1405
      %vm1407 = vcmask 7168
      %1408 = vst.msk [vmem:[%s235] sm:$0xff] %vm1407, %v1406
      %v1409 = vld [vmem:[%s239] sm:$0xff]
      %v1410 = vmul.f32 %v1398, %v1398
      %v1411 = vmul.f32 %v1399, %v1399
      %v1412 = vmul.f32 %v1400, %v1400
      %v1413 = vadd.f32 %v1410, %v1411
      %v1414 = vadd.f32 %v1413, %v1412
      %1415 = vadd.xlane.f32.xlu0 %v1414
      %v1416 = vpop.xlane.xlu0 %1415
      %v1417 = vadd.f32 %v1409, %v1416
      %1418 = vst.msk [vmem:[%s239] sm:$0xff] %vm1407, %v1417
      %p1419 = scmp.lt.s32.totalorder %s27, 1
      %s1420 = scalar_select %p1419, %s27, 1
      %s1421 = smul.addr %s1420, 8
      %s1422 = scalar_lea.vmem %s4, %s1421
      %p1423 = scmp.lt.s32.totalorder %s27, 1
      %s1424 = scalar_select %p1423, %s27, 1
      %s1425 = smul.addr %s1424, 8
      %s1426 = scalar_lea.vmem %s5, %s1425
      // Predicated region
      $region37: #{conv_block_forward.2} parent=31 // pred_check
        %p1427 = pneg %p125
      $region38: #{conv_block_forward.2} parent=31 // pred_check_branch
        %1429 = sbr.rel (%p1427) target = $region40
      $region39: #{conv_block_forward.2} parent=31 // pred_region
        _
      $region40: #{conv_block_forward.2} parent=31 // pred_fallthru
        _
      // Predicated region
      $region41: #{conv_block_forward.2} parent=31 // pred_check
        %p1430 = pneg %p151
      $region42: #{conv_block_forward.2} parent=31 // pred_check_branch
        %1432 = sbr.rel (%p1430) target = $region44
      $region43: #{conv_block_forward.2} parent=31 // pred_region
        _
      $region44: #{conv_block_forward.2} parent=31 // pred_fallthru
        _
    $region32: #{conv_block_forward.2} parent=5 // pred_fallthru
      _
    %p1433 = scmp.le.s32.totalorder 2, %s18
    // Predicated region
    $region45: #{conv_block_forward.2} parent=5 // pred_check
      %p1434 = pneg %p1433
    $region46: #{conv_block_forward.2} parent=5 // pred_check_branch
      %1436 = sbr.rel (%p1434) target = $region48
    $region47: #{conv_block_forward.2} parent=5 // pred_region
      %s1437 = ssub.s32 %s18, 2
      // Predicated region
      $region49: #{conv_block_forward.2} parent=47 // pred_check
        %p1438 = pneg %p131
      $region50: #{conv_block_forward.2} parent=47 // pred_check_branch
        %1440 = sbr.rel (%p1438) target = $region52
      $region51: #{conv_block_forward.2} parent=47 // pred_region
        %p1441 = scmp.lt.s32.totalorder %s29, 1
        %s1442 = scalar_select %p1441, %s29, 1
        %s1443 = smul.addr %s1442, 8
        %s1444 = scalar_lea.vmem %s4, %s1443
      $region52: #{conv_block_forward.2} parent=47 // pred_fallthru
        _
      // Predicated region
      $region53: #{conv_block_forward.2} parent=47 // pred_check
        %p1445 = pneg %p157
      $region54: #{conv_block_forward.2} parent=47 // pred_check_branch
        %1447 = sbr.rel (%p1445) target = $region56
      $region55: #{conv_block_forward.2} parent=47 // pred_region
        %p1448 = scmp.lt.s32.totalorder %s29, 1
        %s1449 = scalar_select %p1448, %s29, 1
        %s1450 = smul.addr %s1449, 8
        %s1451 = scalar_lea.vmem %s5, %s1450
      $region56: #{conv_block_forward.2} parent=47 // pred_fallthru
        _
    $region48: #{conv_block_forward.2} parent=5 // pred_fallthru
      _
  $region6: #{conv_block_forward.2} parent=0 // loop_footer
    %s22 = sadd.s32 1, %s18
  $region7: #{conv_block_forward.2} parent=0 // loop_footer_branch
    %17 = sbr.rel target = $region3
  $region8: #{conv_block_forward.2} parent=0 // loop_exit
    _

</llo_original>
